<compile_context>
chip_gen: v7x
topology: tpu7x:2x2x1
jax: 0.10.0
libtpu: 0.0.40
codegen_flags: <defaults>
</compile_context>

<pallas_src>
import functools
import math

import jax
import jax.numpy as jnp
from jax.experimental import pallas as pl
from jax.experimental.pallas import tpu as pltpu


def _vmem_limit_bytes():
    """Generation-aware scoped-VMEM budget: ~half of physical VMEM, clamped."""
    try:
        cap = pltpu.get_tpu_info().vmem_capacity_bytes
    except Exception:
        cap = 64 * 1024 * 1024  # conservative (v7x-sized) fallback
    return int(max(32 * 1024 * 1024, min(cap // 2, 96 * 1024 * 1024)))


_VMEM_LIMIT = _vmem_limit_bytes()
_SMEM_SPEC = pl.BlockSpec(memory_space=pltpu.MemorySpace.SMEM)


def _pick_tile(dim, target, align):
    """Largest tile <= target that divides dim and is a multiple of align, else full dim."""
    if dim <= target:
        return dim
    t = (target // align) * align
    while t >= align:
        if dim % t == 0:
            return t
        t -= align
    return dim


# -----------------------------------------------------------------------------
# Shared LayerNorm body (unbiased std, eps added to std; reciprocal on the EUP).
# -----------------------------------------------------------------------------
def _ln_body(x_ref, alpha_ref, beta_ref, eps):
    x = x_ref[...].astype(jnp.float32)
    D = x.shape[-1]
    mean = jnp.mean(x, axis=-1, keepdims=True)
    diff = x - mean
    var = jnp.sum(diff * diff, axis=-1, keepdims=True) / (D - 1)  # torch.std: unbiased
    inv = pl.reciprocal(jnp.sqrt(var) + eps, approx=True)
    return alpha_ref[0, 0] * diff * inv + beta_ref[0, 0]


# -----------------------------------------------------------------------------
# Tiled matmul (+ optional fused residual add):  (N, Din) @ (Din, Dout) + b [+ r]
# bf16 MXU operands, f32 VMEM accumulator, K-axis last / "arbitrary".
# -----------------------------------------------------------------------------
def _matmul_kernel(*refs, has_res):
    if has_res:
        x_ref, w_ref, b_ref, r_ref, o_ref, acc_ref = refs
    else:
        x_ref, w_ref, b_ref, o_ref, acc_ref = refs
        r_ref = None

    @pl.when(pl.program_id(2) == 0)
    def _():
        acc_ref[...] = jnp.zeros_like(acc_ref)

    acc_ref[...] += jnp.dot(
        x_ref[...].astype(jnp.bfloat16), w_ref[...],
        preferred_element_type=jnp.float32,
    )

    @pl.when(pl.program_id(2) == pl.num_programs(2) - 1)
    def _():
        y = acc_ref[...] + b_ref[...].astype(jnp.float32)
        if r_ref is not None:
            y = y + r_ref[...].astype(jnp.float32)   # fused residual add (epilogue filler)
        o_ref[...] = y.astype(o_ref.dtype)


def matmul(x2d, w, b, residual=None):
    """x2d: (N, Din) f32, w: (Din, Dout) bf16, b: (1, Dout) f32 -> (N, Dout) f32."""
    N, Din = x2d.shape
    Dout = w.shape[1]
    tm = _pick_tile(N, 256, 8)
    tn = _pick_tile(Dout, 256, 128)
    tk = _pick_tile(Din, 512, 128)
    grid = (N // tm, Dout // tn, Din // tk)

    in_specs = [
        pl.BlockSpec((tm, tk), lambda i, j, k: (i, k)),
        # TODO(synk): on v5e sweep pipeline_mode=pl.Buffered(3) on this weight spec to
        # hide the weight-tile DMA behind the smaller MXU.
        pl.BlockSpec((tk, tn), lambda i, j, k: (k, j)),
        pl.BlockSpec((1, tn), lambda i, j, k: (0, j)),
    ]
    args = [x2d, w, b]
    bytes_accessed = (x2d.size * x2d.dtype.itemsize + w.size * w.dtype.itemsize
                      + b.size * b.dtype.itemsize + N * Dout * x2d.dtype.itemsize)
    if residual is not None:
        in_specs.append(pl.BlockSpec((tm, tn), lambda i, j, k: (i, j)))
        args.append(residual)
        bytes_accessed += residual.size * residual.dtype.itemsize

    return pl.pallas_call(
        functools.partial(_matmul_kernel, has_res=residual is not None),
        out_shape=jax.ShapeDtypeStruct((N, Dout), x2d.dtype),
        grid=grid,
        in_specs=in_specs,
        out_specs=pl.BlockSpec((tm, tn), lambda i, j, k: (i, j)),
        scratch_shapes=[pltpu.VMEM((tm, tn), jnp.float32)],
        compiler_params=pltpu.CompilerParams(
            dimension_semantics=("parallel", "parallel", "arbitrary"),
            vmem_limit_bytes=_VMEM_LIMIT,
        ),
        cost_estimate=pl.CostEstimate(
            flops=int(2 * N * Dout * Din), transcendentals=0,
            bytes_accessed=int(bytes_accessed)),
    )(*args)


# -----------------------------------------------------------------------------
# Fused LayerNorm + matmul:  LN(x) @ W + b.  LN computed once per row block
# (pl.when(j == 0)) into a bf16 VMEM scratch, reused for every column tile.
# -----------------------------------------------------------------------------
def _ln_matmul_kernel(alpha_ref, beta_ref, x_ref, w_ref, b_ref, o_ref, nx_ref, *, eps):
    @pl.when(pl.program_id(1) == 0)
    def _():
        nx_ref[...] = _ln_body(x_ref, alpha_ref, beta_ref, eps).astype(nx_ref.dtype)

    y = jnp.dot(nx_ref[...], w_ref[...], preferred_element_type=jnp.float32)
    y = y + b_ref[...].astype(jnp.float32)
    o_ref[...] = y.astype(o_ref.dtype)


def ln_matmul(x2d, alpha, beta, w, b, *, eps=1e-6):
    """(N, D) f32 -> LN -> @ (D, Dout) bf16 + b.  D kept whole so LN stats stay exact."""
    N, D = x2d.shape
    Dout = w.shape[1]
    tm = _pick_tile(N, 256, 8)
    tn = _pick_tile(Dout, 512, 128)
    grid = (N // tm, Dout // tn)
    kern = functools.partial(_ln_matmul_kernel, eps=eps)
    bytes_accessed = (x2d.size * 4 + w.size * w.dtype.itemsize + b.size * 4 + N * Dout * 4)
    return pl.pallas_call(
        kern,
        out_shape=jax.ShapeDtypeStruct((N, Dout), x2d.dtype),
        grid=grid,
        in_specs=[
            _SMEM_SPEC,
            _SMEM_SPEC,
            pl.BlockSpec((tm, D), lambda i, j: (i, 0)),
            pl.BlockSpec((D, tn), lambda i, j: (0, j)),
            pl.BlockSpec((1, tn), lambda i, j: (0, j)),
        ],
        out_specs=pl.BlockSpec((tm, tn), lambda i, j: (i, j)),
        scratch_shapes=[pltpu.VMEM((tm, D), jnp.bfloat16)],
        compiler_params=pltpu.CompilerParams(
            dimension_semantics=("parallel", "arbitrary"),
            vmem_limit_bytes=_VMEM_LIMIT,
        ),
        cost_estimate=pl.CostEstimate(
            flops=int(2 * N * D * Dout + 10 * N * D), transcendentals=int(N),
            bytes_accessed=int(bytes_accessed)),
    )(alpha, beta, x2d, w, b)


# -----------------------------------------------------------------------------
# Fused LayerNorm + FFN + residual:  x + relu(LN(x) @ W1 + b1) @ W2 + b2
# d_ff is a grid axis (weights never fully resident); f32 accumulator for matmul 2.
# -----------------------------------------------------------------------------
def _ln_ffn_kernel(alpha_ref, beta_ref, x_ref, w1_ref, b1_ref, w2_ref, b2_ref, o_ref,
                   nx_ref, acc_ref, *, eps):
    j = pl.program_id(1)

    @pl.when(j == 0)
    def _():
        nx_ref[...] = _ln_body(x_ref, alpha_ref, beta_ref, eps).astype(nx_ref.dtype)
        acc_ref[...] = jnp.zeros_like(acc_ref)

    h1 = jnp.dot(nx_ref[...], w1_ref[...], preferred_element_type=jnp.float32)
    h1 = jnp.maximum(h1 + b1_ref[...].astype(jnp.float32), 0.0)
    acc_ref[...] += jnp.dot(h1.astype(jnp.bfloat16), w2_ref[...],
                            preferred_element_type=jnp.float32)

    @pl.when(j == pl.num_programs(1) - 1)
    def _():
        y = acc_ref[...] + b2_ref[...].astype(jnp.float32) + x_ref[...].astype(jnp.float32)
        o_ref[...] = y.astype(o_ref.dtype)


def ln_ffn(x2d, alpha, beta, w1, b1, w2, b2, *, eps=1e-6):
    N, D = x2d.shape
    Dff = w1.shape[1]
    tm = _pick_tile(N, 256, 8)
    tf = _pick_tile(Dff, 512, 128)
    grid = (N // tm, Dff // tf)
    kern = functools.partial(_ln_ffn_kernel, eps=eps)
    bytes_accessed = (x2d.size * 4 + w1.size * 2 + w2.size * 2 + b1.size * 4
                      + b2.size * 4 + N * D * 4)
    return pl.pallas_call(
        kern,
        out_shape=jax.ShapeDtypeStruct((N, D), x2d.dtype),
        grid=grid,
        in_specs=[
            _SMEM_SPEC,
            _SMEM_SPEC,
            pl.BlockSpec((tm, D), lambda i, j: (i, 0)),
            pl.BlockSpec((D, tf), lambda i, j: (0, j)),
            pl.BlockSpec((1, tf), lambda i, j: (0, j)),
            pl.BlockSpec((tf, D), lambda i, j: (j, 0)),
            pl.BlockSpec((1, D), lambda i, j: (0, 0)),
        ],
        out_specs=pl.BlockSpec((tm, D), lambda i, j: (i, 0)),
        scratch_shapes=[pltpu.VMEM((tm, D), jnp.bfloat16),
                        pltpu.VMEM((tm, D), jnp.float32)],
        compiler_params=pltpu.CompilerParams(
            dimension_semantics=("parallel", "arbitrary"),
            vmem_limit_bytes=_VMEM_LIMIT,
        ),
        cost_estimate=pl.CostEstimate(
            flops=int(4 * N * D * Dff), transcendentals=int(N),
            bytes_accessed=int(bytes_accessed)),
    )(alpha, beta, x2d, w1, b1, w2, b2)


# -----------------------------------------------------------------------------
# Standalone LayerNorm (final decoder norm), row-tiled.
# -----------------------------------------------------------------------------
def _layernorm_kernel(alpha_ref, beta_ref, x_ref, o_ref, *, eps):
    o_ref[...] = _ln_body(x_ref, alpha_ref, beta_ref, eps).astype(o_ref.dtype)


def layer_norm(x2d, alpha, beta, *, eps=1e-6):
    N, D = x2d.shape
    tm = _pick_tile(N, 512, 8)
    kern = functools.partial(_layernorm_kernel, eps=eps)
    return pl.pallas_call(
        kern,
        out_shape=jax.ShapeDtypeStruct((N, D), x2d.dtype),
        grid=(N // tm,),
        in_specs=[
            _SMEM_SPEC,
            _SMEM_SPEC,
            pl.BlockSpec((tm, D), lambda i: (i, 0)),
        ],
        out_specs=pl.BlockSpec((tm, D), lambda i: (i, 0)),
        compiler_params=pltpu.CompilerParams(
            dimension_semantics=("parallel",),
            vmem_limit_bytes=_VMEM_LIMIT,
        ),
    )(alpha, beta, x2d)


# -----------------------------------------------------------------------------
# Multi-head attention: head-major (B, h, S, dk) layout, grid=(B, h) both "parallel",
# bf16 MXU operands, f32 softmax math, int8 mask (1=keep, 0=masked).
# -----------------------------------------------------------------------------
def _attn_kernel(q_ref, k_ref, v_ref, m_ref, o_ref, *, scale):
    q = q_ref[0, 0].astype(jnp.bfloat16)          # (Sq, dk)
    k = k_ref[0, 0].astype(jnp.bfloat16)          # (Sk, dk)
    v = v_ref[0, 0].astype(jnp.bfloat16)          # (Sk, dk)
    Sq = q.shape[0]
    Sk = k.shape[0]
    # mask block is (1, Mq, Sk) int8 with Mq in {1, Sq}; 1=keep, 0=masked
    keep = jnp.broadcast_to(m_ref[0].astype(jnp.float32), (Sq, Sk)) > 0.5

    sc = jnp.dot(q, k.T, preferred_element_type=jnp.float32) * scale
    sc = jnp.where(keep, sc, jnp.float32(-1e9))
    sc = sc - jnp.max(sc, axis=-1, keepdims=True)
    p = jnp.exp(sc)
    p = p * pl.reciprocal(jnp.sum(p, axis=-1, keepdims=True), approx=True)
    o_ref[0, 0] = jnp.dot(p.astype(jnp.bfloat16), v,
                          preferred_element_type=jnp.float32).astype(o_ref.dtype)


def fused_attention(q, k, v, mask3, *, h):
    """q: (B, Sq, D), k/v: (B, Sk, D), mask3: (B, Mq, Sk) int8 with Mq in {1, Sq}."""
    B, Sq, D = q.shape
    Sk = k.shape[1]
    Mq = mask3.shape[1]
    dk = D // h
    # Head-major layout so each grid step works on a contiguous (S, dk) slab —
    # no in-kernel head slicing / concat (wrapper transpose is plain XLA).
    qh = q.reshape(B, Sq, h, dk).transpose(0, 2, 1, 3)
    kh = k.reshape(B, Sk, h, dk).transpose(0, 2, 1, 3)
    vh = v.reshape(B, Sk, h, dk).transpose(0, 2, 1, 3)

    kern = functools.partial(_attn_kernel, scale=1.0 / math.sqrt(dk))
    out = pl.pallas_call(
        kern,
        out_shape=jax.ShapeDtypeStruct((B, h, Sq, dk), q.dtype),
        grid=(B, h),
        in_specs=[
            pl.BlockSpec((1, 1, Sq, dk), lambda b, hd: (b, hd, 0, 0)),
            pl.BlockSpec((1, 1, Sk, dk), lambda b, hd: (b, hd, 0, 0)),
            pl.BlockSpec((1, 1, Sk, dk), lambda b, hd: (b, hd, 0, 0)),
            pl.BlockSpec((1, Mq, Sk), lambda b, hd: (b, 0, 0)),
        ],
        out_specs=pl.BlockSpec((1, 1, Sq, dk), lambda b, hd: (b, hd, 0, 0)),
        compiler_params=pltpu.CompilerParams(
            dimension_semantics=("parallel", "parallel"),
            vmem_limit_bytes=_VMEM_LIMIT,
        ),
        cost_estimate=pl.CostEstimate(
            flops=int(B * h * 4 * Sq * Sk * dk),
            transcendentals=int(B * h * Sq * Sk),
            bytes_accessed=int((qh.size + kh.size + vh.size) * q.dtype.itemsize
                               + mask3.size * mask3.dtype.itemsize
                               + B * h * Sq * dk * q.dtype.itemsize)),
    )(qh, kh, vh, mask3)
    # TODO(synk): for long sequences switch to an online-softmax (flash) formulation with
    # a KV-tile grid axis so the (Sq, Sk) score matrix never materializes fully
    # (the VMEM cliff arrives ~2x earlier on v7x's 64 MiB).
    return out.transpose(0, 2, 1, 3).reshape(B, Sq, D)


# -----------------------------------------------------------------------------
# Decoder glue (reshapes / head splits in plain JAX; residual adds fused in-kernel)
# -----------------------------------------------------------------------------
def decoder_block(x, enc, src_mask3, tgt_mask3, p, *, h, eps=1e-6):
    B, St, D = x.shape
    Ss = enc.shape[1]
    x2 = x.reshape(B * St, D)
    enc2 = enc.reshape(B * Ss, D)

    # Residual 1: pre-norm self-attention (LN fused into QKV proj, residual fused into
    # the output projection's epilogue).
    sa = p["self_attn"]
    qkv = ln_matmul(x2, p["rc0_alpha"], p["rc0_bias"], sa["wqkv"], sa["bqkv"], eps=eps)
    q, k, v = jnp.split(qkv, 3, axis=-1)
    ctx = fused_attention(q.reshape(B, St, D), k.reshape(B, St, D), v.reshape(B, St, D),
                          tgt_mask3, h=h)
    x2 = matmul(ctx.reshape(B * St, D), sa["wo"], sa["bo"], residual=x2)

    # Residual 2: pre-norm cross-attention (LN fused into Q proj; fused K/V matmul on
    # the raw encoder output; residual fused into the output projection).
    ca = p["cross_attn"]
    q = ln_matmul(x2, p["rc1_alpha"], p["rc1_bias"], ca["wq"], ca["bq"], eps=eps)
    kv = matmul(enc2, ca["wkv"], ca["bkv"])
    k, v = jnp.split(kv, 2, axis=-1)
    ctx = fused_attention(q.reshape(B, St, D), k.reshape(B, Ss, D), v.reshape(B, Ss, D),
                          src_mask3, h=h)
    x2 = matmul(ctx.reshape(B * St, D), ca["wo"], ca["bo"], residual=x2)

    # Residual 3: pre-norm feed-forward, fully fused (LN + W1 + ReLU + W2 + residual).
    f = p["ffn"]
    x2 = ln_ffn(x2, p["rc2_alpha"], p["rc2_bias"],
                f["w1"], f["b1"], f["w2"], f["b2"], eps=eps)
    return x2.reshape(B, St, D)


def decoder_forward(params, x, encoder_output, src_mask, tgt_mask, *, h):
    B = x.shape[0]
    # Drop the head-broadcast dim and pass masks as int8 (1=keep, 0=masked).
    src3 = (src_mask > 0.5).astype(jnp.int8).reshape(B, src_mask.shape[-2], src_mask.shape[-1])
    tgt3 = (tgt_mask > 0.5).astype(jnp.int8).reshape(B, tgt_mask.shape[-2], tgt_mask.shape[-1])
    for layer_p in params["layers"]:
        x = decoder_block(x, encoder_output, src3, tgt3, layer_p, h=h)
    B, S, D = x.shape
    out = layer_norm(x.reshape(B * S, D), params["norm_alpha"], params["norm_bias"])
    return out.reshape(B, S, D)


# -----------------------------------------------------------------------------
# Deterministic parameter init (weights bf16, biases/LN params f32; QKV / KV pre-fused)
# -----------------------------------------------------------------------------
def _w(key, shape):
    return (jax.random.normal(key, shape, jnp.float32) * 0.02).astype(jnp.bfloat16)


def _init_self_attn(key, d_model):
    k0, k1 = jax.random.split(key)
    return dict(
        wqkv=_w(k0, (d_model, 3 * d_model)),
        bqkv=jnp.zeros((1, 3 * d_model), jnp.float32),
        wo=_w(k1, (d_model, d_model)),
        bo=jnp.zeros((1, d_model), jnp.float32),
    )


def _init_cross_attn(key, d_model):
    k0, k1, k2 = jax.random.split(key, 3)
    return dict(
        wq=_w(k0, (d_model, d_model)),
        bq=jnp.zeros((1, d_model), jnp.float32),
        wkv=_w(k1, (d_model, 2 * d_model)),
        bkv=jnp.zeros((1, 2 * d_model), jnp.float32),
        wo=_w(k2, (d_model, d_model)),
        bo=jnp.zeros((1, d_model), jnp.float32),
    )


def _init_ffn(key, d_model, d_ff):
    k1, k2 = jax.random.split(key)
    return dict(
        w1=_w(k1, (d_model, d_ff)),
        b1=jnp.zeros((1, d_ff), jnp.float32),
        w2=_w(k2, (d_ff, d_model)),
        b2=jnp.zeros((1, d_model), jnp.float32),
    )


def init_decoder_params(key, num_layers, d_model, d_ff):
    layers = []
    for i in range(num_layers):
        kself, kcross, kffn = jax.random.split(jax.random.fold_in(key, i), 3)
        layers.append(dict(
            self_attn=_init_self_attn(kself, d_model),
            cross_attn=_init_cross_attn(kcross, d_model),
            ffn=_init_ffn(kffn, d_model, d_ff),
            rc0_alpha=jnp.ones((1, 1), jnp.float32), rc0_bias=jnp.zeros((1, 1), jnp.float32),
            rc1_alpha=jnp.ones((1, 1), jnp.float32), rc1_bias=jnp.zeros((1, 1), jnp.float32),
            rc2_alpha=jnp.ones((1, 1), jnp.float32), rc2_bias=jnp.zeros((1, 1), jnp.float32),
        ))
    return dict(
        layers=layers,
        norm_alpha=jnp.ones((1, 1), jnp.float32),
        norm_bias=jnp.zeros((1, 1), jnp.float32),
    )


# -----------------------------------------------------------------------------
if __name__ == "__main__":
    B, S_TGT, S_SRC = 2, 8, 8
    D_MODEL, H, D_FF = 32, 4, 64
    NUM_LAYERS = 2

    key = jax.random.PRNGKey(0)
    kx, kenc, kp = jax.random.split(key, 3)

    x = jax.random.normal(kx, (B, S_TGT, D_MODEL), jnp.float32)
    encoder_output = jax.random.normal(kenc, (B, S_SRC, D_MODEL), jnp.float32)
    # src_mask: (B,1,1,S_src) all ones; tgt_mask: (B,1,S_tgt,S_tgt) causal.
    src_mask = jnp.ones((B, 1, 1, S_SRC), jnp.float32)
    tgt_mask = jnp.broadcast_to(
        jnp.tril(jnp.ones((S_TGT, S_TGT), jnp.float32))[None, None], (B, 1, S_TGT, S_TGT)
    )

    params = init_decoder_params(kp, NUM_LAYERS, D_MODEL, D_FF)

    fwd = jax.jit(functools.partial(decoder_forward, h=H))
    out = fwd(params, x, encoder_output, src_mask, tgt_mask)
    out = jax.block_until_ready(out)

    assert out.shape == (B, S_TGT, D_MODEL) and out.dtype == jnp.float32
    assert bool(jnp.all(jnp.isfinite(out)))
    print("KERNEL_OK")
</pallas_src>

<mosaic_0001>
module attributes {stable_mosaic.version = 11 : i64} {
  func.func @_ln_matmul_kernel(%arg0: i32, %arg1: i32, %arg2: memref<1x1xf32, #tpu.memory_space<smem>>, %arg3: memref<1x1xf32, #tpu.memory_space<smem>>, %arg4: memref<16x32xf32, #tpu.memory_space<vmem>>, %arg5: memref<32x96xbf16, #tpu.memory_space<vmem>>, %arg6: memref<1x96xf32, #tpu.memory_space<vmem>>, %arg7: memref<16x96xf32, #tpu.memory_space<vmem>>, %arg8: memref<16x32xbf16, #tpu.memory_space<vmem>>) attributes {dimension_semantics = [#tpu.dimension_semantics<parallel>, #tpu.dimension_semantics<arbitrary>], iteration_bounds = array<i64: 1, 1>, scalar_prefetch = 0 : i64, scratch_operands = 1 : i64, tpu.core_type = #tpu.core_type<tc>, window_params = [{transform_indices = @transform_0, window_bounds = array<i64: 1, 1>}, {transform_indices = @transform_1, window_bounds = array<i64: 1, 1>}, {transform_indices = @transform_2, window_bounds = array<i64: 16, 32>}, {transform_indices = @transform_3, window_bounds = array<i64: 32, 96>}, {transform_indices = @transform_4, window_bounds = array<i64: 1, 96>}, {transform_indices = @transform_5, window_bounds = array<i64: 16, 96>}]} {
    %c0_i32 = arith.constant 0 : i32
    %0 = arith.cmpi eq, %arg1, %c0_i32 : i32
    %1 = arith.extui %0 : i1 to i32
    %c0_i32_0 = arith.constant 0 : i32
    %2 = arith.cmpi ne, %1, %c0_i32_0 : i32
    scf.if %2 {
      %c0_8 = arith.constant 0 : index
      %c0_9 = arith.constant 0 : index
      %10 = vector.load %arg4[%c0_8, %c0_9] : memref<16x32xf32, #tpu.memory_space<vmem>>, vector<16x32xf32>
      %cst_10 = arith.constant dense<0.000000e+00> : vector<16xf32>
      %11 = vector.multi_reduction <add>, %10, %cst_10 [1] : vector<16x32xf32> to vector<16xf32>
      %12 = vector.shape_cast %11 : vector<16xf32> to vector<16x1xf32>
      %cst_11 = arith.constant 3.200000e+01 : f32
      %13 = vector.broadcast %cst_11 : f32 to vector<16x1xf32>
      %14 = arith.divf %12, %13 : vector<16x1xf32>
      %15 = vector.broadcast %14 : vector<16x1xf32> to vector<16x32xf32>
      %16 = arith.subf %10, %15 : vector<16x32xf32>
      %17 = arith.mulf %16, %16 : vector<16x32xf32>
      %cst_12 = arith.constant dense<0.000000e+00> : vector<16xf32>
      %18 = vector.multi_reduction <add>, %17, %cst_12 [1] : vector<16x32xf32> to vector<16xf32>
      %19 = vector.shape_cast %18 : vector<16xf32> to vector<16x1xf32>
      %cst_13 = arith.constant 3.100000e+01 : f32
      %20 = vector.broadcast %cst_13 : f32 to vector<16x1xf32>
      %21 = arith.divf %19, %20 : vector<16x1xf32>
      %22 = math.sqrt %21 : vector<16x1xf32>
      %cst_14 = arith.constant 9.99999997E-7 : f32
      %23 = vector.broadcast %cst_14 : f32 to vector<16x1xf32>
      %24 = arith.addf %22, %23 : vector<16x1xf32>
      %25 = tpu.reciprocal %24 {approx = true} : vector<16x1xf32> -> vector<16x1xf32>
      %c0_15 = arith.constant 0 : index
      %c0_16 = arith.constant 0 : index
      %26 = memref.load %arg2[%c0_15, %c0_16] : memref<1x1xf32, #tpu.memory_space<smem>>
      %27 = vector.broadcast %26 : f32 to vector<16x32xf32>
      %28 = arith.mulf %27, %16 : vector<16x32xf32>
      %29 = vector.broadcast %25 : vector<16x1xf32> to vector<16x32xf32>
      %30 = arith.mulf %28, %29 : vector<16x32xf32>
      %c0_17 = arith.constant 0 : index
      %c0_18 = arith.constant 0 : index
      %31 = memref.load %arg3[%c0_17, %c0_18] : memref<1x1xf32, #tpu.memory_space<smem>>
      %32 = vector.broadcast %31 : f32 to vector<16x32xf32>
      %33 = arith.addf %30, %32 : vector<16x32xf32>
      %34 = arith.truncf %33 : vector<16x32xf32> to vector<16x32xbf16>
      %c0_19 = arith.constant 0 : index
      %c0_20 = arith.constant 0 : index
      %35 = vector.load %arg8[%c0_19, %c0_20] : memref<16x32xbf16, #tpu.memory_space<vmem>>, vector<16x32xbf16>
      tpu.vector_store %arg8[%c0_19, %c0_20], %34 {strides = array<i32>} : memref<16x32xbf16, #tpu.memory_space<vmem>>, vector<16x32xbf16>,
    } else {
    }
    %c0 = arith.constant 0 : index
    %c0_1 = arith.constant 0 : index
    %3 = vector.load %arg8[%c0, %c0_1] : memref<16x32xbf16, #tpu.memory_space<vmem>>, vector<16x32xbf16>
    %c0_2 = arith.constant 0 : index
    %c0_3 = arith.constant 0 : index
    %4 = vector.load %arg5[%c0_2, %c0_3] : memref<32x96xbf16, #tpu.memory_space<vmem>>, vector<32x96xbf16>
    %cst = arith.constant dense<0.000000e+00> : vector<16x96xf32>
    %5 = tpu.matmul %3, %4, %cst {dimension_numbers = #tpu.dot_dimension_numbers<[1], [0], [0], [1], [0, 0, 1, 1], [], []>} : vector<16x32xbf16>, vector<32x96xbf16>, vector<16x96xf32> -> vector<16x96xf32>
    %c0_4 = arith.constant 0 : index
    %c0_5 = arith.constant 0 : index
    %6 = vector.load %arg6[%c0_4, %c0_5] : memref<1x96xf32, #tpu.memory_space<vmem>>, vector<1x96xf32>
    %7 = vector.broadcast %6 : vector<1x96xf32> to vector<16x96xf32>
    %8 = arith.addf %5, %7 : vector<16x96xf32>
    %c0_6 = arith.constant 0 : index
    %c0_7 = arith.constant 0 : index
    %9 = vector.load %arg7[%c0_6, %c0_7] : memref<16x96xf32, #tpu.memory_space<vmem>>, vector<16x96xf32>
    tpu.vector_store %arg7[%c0_6, %c0_7], %8 {strides = array<i32>} : memref<16x96xf32, #tpu.memory_space<vmem>>, vector<16x96xf32>,
    return
  }
  func.func @transform_0(%arg0: i32, %arg1: i32) -> (i32, i32) {
    %c0_i32 = arith.constant 0 : i32
    %c0_i32_0 = arith.constant 0 : i32
    %c0_i32_1 = arith.constant 0 : i32
    return %c0_i32, %c0_i32_0 : i32, i32
  }
  func.func @transform_1(%arg0: i32, %arg1: i32) -> (i32, i32) {
    %c0_i32 = arith.constant 0 : i32
    %c0_i32_0 = arith.constant 0 : i32
    %c0_i32_1 = arith.constant 0 : i32
    return %c0_i32, %c0_i32_0 : i32, i32
  }
  func.func @transform_2(%arg0: i32, %arg1: i32) -> (i32, i32) {
    %c0_i32 = arith.constant 0 : i32
    %c0_i32_0 = arith.constant 0 : i32
    return %arg0, %c0_i32 : i32, i32
  }
  func.func @transform_3(%arg0: i32, %arg1: i32) -> (i32, i32) {
    %c0_i32 = arith.constant 0 : i32
    %c0_i32_0 = arith.constant 0 : i32
    return %c0_i32, %arg1 : i32, i32
  }
  func.func @transform_4(%arg0: i32, %arg1: i32) -> (i32, i32) {
    %c0_i32 = arith.constant 0 : i32
    %c0_i32_0 = arith.constant 0 : i32
    return %c0_i32, %arg1 : i32, i32
  }
  func.func @transform_5(%arg0: i32, %arg1: i32) -> (i32, i32) {
    %c0_i32 = arith.constant 0 : i32
    return %arg0, %arg1 : i32, i32
  }
}

module attributes {stable_mosaic.version = 11 : i64} {
  func.func @_attn_kernel(%arg0: i32, %arg1: i32, %arg2: memref<1x1x8x8xf32, #tpu.memory_space<vmem>>, %arg3: memref<1x1x8x8xf32, #tpu.memory_space<vmem>>, %arg4: memref<1x1x8x8xf32, #tpu.memory_space<vmem>>, %arg5: memref<1x8x8xi8, #tpu.memory_space<vmem>>, %arg6: memref<1x1x8x8xf32, #tpu.memory_space<vmem>>) attributes {dimension_semantics = [#tpu.dimension_semantics<parallel>, #tpu.dimension_semantics<parallel>], iteration_bounds = array<i64: 2, 4>, scalar_prefetch = 0 : i64, scratch_operands = 0 : i64, tpu.core_type = #tpu.core_type<tc>, window_params = [{transform_indices = @transform_0, window_bounds = array<i64: 1, 1, 8, 8>}, {transform_indices = @transform_1, window_bounds = array<i64: 1, 1, 8, 8>}, {transform_indices = @transform_2, window_bounds = array<i64: 1, 1, 8, 8>}, {transform_indices = @transform_3, window_bounds = array<i64: 1, 8, 8>}, {transform_indices = @transform_4, window_bounds = array<i64: 1, 1, 8, 8>}]} {
    %c0 = arith.constant 0 : index
    %c0_0 = arith.constant 0 : index
    %c0_1 = arith.constant 0 : index
    %c0_2 = arith.constant 0 : index
    %0 = vector.load %arg2[%c0, %c0_0, %c0_1, %c0_2] : memref<1x1x8x8xf32, #tpu.memory_space<vmem>>, vector<1x1x8x8xf32>
    %1 = vector.shape_cast %0 : vector<1x1x8x8xf32> to vector<8x8xf32>
    %2 = arith.truncf %1 : vector<8x8xf32> to vector<8x8xbf16>
    %c0_3 = arith.constant 0 : index
    %c0_4 = arith.constant 0 : index
    %c0_5 = arith.constant 0 : index
    %c0_6 = arith.constant 0 : index
    %3 = vector.load %arg3[%c0_3, %c0_4, %c0_5, %c0_6] : memref<1x1x8x8xf32, #tpu.memory_space<vmem>>, vector<1x1x8x8xf32>
    %4 = vector.shape_cast %3 : vector<1x1x8x8xf32> to vector<8x8xf32>
    %5 = arith.truncf %4 : vector<8x8xf32> to vector<8x8xbf16>
    %c0_7 = arith.constant 0 : index
    %c0_8 = arith.constant 0 : index
    %c0_9 = arith.constant 0 : index
    %c0_10 = arith.constant 0 : index
    %6 = vector.load %arg4[%c0_7, %c0_8, %c0_9, %c0_10] : memref<1x1x8x8xf32, #tpu.memory_space<vmem>>, vector<1x1x8x8xf32>
    %7 = vector.shape_cast %6 : vector<1x1x8x8xf32> to vector<8x8xf32>
    %8 = arith.truncf %7 : vector<8x8xf32> to vector<8x8xbf16>
    %c0_11 = arith.constant 0 : index
    %c0_12 = arith.constant 0 : index
    %c0_13 = arith.constant 0 : index
    %9 = vector.load %arg5[%c0_11, %c0_12, %c0_13] : memref<1x8x8xi8, #tpu.memory_space<vmem>>, vector<1x8x8xi8>
    %10 = vector.shape_cast %9 : vector<1x8x8xi8> to vector<8x8xi8>
    %11 = arith.sitofp %10 : vector<8x8xi8> to vector<8x8xf32>
    %cst = arith.constant 5.000000e-01 : f32
    %12 = vector.broadcast %cst : f32 to vector<8x8xf32>
    %13 = arith.cmpf ogt, %11, %12 : vector<8x8xf32>
    %14 = tpu.transpose %5, [1, 0] : vector<8x8xbf16> -> vector<8x8xbf16>
    %cst_14 = arith.constant dense<0.000000e+00> : vector<8x8xf32>
    %15 = tpu.matmul %2, %14, %cst_14 {dimension_numbers = #tpu.dot_dimension_numbers<[1], [0], [0], [1], [0, 0, 1, 1], [], []>} : vector<8x8xbf16>, vector<8x8xbf16>, vector<8x8xf32> -> vector<8x8xf32>
    %cst_15 = arith.constant 0.353553385 : f32
    %16 = vector.broadcast %cst_15 : f32 to vector<8x8xf32>
    %17 = arith.mulf %15, %16 : vector<8x8xf32>
    %cst_16 = arith.constant -1.000000e+09 : f32
    %18 = vector.broadcast %cst_16 : f32 to vector<8x8xf32>
    %19 = arith.select %13, %17, %18 : vector<8x8xi1>, vector<8x8xf32>
    %cst_17 = arith.constant dense<0xFF800000> : vector<8xf32>
    %20 = vector.multi_reduction <maximumf>, %19, %cst_17 [1] : vector<8x8xf32> to vector<8xf32>
    %21 = vector.shape_cast %20 : vector<8xf32> to vector<8x1xf32>
    %22 = vector.broadcast %21 : vector<8x1xf32> to vector<8x8xf32>
    %23 = arith.subf %19, %22 : vector<8x8xf32>
    %24 = math.exp %23 : vector<8x8xf32>
    %cst_18 = arith.constant dense<0.000000e+00> : vector<8xf32>
    %25 = vector.multi_reduction <add>, %24, %cst_18 [1] : vector<8x8xf32> to vector<8xf32>
    %26 = vector.shape_cast %25 : vector<8xf32> to vector<8x1xf32>
    %27 = tpu.reciprocal %26 {approx = true} : vector<8x1xf32> -> vector<8x1xf32>
    %28 = vector.broadcast %27 : vector<8x1xf32> to vector<8x8xf32>
    %29 = arith.mulf %24, %28 : vector<8x8xf32>
    %30 = arith.truncf %29 : vector<8x8xf32> to vector<8x8xbf16>
    %cst_19 = arith.constant dense<0.000000e+00> : vector<8x8xf32>
    %31 = tpu.matmul %30, %8, %cst_19 {dimension_numbers = #tpu.dot_dimension_numbers<[1], [0], [0], [1], [0, 0, 1, 1], [], []>} : vector<8x8xbf16>, vector<8x8xbf16>, vector<8x8xf32> -> vector<8x8xf32>
    %c0_20 = arith.constant 0 : index
    %c0_21 = arith.constant 0 : index
    %c0_22 = arith.constant 0 : index
    %c0_23 = arith.constant 0 : index
    %32 = vector.load %arg6[%c0_20, %c0_21, %c0_22, %c0_23] : memref<1x1x8x8xf32, #tpu.memory_space<vmem>>, vector<1x1x8x8xf32>
    %33 = vector.shape_cast %32 : vector<1x1x8x8xf32> to vector<8x8xf32>
    %34 = vector.shape_cast %31 : vector<8x8xf32> to vector<1x1x8x8xf32>
    tpu.vector_store %arg6[%c0_20, %c0_21, %c0_22, %c0_23], %34 {strides = array<i32>} : memref<1x1x8x8xf32, #tpu.memory_space<vmem>>, vector<1x1x8x8xf32>,
    return
  }
  func.func @transform_0(%arg0: i32, %arg1: i32) -> (i32, i32, i32, i32) {
    %c0_i32 = arith.constant 0 : i32
    %c0_i32_0 = arith.constant 0 : i32
    %c0_i32_1 = arith.constant 0 : i32
    return %arg0, %arg1, %c0_i32, %c0_i32_0 : i32, i32, i32, i32
  }
  func.func @transform_1(%arg0: i32, %arg1: i32) -> (i32, i32, i32, i32) {
    %c0_i32 = arith.constant 0 : i32
    %c0_i32_0 = arith.constant 0 : i32
    %c0_i32_1 = arith.constant 0 : i32
    return %arg0, %arg1, %c0_i32, %c0_i32_0 : i32, i32, i32, i32
  }
  func.func @transform_2(%arg0: i32, %arg1: i32) -> (i32, i32, i32, i32) {
    %c0_i32 = arith.constant 0 : i32
    %c0_i32_0 = arith.constant 0 : i32
    %c0_i32_1 = arith.constant 0 : i32
    return %arg0, %arg1, %c0_i32, %c0_i32_0 : i32, i32, i32, i32
  }
  func.func @transform_3(%arg0: i32, %arg1: i32) -> (i32, i32, i32) {
    %c0_i32 = arith.constant 0 : i32
    %c0_i32_0 = arith.constant 0 : i32
    %c0_i32_1 = arith.constant 0 : i32
    return %arg0, %c0_i32, %c0_i32_0 : i32, i32, i32
  }
  func.func @transform_4(%arg0: i32, %arg1: i32) -> (i32, i32, i32, i32) {
    %c0_i32 = arith.constant 0 : i32
    %c0_i32_0 = arith.constant 0 : i32
    %c0_i32_1 = arith.constant 0 : i32
    return %arg0, %arg1, %c0_i32, %c0_i32_0 : i32, i32, i32, i32
  }
}

module attributes {stable_mosaic.version = 11 : i64} {
  func.func @_matmul_kernel(%arg0: i32, %arg1: i32, %arg2: i32, %arg3: memref<16x32xf32, #tpu.memory_space<vmem>>, %arg4: memref<32x32xbf16, #tpu.memory_space<vmem>>, %arg5: memref<1x32xf32, #tpu.memory_space<vmem>>, %arg6: memref<16x32xf32, #tpu.memory_space<vmem>>, %arg7: memref<16x32xf32, #tpu.memory_space<vmem>>, %arg8: memref<16x32xf32, #tpu.memory_space<vmem>>) attributes {dimension_semantics = [#tpu.dimension_semantics<parallel>, #tpu.dimension_semantics<parallel>, #tpu.dimension_semantics<arbitrary>], iteration_bounds = array<i64: 1, 1, 1>, scalar_prefetch = 0 : i64, scratch_operands = 1 : i64, tpu.core_type = #tpu.core_type<tc>, window_params = [{transform_indices = @transform_0, window_bounds = array<i64: 16, 32>}, {transform_indices = @transform_1, window_bounds = array<i64: 32, 32>}, {transform_indices = @transform_2, window_bounds = array<i64: 1, 32>}, {transform_indices = @transform_3, window_bounds = array<i64: 16, 32>}, {transform_indices = @transform_4, window_bounds = array<i64: 16, 32>}]} {
    %c0_i32 = arith.constant 0 : i32
    %0 = arith.cmpi eq, %arg2, %c0_i32 : i32
    %1 = arith.extui %0 : i1 to i32
    %c0_i32_0 = arith.constant 0 : i32
    %2 = arith.cmpi ne, %1, %c0_i32_0 : i32
    scf.if %2 {
      %cst_10 = arith.constant 0.000000e+00 : f32
      %13 = vector.broadcast %cst_10 : f32 to vector<16x32xf32>
      %c0_11 = arith.constant 0 : index
      %c0_12 = arith.constant 0 : index
      %14 = vector.load %arg8[%c0_11, %c0_12] : memref<16x32xf32, #tpu.memory_space<vmem>>, vector<16x32xf32>
      tpu.vector_store %arg8[%c0_11, %c0_12], %13 {strides = array<i32>} : memref<16x32xf32, #tpu.memory_space<vmem>>, vector<16x32xf32>,
    } else {
    }
    %c0 = arith.constant 0 : index
    %c0_1 = arith.constant 0 : index
    %3 = vector.load %arg8[%c0, %c0_1] : memref<16x32xf32, #tpu.memory_space<vmem>>, vector<16x32xf32>
    %c0_2 = arith.constant 0 : index
    %c0_3 = arith.constant 0 : index
    %4 = vector.load %arg3[%c0_2, %c0_3] : memref<16x32xf32, #tpu.memory_space<vmem>>, vector<16x32xf32>
    %5 = arith.truncf %4 : vector<16x32xf32> to vector<16x32xbf16>
    %c0_4 = arith.constant 0 : index
    %c0_5 = arith.constant 0 : index
    %6 = vector.load %arg4[%c0_4, %c0_5] : memref<32x32xbf16, #tpu.memory_space<vmem>>, vector<32x32xbf16>
    %cst = arith.constant dense<0.000000e+00> : vector<16x32xf32>
    %7 = tpu.matmul %5, %6, %cst {dimension_numbers = #tpu.dot_dimension_numbers<[1], [0], [0], [1], [0, 0, 1, 1], [], []>} : vector<16x32xbf16>, vector<32x32xbf16>, vector<16x32xf32> -> vector<16x32xf32>
    %8 = arith.addf %3, %7 : vector<16x32xf32>
    %c0_6 = arith.constant 0 : index
    %c0_7 = arith.constant 0 : index
    %9 = vector.load %arg8[%c0_6, %c0_7] : memref<16x32xf32, #tpu.memory_space<vmem>>, vector<16x32xf32>
    tpu.vector_store %arg8[%c0_6, %c0_7], %8 {strides = array<i32>} : memref<16x32xf32, #tpu.memory_space<vmem>>, vector<16x32xf32>,
    %c0_i32_8 = arith.constant 0 : i32
    %10 = arith.cmpi eq, %arg2, %c0_i32_8 : i32
    %11 = arith.extui %10 : i1 to i32
    %c0_i32_9 = arith.constant 0 : i32
    %12 = arith.cmpi ne, %11, %c0_i32_9 : i32
    scf.if %12 {
      %c0_10 = arith.constant 0 : index
      %c0_11 = arith.constant 0 : index
      %13 = vector.load %arg8[%c0_10, %c0_11] : memref<16x32xf32, #tpu.memory_space<vmem>>, vector<16x32xf32>
      %c0_12 = arith.constant 0 : index
      %c0_13 = arith.constant 0 : index
      %14 = vector.load %arg5[%c0_12, %c0_13] : memref<1x32xf32, #tpu.memory_space<vmem>>, vector<1x32xf32>
      %15 = vector.broadcast %14 : vector<1x32xf32> to vector<16x32xf32>
      %16 = arith.addf %13, %15 : vector<16x32xf32>
      %c0_14 = arith.constant 0 : index
      %c0_15 = arith.constant 0 : index
      %17 = vector.load %arg6[%c0_14, %c0_15] : memref<16x32xf32, #tpu.memory_space<vmem>>, vector<16x32xf32>
      %18 = arith.addf %16, %17 : vector<16x32xf32>
      %c0_16 = arith.constant 0 : index
      %c0_17 = arith.constant 0 : index
      %19 = vector.load %arg7[%c0_16, %c0_17] : memref<16x32xf32, #tpu.memory_space<vmem>>, vector<16x32xf32>
      tpu.vector_store %arg7[%c0_16, %c0_17], %18 {strides = array<i32>} : memref<16x32xf32, #tpu.memory_space<vmem>>, vector<16x32xf32>,
    } else {
    }
    return
  }
  func.func @transform_0(%arg0: i32, %arg1: i32, %arg2: i32) -> (i32, i32) {
    %c0_i32 = arith.constant 0 : i32
    return %arg0, %arg2 : i32, i32
  }
  func.func @transform_1(%arg0: i32, %arg1: i32, %arg2: i32) -> (i32, i32) {
    %c0_i32 = arith.constant 0 : i32
    return %arg2, %arg1 : i32, i32
  }
  func.func @transform_2(%arg0: i32, %arg1: i32, %arg2: i32) -> (i32, i32) {
    %c0_i32 = arith.constant 0 : i32
    %c0_i32_0 = arith.constant 0 : i32
    return %c0_i32, %arg1 : i32, i32
  }
  func.func @transform_3(%arg0: i32, %arg1: i32, %arg2: i32) -> (i32, i32) {
    %c0_i32 = arith.constant 0 : i32
    return %arg0, %arg1 : i32, i32
  }
  func.func @transform_4(%arg0: i32, %arg1: i32, %arg2: i32) -> (i32, i32) {
    %c0_i32 = arith.constant 0 : i32
    return %arg0, %arg1 : i32, i32
  }
}

module attributes {stable_mosaic.version = 11 : i64} {
  func.func @_ln_matmul_kernel(%arg0: i32, %arg1: i32, %arg2: memref<1x1xf32, #tpu.memory_space<smem>>, %arg3: memref<1x1xf32, #tpu.memory_space<smem>>, %arg4: memref<16x32xf32, #tpu.memory_space<vmem>>, %arg5: memref<32x32xbf16, #tpu.memory_space<vmem>>, %arg6: memref<1x32xf32, #tpu.memory_space<vmem>>, %arg7: memref<16x32xf32, #tpu.memory_space<vmem>>, %arg8: memref<16x32xbf16, #tpu.memory_space<vmem>>) attributes {dimension_semantics = [#tpu.dimension_semantics<parallel>, #tpu.dimension_semantics<arbitrary>], iteration_bounds = array<i64: 1, 1>, scalar_prefetch = 0 : i64, scratch_operands = 1 : i64, tpu.core_type = #tpu.core_type<tc>, window_params = [{transform_indices = @transform_0, window_bounds = array<i64: 1, 1>}, {transform_indices = @transform_1, window_bounds = array<i64: 1, 1>}, {transform_indices = @transform_2, window_bounds = array<i64: 16, 32>}, {transform_indices = @transform_3, window_bounds = array<i64: 32, 32>}, {transform_indices = @transform_4, window_bounds = array<i64: 1, 32>}, {transform_indices = @transform_5, window_bounds = array<i64: 16, 32>}]} {
    %c0_i32 = arith.constant 0 : i32
    %0 = arith.cmpi eq, %arg1, %c0_i32 : i32
    %1 = arith.extui %0 : i1 to i32
    %c0_i32_0 = arith.constant 0 : i32
    %2 = arith.cmpi ne, %1, %c0_i32_0 : i32
    scf.if %2 {
      %c0_8 = arith.constant 0 : index
      %c0_9 = arith.constant 0 : index
      %10 = vector.load %arg4[%c0_8, %c0_9] : memref<16x32xf32, #tpu.memory_space<vmem>>, vector<16x32xf32>
      %cst_10 = arith.constant dense<0.000000e+00> : vector<16xf32>
      %11 = vector.multi_reduction <add>, %10, %cst_10 [1] : vector<16x32xf32> to vector<16xf32>
      %12 = vector.shape_cast %11 : vector<16xf32> to vector<16x1xf32>
      %cst_11 = arith.constant 3.200000e+01 : f32
      %13 = vector.broadcast %cst_11 : f32 to vector<16x1xf32>
      %14 = arith.divf %12, %13 : vector<16x1xf32>
      %15 = vector.broadcast %14 : vector<16x1xf32> to vector<16x32xf32>
      %16 = arith.subf %10, %15 : vector<16x32xf32>
      %17 = arith.mulf %16, %16 : vector<16x32xf32>
      %cst_12 = arith.constant dense<0.000000e+00> : vector<16xf32>
      %18 = vector.multi_reduction <add>, %17, %cst_12 [1] : vector<16x32xf32> to vector<16xf32>
      %19 = vector.shape_cast %18 : vector<16xf32> to vector<16x1xf32>
      %cst_13 = arith.constant 3.100000e+01 : f32
      %20 = vector.broadcast %cst_13 : f32 to vector<16x1xf32>
      %21 = arith.divf %19, %20 : vector<16x1xf32>
      %22 = math.sqrt %21 : vector<16x1xf32>
      %cst_14 = arith.constant 9.99999997E-7 : f32
      %23 = vector.broadcast %cst_14 : f32 to vector<16x1xf32>
      %24 = arith.addf %22, %23 : vector<16x1xf32>
      %25 = tpu.reciprocal %24 {approx = true} : vector<16x1xf32> -> vector<16x1xf32>
      %c0_15 = arith.constant 0 : index
      %c0_16 = arith.constant 0 : index
      %26 = memref.load %arg2[%c0_15, %c0_16] : memref<1x1xf32, #tpu.memory_space<smem>>
      %27 = vector.broadcast %26 : f32 to vector<16x32xf32>
      %28 = arith.mulf %27, %16 : vector<16x32xf32>
      %29 = vector.broadcast %25 : vector<16x1xf32> to vector<16x32xf32>
      %30 = arith.mulf %28, %29 : vector<16x32xf32>
      %c0_17 = arith.constant 0 : index
      %c0_18 = arith.constant 0 : index
      %31 = memref.load %arg3[%c0_17, %c0_18] : memref<1x1xf32, #tpu.memory_space<smem>>
      %32 = vector.broadcast %31 : f32 to vector<16x32xf32>
      %33 = arith.addf %30, %32 : vector<16x32xf32>
      %34 = arith.truncf %33 : vector<16x32xf32> to vector<16x32xbf16>
      %c0_19 = arith.constant 0 : index
      %c0_20 = arith.constant 0 : index
      %35 = vector.load %arg8[%c0_19, %c0_20] : memref<16x32xbf16, #tpu.memory_space<vmem>>, vector<16x32xbf16>
      tpu.vector_store %arg8[%c0_19, %c0_20], %34 {strides = array<i32>} : memref<16x32xbf16, #tpu.memory_space<vmem>>, vector<16x32xbf16>,
    } else {
    }
    %c0 = arith.constant 0 : index
    %c0_1 = arith.constant 0 : index
    %3 = vector.load %arg8[%c0, %c0_1] : memref<16x32xbf16, #tpu.memory_space<vmem>>, vector<16x32xbf16>
    %c0_2 = arith.constant 0 : index
    %c0_3 = arith.constant 0 : index
    %4 = vector.load %arg5[%c0_2, %c0_3] : memref<32x32xbf16, #tpu.memory_space<vmem>>, vector<32x32xbf16>
    %cst = arith.constant dense<0.000000e+00> : vector<16x32xf32>
    %5 = tpu.matmul %3, %4, %cst {dimension_numbers = #tpu.dot_dimension_numbers<[1], [0], [0], [1], [0, 0, 1, 1], [], []>} : vector<16x32xbf16>, vector<32x32xbf16>, vector<16x32xf32> -> vector<16x32xf32>
    %c0_4 = arith.constant 0 : index
    %c0_5 = arith.constant 0 : index
    %6 = vector.load %arg6[%c0_4, %c0_5] : memref<1x32xf32, #tpu.memory_space<vmem>>, vector<1x32xf32>
    %7 = vector.broadcast %6 : vector<1x32xf32> to vector<16x32xf32>
    %8 = arith.addf %5, %7 : vector<16x32xf32>
    %c0_6 = arith.constant 0 : index
    %c0_7 = arith.constant 0 : index
    %9 = vector.load %arg7[%c0_6, %c0_7] : memref<16x32xf32, #tpu.memory_space<vmem>>, vector<16x32xf32>
    tpu.vector_store %arg7[%c0_6, %c0_7], %8 {strides = array<i32>} : memref<16x32xf32, #tpu.memory_space<vmem>>, vector<16x32xf32>,
    return
  }
  func.func @transform_0(%arg0: i32, %arg1: i32) -> (i32, i32) {
    %c0_i32 = arith.constant 0 : i32
    %c0_i32_0 = arith.constant 0 : i32
    %c0_i32_1 = arith.constant 0 : i32
    return %c0_i32, %c0_i32_0 : i32, i32
  }
  func.func @transform_1(%arg0: i32, %arg1: i32) -> (i32, i32) {
    %c0_i32 = arith.constant 0 : i32
    %c0_i32_0 = arith.constant 0 : i32
    %c0_i32_1 = arith.constant 0 : i32
    return %c0_i32, %c0_i32_0 : i32, i32
  }
  func.func @transform_2(%arg0: i32, %arg1: i32) -> (i32, i32) {
    %c0_i32 = arith.constant 0 : i32
    %c0_i32_0 = arith.constant 0 : i32
    return %arg0, %c0_i32 : i32, i32
  }
  func.func @transform_3(%arg0: i32, %arg1: i32) -> (i32, i32) {
    %c0_i32 = arith.constant 0 : i32
    %c0_i32_0 = arith.constant 0 : i32
    return %c0_i32, %arg1 : i32, i32
  }
  func.func @transform_4(%arg0: i32, %arg1: i32) -> (i32, i32) {
    %c0_i32 = arith.constant 0 : i32
    %c0_i32_0 = arith.constant 0 : i32
    return %c0_i32, %arg1 : i32, i32
  }
  func.func @transform_5(%arg0: i32, %arg1: i32) -> (i32, i32) {
    %c0_i32 = arith.constant 0 : i32
    return %arg0, %arg1 : i32, i32
  }
}

module attributes {stable_mosaic.version = 11 : i64} {
  func.func @_matmul_kernel(%arg0: i32, %arg1: i32, %arg2: i32, %arg3: memref<16x32xf32, #tpu.memory_space<vmem>>, %arg4: memref<32x64xbf16, #tpu.memory_space<vmem>>, %arg5: memref<1x64xf32, #tpu.memory_space<vmem>>, %arg6: memref<16x64xf32, #tpu.memory_space<vmem>>, %arg7: memref<16x64xf32, #tpu.memory_space<vmem>>) attributes {dimension_semantics = [#tpu.dimension_semantics<parallel>, #tpu.dimension_semantics<parallel>, #tpu.dimension_semantics<arbitrary>], iteration_bounds = array<i64: 1, 1, 1>, scalar_prefetch = 0 : i64, scratch_operands = 1 : i64, tpu.core_type = #tpu.core_type<tc>, window_params = [{transform_indices = @transform_0, window_bounds = array<i64: 16, 32>}, {transform_indices = @transform_1, window_bounds = array<i64: 32, 64>}, {transform_indices = @transform_2, window_bounds = array<i64: 1, 64>}, {transform_indices = @transform_3, window_bounds = array<i64: 16, 64>}]} {
    %c0_i32 = arith.constant 0 : i32
    %0 = arith.cmpi eq, %arg2, %c0_i32 : i32
    %1 = arith.extui %0 : i1 to i32
    %c0_i32_0 = arith.constant 0 : i32
    %2 = arith.cmpi ne, %1, %c0_i32_0 : i32
    scf.if %2 {
      %cst_10 = arith.constant 0.000000e+00 : f32
      %13 = vector.broadcast %cst_10 : f32 to vector<16x64xf32>
      %c0_11 = arith.constant 0 : index
      %c0_12 = arith.constant 0 : index
      %14 = vector.load %arg7[%c0_11, %c0_12] : memref<16x64xf32, #tpu.memory_space<vmem>>, vector<16x64xf32>
      tpu.vector_store %arg7[%c0_11, %c0_12], %13 {strides = array<i32>} : memref<16x64xf32, #tpu.memory_space<vmem>>, vector<16x64xf32>,
    } else {
    }
    %c0 = arith.constant 0 : index
    %c0_1 = arith.constant 0 : index
    %3 = vector.load %arg7[%c0, %c0_1] : memref<16x64xf32, #tpu.memory_space<vmem>>, vector<16x64xf32>
    %c0_2 = arith.constant 0 : index
    %c0_3 = arith.constant 0 : index
    %4 = vector.load %arg3[%c0_2, %c0_3] : memref<16x32xf32, #tpu.memory_space<vmem>>, vector<16x32xf32>
    %5 = arith.truncf %4 : vector<16x32xf32> to vector<16x32xbf16>
    %c0_4 = arith.constant 0 : index
    %c0_5 = arith.constant 0 : index
    %6 = vector.load %arg4[%c0_4, %c0_5] : memref<32x64xbf16, #tpu.memory_space<vmem>>, vector<32x64xbf16>
    %cst = arith.constant dense<0.000000e+00> : vector<16x64xf32>
    %7 = tpu.matmul %5, %6, %cst {dimension_numbers = #tpu.dot_dimension_numbers<[1], [0], [0], [1], [0, 0, 1, 1], [], []>} : vector<16x32xbf16>, vector<32x64xbf16>, vector<16x64xf32> -> vector<16x64xf32>
    %8 = arith.addf %3, %7 : vector<16x64xf32>
    %c0_6 = arith.constant 0 : index
    %c0_7 = arith.constant 0 : index
    %9 = vector.load %arg7[%c0_6, %c0_7] : memref<16x64xf32, #tpu.memory_space<vmem>>, vector<16x64xf32>
    tpu.vector_store %arg7[%c0_6, %c0_7], %8 {strides = array<i32>} : memref<16x64xf32, #tpu.memory_space<vmem>>, vector<16x64xf32>,
    %c0_i32_8 = arith.constant 0 : i32
    %10 = arith.cmpi eq, %arg2, %c0_i32_8 : i32
    %11 = arith.extui %10 : i1 to i32
    %c0_i32_9 = arith.constant 0 : i32
    %12 = arith.cmpi ne, %11, %c0_i32_9 : i32
    scf.if %12 {
      %c0_10 = arith.constant 0 : index
      %c0_11 = arith.constant 0 : index
      %13 = vector.load %arg7[%c0_10, %c0_11] : memref<16x64xf32, #tpu.memory_space<vmem>>, vector<16x64xf32>
      %c0_12 = arith.constant 0 : index
      %c0_13 = arith.constant 0 : index
      %14 = vector.load %arg5[%c0_12, %c0_13] : memref<1x64xf32, #tpu.memory_space<vmem>>, vector<1x64xf32>
      %15 = vector.broadcast %14 : vector<1x64xf32> to vector<16x64xf32>
      %16 = arith.addf %13, %15 : vector<16x64xf32>
      %c0_14 = arith.constant 0 : index
      %c0_15 = arith.constant 0 : index
      %17 = vector.load %arg6[%c0_14, %c0_15] : memref<16x64xf32, #tpu.memory_space<vmem>>, vector<16x64xf32>
      tpu.vector_store %arg6[%c0_14, %c0_15], %16 {strides = array<i32>} : memref<16x64xf32, #tpu.memory_space<vmem>>, vector<16x64xf32>,
    } else {
    }
    return
  }
  func.func @transform_0(%arg0: i32, %arg1: i32, %arg2: i32) -> (i32, i32) {
    %c0_i32 = arith.constant 0 : i32
    return %arg0, %arg2 : i32, i32
  }
  func.func @transform_1(%arg0: i32, %arg1: i32, %arg2: i32) -> (i32, i32) {
    %c0_i32 = arith.constant 0 : i32
    return %arg2, %arg1 : i32, i32
  }
  func.func @transform_2(%arg0: i32, %arg1: i32, %arg2: i32) -> (i32, i32) {
    %c0_i32 = arith.constant 0 : i32
    %c0_i32_0 = arith.constant 0 : i32
    return %c0_i32, %arg1 : i32, i32
  }
  func.func @transform_3(%arg0: i32, %arg1: i32, %arg2: i32) -> (i32, i32) {
    %c0_i32 = arith.constant 0 : i32
    return %arg0, %arg1 : i32, i32
  }
}

module attributes {stable_mosaic.version = 11 : i64} {
  func.func @_attn_kernel(%arg0: i32, %arg1: i32, %arg2: memref<1x1x8x8xf32, #tpu.memory_space<vmem>>, %arg3: memref<1x1x8x8xf32, #tpu.memory_space<vmem>>, %arg4: memref<1x1x8x8xf32, #tpu.memory_space<vmem>>, %arg5: memref<1x1x8xi8, #tpu.memory_space<vmem>>, %arg6: memref<1x1x8x8xf32, #tpu.memory_space<vmem>>) attributes {dimension_semantics = [#tpu.dimension_semantics<parallel>, #tpu.dimension_semantics<parallel>], iteration_bounds = array<i64: 2, 4>, scalar_prefetch = 0 : i64, scratch_operands = 0 : i64, tpu.core_type = #tpu.core_type<tc>, window_params = [{transform_indices = @transform_0, window_bounds = array<i64: 1, 1, 8, 8>}, {transform_indices = @transform_1, window_bounds = array<i64: 1, 1, 8, 8>}, {transform_indices = @transform_2, window_bounds = array<i64: 1, 1, 8, 8>}, {transform_indices = @transform_3, window_bounds = array<i64: 1, 1, 8>}, {transform_indices = @transform_4, window_bounds = array<i64: 1, 1, 8, 8>}]} {
    %c0 = arith.constant 0 : index
    %c0_0 = arith.constant 0 : index
    %c0_1 = arith.constant 0 : index
    %c0_2 = arith.constant 0 : index
    %0 = vector.load %arg2[%c0, %c0_0, %c0_1, %c0_2] : memref<1x1x8x8xf32, #tpu.memory_space<vmem>>, vector<1x1x8x8xf32>
    %1 = vector.shape_cast %0 : vector<1x1x8x8xf32> to vector<8x8xf32>
    %2 = arith.truncf %1 : vector<8x8xf32> to vector<8x8xbf16>
    %c0_3 = arith.constant 0 : index
    %c0_4 = arith.constant 0 : index
    %c0_5 = arith.constant 0 : index
    %c0_6 = arith.constant 0 : index
    %3 = vector.load %arg3[%c0_3, %c0_4, %c0_5, %c0_6] : memref<1x1x8x8xf32, #tpu.memory_space<vmem>>, vector<1x1x8x8xf32>
    %4 = vector.shape_cast %3 : vector<1x1x8x8xf32> to vector<8x8xf32>
    %5 = arith.truncf %4 : vector<8x8xf32> to vector<8x8xbf16>
    %c0_7 = arith.constant 0 : index
    %c0_8 = arith.constant 0 : index
    %c0_9 = arith.constant 0 : index
    %c0_10 = arith.constant 0 : index
    %6 = vector.load %arg4[%c0_7, %c0_8, %c0_9, %c0_10] : memref<1x1x8x8xf32, #tpu.memory_space<vmem>>, vector<1x1x8x8xf32>
    %7 = vector.shape_cast %6 : vector<1x1x8x8xf32> to vector<8x8xf32>
    %8 = arith.truncf %7 : vector<8x8xf32> to vector<8x8xbf16>
    %c0_11 = arith.constant 0 : index
    %c0_12 = arith.constant 0 : index
    %c0_13 = arith.constant 0 : index
    %9 = vector.load %arg5[%c0_11, %c0_12, %c0_13] : memref<1x1x8xi8, #tpu.memory_space<vmem>>, vector<1x1x8xi8>
    %10 = vector.shape_cast %9 : vector<1x1x8xi8> to vector<1x8xi8>
    %11 = arith.sitofp %10 : vector<1x8xi8> to vector<1x8xf32>
    %12 = vector.shape_cast %11 : vector<1x8xf32> to vector<1x8xf32>
    %13 = vector.broadcast %12 : vector<1x8xf32> to vector<8x8xf32>
    %cst = arith.constant 5.000000e-01 : f32
    %14 = vector.broadcast %cst : f32 to vector<8x8xf32>
    %15 = arith.cmpf ogt, %13, %14 : vector<8x8xf32>
    %16 = tpu.transpose %5, [1, 0] : vector<8x8xbf16> -> vector<8x8xbf16>
    %cst_14 = arith.constant dense<0.000000e+00> : vector<8x8xf32>
    %17 = tpu.matmul %2, %16, %cst_14 {dimension_numbers = #tpu.dot_dimension_numbers<[1], [0], [0], [1], [0, 0, 1, 1], [], []>} : vector<8x8xbf16>, vector<8x8xbf16>, vector<8x8xf32> -> vector<8x8xf32>
    %cst_15 = arith.constant 0.353553385 : f32
    %18 = vector.broadcast %cst_15 : f32 to vector<8x8xf32>
    %19 = arith.mulf %17, %18 : vector<8x8xf32>
    %cst_16 = arith.constant -1.000000e+09 : f32
    %20 = vector.broadcast %cst_16 : f32 to vector<8x8xf32>
    %21 = arith.select %15, %19, %20 : vector<8x8xi1>, vector<8x8xf32>
    %cst_17 = arith.constant dense<0xFF800000> : vector<8xf32>
    %22 = vector.multi_reduction <maximumf>, %21, %cst_17 [1] : vector<8x8xf32> to vector<8xf32>
    %23 = vector.shape_cast %22 : vector<8xf32> to vector<8x1xf32>
    %24 = vector.broadcast %23 : vector<8x1xf32> to vector<8x8xf32>
    %25 = arith.subf %21, %24 : vector<8x8xf32>
    %26 = math.exp %25 : vector<8x8xf32>
    %cst_18 = arith.constant dense<0.000000e+00> : vector<8xf32>
    %27 = vector.multi_reduction <add>, %26, %cst_18 [1] : vector<8x8xf32> to vector<8xf32>
    %28 = vector.shape_cast %27 : vector<8xf32> to vector<8x1xf32>
    %29 = tpu.reciprocal %28 {approx = true} : vector<8x1xf32> -> vector<8x1xf32>
    %30 = vector.broadcast %29 : vector<8x1xf32> to vector<8x8xf32>
    %31 = arith.mulf %26, %30 : vector<8x8xf32>
    %32 = arith.truncf %31 : vector<8x8xf32> to vector<8x8xbf16>
    %cst_19 = arith.constant dense<0.000000e+00> : vector<8x8xf32>
    %33 = tpu.matmul %32, %8, %cst_19 {dimension_numbers = #tpu.dot_dimension_numbers<[1], [0], [0], [1], [0, 0, 1, 1], [], []>} : vector<8x8xbf16>, vector<8x8xbf16>, vector<8x8xf32> -> vector<8x8xf32>
    %c0_20 = arith.constant 0 : index
    %c0_21 = arith.constant 0 : index
    %c0_22 = arith.constant 0 : index
    %c0_23 = arith.constant 0 : index
    %34 = vector.load %arg6[%c0_20, %c0_21, %c0_22, %c0_23] : memref<1x1x8x8xf32, #tpu.memory_space<vmem>>, vector<1x1x8x8xf32>
    %35 = vector.shape_cast %34 : vector<1x1x8x8xf32> to vector<8x8xf32>
    %36 = vector.shape_cast %33 : vector<8x8xf32> to vector<1x1x8x8xf32>
    tpu.vector_store %arg6[%c0_20, %c0_21, %c0_22, %c0_23], %36 {strides = array<i32>} : memref<1x1x8x8xf32, #tpu.memory_space<vmem>>, vector<1x1x8x8xf32>,
    return
  }
  func.func @transform_0(%arg0: i32, %arg1: i32) -> (i32, i32, i32, i32) {
    %c0_i32 = arith.constant 0 : i32
    %c0_i32_0 = arith.constant 0 : i32
    %c0_i32_1 = arith.constant 0 : i32
    return %arg0, %arg1, %c0_i32, %c0_i32_0 : i32, i32, i32, i32
  }
  func.func @transform_1(%arg0: i32, %arg1: i32) -> (i32, i32, i32, i32) {
    %c0_i32 = arith.constant 0 : i32
    %c0_i32_0 = arith.constant 0 : i32
    %c0_i32_1 = arith.constant 0 : i32
    return %arg0, %arg1, %c0_i32, %c0_i32_0 : i32, i32, i32, i32
  }
  func.func @transform_2(%arg0: i32, %arg1: i32) -> (i32, i32, i32, i32) {
    %c0_i32 = arith.constant 0 : i32
    %c0_i32_0 = arith.constant 0 : i32
    %c0_i32_1 = arith.constant 0 : i32
    return %arg0, %arg1, %c0_i32, %c0_i32_0 : i32, i32, i32, i32
  }
  func.func @transform_3(%arg0: i32, %arg1: i32) -> (i32, i32, i32) {
    %c0_i32 = arith.constant 0 : i32
    %c0_i32_0 = arith.constant 0 : i32
    %c0_i32_1 = arith.constant 0 : i32
    return %arg0, %c0_i32, %c0_i32_0 : i32, i32, i32
  }
  func.func @transform_4(%arg0: i32, %arg1: i32) -> (i32, i32, i32, i32) {
    %c0_i32 = arith.constant 0 : i32
    %c0_i32_0 = arith.constant 0 : i32
    %c0_i32_1 = arith.constant 0 : i32
    return %arg0, %arg1, %c0_i32, %c0_i32_0 : i32, i32, i32, i32
  }
}

module attributes {stable_mosaic.version = 11 : i64} {
  func.func @_ln_ffn_kernel(%arg0: i32, %arg1: i32, %arg2: memref<1x1xf32, #tpu.memory_space<smem>>, %arg3: memref<1x1xf32, #tpu.memory_space<smem>>, %arg4: memref<16x32xf32, #tpu.memory_space<vmem>>, %arg5: memref<32x64xbf16, #tpu.memory_space<vmem>>, %arg6: memref<1x64xf32, #tpu.memory_space<vmem>>, %arg7: memref<64x32xbf16, #tpu.memory_space<vmem>>, %arg8: memref<1x32xf32, #tpu.memory_space<vmem>>, %arg9: memref<16x32xf32, #tpu.memory_space<vmem>>, %arg10: memref<16x32xbf16, #tpu.memory_space<vmem>>, %arg11: memref<16x32xf32, #tpu.memory_space<vmem>>) attributes {dimension_semantics = [#tpu.dimension_semantics<parallel>, #tpu.dimension_semantics<arbitrary>], iteration_bounds = array<i64: 1, 1>, scalar_prefetch = 0 : i64, scratch_operands = 2 : i64, tpu.core_type = #tpu.core_type<tc>, window_params = [{transform_indices = @transform_0, window_bounds = array<i64: 1, 1>}, {transform_indices = @transform_1, window_bounds = array<i64: 1, 1>}, {transform_indices = @transform_2, window_bounds = array<i64: 16, 32>}, {transform_indices = @transform_3, window_bounds = array<i64: 32, 64>}, {transform_indices = @transform_4, window_bounds = array<i64: 1, 64>}, {transform_indices = @transform_5, window_bounds = array<i64: 64, 32>}, {pipeline_mode = #tpu.pipeline_mode<synchronous>, transform_indices = @transform_6, window_bounds = array<i64: 1, 32>}, {transform_indices = @transform_7, window_bounds = array<i64: 16, 32>}]} {
    %c0_i32 = arith.constant 0 : i32
    %0 = arith.cmpi eq, %arg1, %c0_i32 : i32
    %1 = arith.extui %0 : i1 to i32
    %c0_i32_0 = arith.constant 0 : i32
    %2 = arith.cmpi ne, %1, %c0_i32_0 : i32
    scf.if %2 {
      %c0_16 = arith.constant 0 : index
      %c0_17 = arith.constant 0 : index
      %20 = vector.load %arg4[%c0_16, %c0_17] : memref<16x32xf32, #tpu.memory_space<vmem>>, vector<16x32xf32>
      %cst_18 = arith.constant dense<0.000000e+00> : vector<16xf32>
      %21 = vector.multi_reduction <add>, %20, %cst_18 [1] : vector<16x32xf32> to vector<16xf32>
      %22 = vector.shape_cast %21 : vector<16xf32> to vector<16x1xf32>
      %cst_19 = arith.constant 3.200000e+01 : f32
      %23 = vector.broadcast %cst_19 : f32 to vector<16x1xf32>
      %24 = arith.divf %22, %23 : vector<16x1xf32>
      %25 = vector.broadcast %24 : vector<16x1xf32> to vector<16x32xf32>
      %26 = arith.subf %20, %25 : vector<16x32xf32>
      %27 = arith.mulf %26, %26 : vector<16x32xf32>
      %cst_20 = arith.constant dense<0.000000e+00> : vector<16xf32>
      %28 = vector.multi_reduction <add>, %27, %cst_20 [1] : vector<16x32xf32> to vector<16xf32>
      %29 = vector.shape_cast %28 : vector<16xf32> to vector<16x1xf32>
      %cst_21 = arith.constant 3.100000e+01 : f32
      %30 = vector.broadcast %cst_21 : f32 to vector<16x1xf32>
      %31 = arith.divf %29, %30 : vector<16x1xf32>
      %32 = math.sqrt %31 : vector<16x1xf32>
      %cst_22 = arith.constant 9.99999997E-7 : f32
      %33 = vector.broadcast %cst_22 : f32 to vector<16x1xf32>
      %34 = arith.addf %32, %33 : vector<16x1xf32>
      %35 = tpu.reciprocal %34 {approx = true} : vector<16x1xf32> -> vector<16x1xf32>
      %c0_23 = arith.constant 0 : index
      %c0_24 = arith.constant 0 : index
      %36 = memref.load %arg2[%c0_23, %c0_24] : memref<1x1xf32, #tpu.memory_space<smem>>
      %37 = vector.broadcast %36 : f32 to vector<16x32xf32>
      %38 = arith.mulf %37, %26 : vector<16x32xf32>
      %39 = vector.broadcast %35 : vector<16x1xf32> to vector<16x32xf32>
      %40 = arith.mulf %38, %39 : vector<16x32xf32>
      %c0_25 = arith.constant 0 : index
      %c0_26 = arith.constant 0 : index
      %41 = memref.load %arg3[%c0_25, %c0_26] : memref<1x1xf32, #tpu.memory_space<smem>>
      %42 = vector.broadcast %41 : f32 to vector<16x32xf32>
      %43 = arith.addf %40, %42 : vector<16x32xf32>
      %44 = arith.truncf %43 : vector<16x32xf32> to vector<16x32xbf16>
      %c0_27 = arith.constant 0 : index
      %c0_28 = arith.constant 0 : index
      %45 = vector.load %arg10[%c0_27, %c0_28] : memref<16x32xbf16, #tpu.memory_space<vmem>>, vector<16x32xbf16>
      tpu.vector_store %arg10[%c0_27, %c0_28], %44 {strides = array<i32>} : memref<16x32xbf16, #tpu.memory_space<vmem>>, vector<16x32xbf16>,
      %cst_29 = arith.constant 0.000000e+00 : f32
      %46 = vector.broadcast %cst_29 : f32 to vector<16x32xf32>
      %c0_30 = arith.constant 0 : index
      %c0_31 = arith.constant 0 : index
      %47 = vector.load %arg11[%c0_30, %c0_31] : memref<16x32xf32, #tpu.memory_space<vmem>>, vector<16x32xf32>
      tpu.vector_store %arg11[%c0_30, %c0_31], %46 {strides = array<i32>} : memref<16x32xf32, #tpu.memory_space<vmem>>, vector<16x32xf32>,
    } else {
    }
    %c0 = arith.constant 0 : index
    %c0_1 = arith.constant 0 : index
    %3 = vector.load %arg10[%c0, %c0_1] : memref<16x32xbf16, #tpu.memory_space<vmem>>, vector<16x32xbf16>
    %c0_2 = arith.constant 0 : index
    %c0_3 = arith.constant 0 : index
    %4 = vector.load %arg5[%c0_2, %c0_3] : memref<32x64xbf16, #tpu.memory_space<vmem>>, vector<32x64xbf16>
    %cst = arith.constant dense<0.000000e+00> : vector<16x64xf32>
    %5 = tpu.matmul %3, %4, %cst {dimension_numbers = #tpu.dot_dimension_numbers<[1], [0], [0], [1], [0, 0, 1, 1], [], []>} : vector<16x32xbf16>, vector<32x64xbf16>, vector<16x64xf32> -> vector<16x64xf32>
    %c0_4 = arith.constant 0 : index
    %c0_5 = arith.constant 0 : index
    %6 = vector.load %arg6[%c0_4, %c0_5] : memref<1x64xf32, #tpu.memory_space<vmem>>, vector<1x64xf32>
    %7 = vector.broadcast %6 : vector<1x64xf32> to vector<16x64xf32>
    %8 = arith.addf %5, %7 : vector<16x64xf32>
    %cst_6 = arith.constant 0.000000e+00 : f32
    %9 = vector.broadcast %cst_6 : f32 to vector<16x64xf32>
    %10 = arith.maximumf %8, %9 : vector<16x64xf32>
    %c0_7 = arith.constant 0 : index
    %c0_8 = arith.constant 0 : index
    %11 = vector.load %arg11[%c0_7, %c0_8] : memref<16x32xf32, #tpu.memory_space<vmem>>, vector<16x32xf32>
    %12 = arith.truncf %10 : vector<16x64xf32> to vector<16x64xbf16>
    %c0_9 = arith.constant 0 : index
    %c0_10 = arith.constant 0 : index
    %13 = vector.load %arg7[%c0_9, %c0_10] : memref<64x32xbf16, #tpu.memory_space<vmem>>, vector<64x32xbf16>
    %cst_11 = arith.constant dense<0.000000e+00> : vector<16x32xf32>
    %14 = tpu.matmul %12, %13, %cst_11 {dimension_numbers = #tpu.dot_dimension_numbers<[1], [0], [0], [1], [0, 0, 1, 1], [], []>} : vector<16x64xbf16>, vector<64x32xbf16>, vector<16x32xf32> -> vector<16x32xf32>
    %15 = arith.addf %11, %14 : vector<16x32xf32>
    %c0_12 = arith.constant 0 : index
    %c0_13 = arith.constant 0 : index
    %16 = vector.load %arg11[%c0_12, %c0_13] : memref<16x32xf32, #tpu.memory_space<vmem>>, vector<16x32xf32>
    tpu.vector_store %arg11[%c0_12, %c0_13], %15 {strides = array<i32>} : memref<16x32xf32, #tpu.memory_space<vmem>>, vector<16x32xf32>,
    %c0_i32_14 = arith.constant 0 : i32
    %17 = arith.cmpi eq, %arg1, %c0_i32_14 : i32
    %18 = arith.extui %17 : i1 to i32
    %c0_i32_15 = arith.constant 0 : i32
    %19 = arith.cmpi ne, %18, %c0_i32_15 : i32
    scf.if %19 {
      %c0_16 = arith.constant 0 : index
      %c0_17 = arith.constant 0 : index
      %20 = vector.load %arg11[%c0_16, %c0_17] : memref<16x32xf32, #tpu.memory_space<vmem>>, vector<16x32xf32>
      %c0_18 = arith.constant 0 : index
      %c0_19 = arith.constant 0 : index
      %21 = vector.load %arg8[%c0_18, %c0_19] : memref<1x32xf32, #tpu.memory_space<vmem>>, vector<1x32xf32>
      %22 = vector.broadcast %21 : vector<1x32xf32> to vector<16x32xf32>
      %23 = arith.addf %20, %22 : vector<16x32xf32>
      %c0_20 = arith.constant 0 : index
      %c0_21 = arith.constant 0 : index
      %24 = vector.load %arg4[%c0_20, %c0_21] : memref<16x32xf32, #tpu.memory_space<vmem>>, vector<16x32xf32>
      %25 = arith.addf %23, %24 : vector<16x32xf32>
      %c0_22 = arith.constant 0 : index
      %c0_23 = arith.constant 0 : index
      %26 = vector.load %arg9[%c0_22, %c0_23] : memref<16x32xf32, #tpu.memory_space<vmem>>, vector<16x32xf32>
      tpu.vector_store %arg9[%c0_22, %c0_23], %25 {strides = array<i32>} : memref<16x32xf32, #tpu.memory_space<vmem>>, vector<16x32xf32>,
    } else {
    }
    return
  }
  func.func @transform_0(%arg0: i32, %arg1: i32) -> (i32, i32) {
    %c0_i32 = arith.constant 0 : i32
    %c0_i32_0 = arith.constant 0 : i32
    %c0_i32_1 = arith.constant 0 : i32
    return %c0_i32, %c0_i32_0 : i32, i32
  }
  func.func @transform_1(%arg0: i32, %arg1: i32) -> (i32, i32) {
    %c0_i32 = arith.constant 0 : i32
    %c0_i32_0 = arith.constant 0 : i32
    %c0_i32_1 = arith.constant 0 : i32
    return %c0_i32, %c0_i32_0 : i32, i32
  }
  func.func @transform_2(%arg0: i32, %arg1: i32) -> (i32, i32) {
    %c0_i32 = arith.constant 0 : i32
    %c0_i32_0 = arith.constant 0 : i32
    return %arg0, %c0_i32 : i32, i32
  }
  func.func @transform_3(%arg0: i32, %arg1: i32) -> (i32, i32) {
    %c0_i32 = arith.constant 0 : i32
    %c0_i32_0 = arith.constant 0 : i32
    return %c0_i32, %arg1 : i32, i32
  }
  func.func @transform_4(%arg0: i32, %arg1: i32) -> (i32, i32) {
    %c0_i32 = arith.constant 0 : i32
    %c0_i32_0 = arith.constant 0 : i32
    return %c0_i32, %arg1 : i32, i32
  }
  func.func @transform_5(%arg0: i32, %arg1: i32) -> (i32, i32) {
    %c0_i32 = arith.constant 0 : i32
    %c0_i32_0 = arith.constant 0 : i32
    return %arg1, %c0_i32 : i32, i32
  }
  func.func @transform_6(%arg0: i32, %arg1: i32) -> (i32, i32) {
    %c0_i32 = arith.constant 0 : i32
    %c0_i32_0 = arith.constant 0 : i32
    %c0_i32_1 = arith.constant 0 : i32
    return %c0_i32, %c0_i32_0 : i32, i32
  }
  func.func @transform_7(%arg0: i32, %arg1: i32) -> (i32, i32) {
    %c0_i32 = arith.constant 0 : i32
    %c0_i32_0 = arith.constant 0 : i32
    return %arg0, %c0_i32 : i32, i32
  }
}

module attributes {stable_mosaic.version = 11 : i64} {
  func.func @_layernorm_kernel(%arg0: i32, %arg1: memref<1x1xf32, #tpu.memory_space<smem>>, %arg2: memref<1x1xf32, #tpu.memory_space<smem>>, %arg3: memref<16x32xf32, #tpu.memory_space<vmem>>, %arg4: memref<16x32xf32, #tpu.memory_space<vmem>>) attributes {dimension_semantics = [#tpu.dimension_semantics<parallel>], iteration_bounds = array<i64: 1>, scalar_prefetch = 0 : i64, scratch_operands = 0 : i64, tpu.core_type = #tpu.core_type<tc>, window_params = [{transform_indices = @transform_0, window_bounds = array<i64: 1, 1>}, {transform_indices = @transform_1, window_bounds = array<i64: 1, 1>}, {transform_indices = @transform_2, window_bounds = array<i64: 16, 32>}, {transform_indices = @transform_3, window_bounds = array<i64: 16, 32>}]} {
    %c0 = arith.constant 0 : index
    %c0_0 = arith.constant 0 : index
    %0 = vector.load %arg3[%c0, %c0_0] : memref<16x32xf32, #tpu.memory_space<vmem>>, vector<16x32xf32>
    %cst = arith.constant dense<0.000000e+00> : vector<16xf32>
    %1 = vector.multi_reduction <add>, %0, %cst [1] : vector<16x32xf32> to vector<16xf32>
    %2 = vector.shape_cast %1 : vector<16xf32> to vector<16x1xf32>
    %cst_1 = arith.constant 3.200000e+01 : f32
    %3 = vector.broadcast %cst_1 : f32 to vector<16x1xf32>
    %4 = arith.divf %2, %3 : vector<16x1xf32>
    %5 = vector.broadcast %4 : vector<16x1xf32> to vector<16x32xf32>
    %6 = arith.subf %0, %5 : vector<16x32xf32>
    %7 = arith.mulf %6, %6 : vector<16x32xf32>
    %cst_2 = arith.constant dense<0.000000e+00> : vector<16xf32>
    %8 = vector.multi_reduction <add>, %7, %cst_2 [1] : vector<16x32xf32> to vector<16xf32>
    %9 = vector.shape_cast %8 : vector<16xf32> to vector<16x1xf32>
    %cst_3 = arith.constant 3.100000e+01 : f32
    %10 = vector.broadcast %cst_3 : f32 to vector<16x1xf32>
    %11 = arith.divf %9, %10 : vector<16x1xf32>
    %12 = math.sqrt %11 : vector<16x1xf32>
    %cst_4 = arith.constant 9.99999997E-7 : f32
    %13 = vector.broadcast %cst_4 : f32 to vector<16x1xf32>
    %14 = arith.addf %12, %13 : vector<16x1xf32>
    %15 = tpu.reciprocal %14 {approx = true} : vector<16x1xf32> -> vector<16x1xf32>
    %c0_5 = arith.constant 0 : index
    %c0_6 = arith.constant 0 : index
    %16 = memref.load %arg1[%c0_5, %c0_6] : memref<1x1xf32, #tpu.memory_space<smem>>
    %17 = vector.broadcast %16 : f32 to vector<16x32xf32>
    %18 = arith.mulf %17, %6 : vector<16x32xf32>
    %19 = vector.broadcast %15 : vector<16x1xf32> to vector<16x32xf32>
    %20 = arith.mulf %18, %19 : vector<16x32xf32>
    %c0_7 = arith.constant 0 : index
    %c0_8 = arith.constant 0 : index
    %21 = memref.load %arg2[%c0_7, %c0_8] : memref<1x1xf32, #tpu.memory_space<smem>>
    %22 = vector.broadcast %21 : f32 to vector<16x32xf32>
    %23 = arith.addf %20, %22 : vector<16x32xf32>
    %c0_9 = arith.constant 0 : index
    %c0_10 = arith.constant 0 : index
    %24 = vector.load %arg4[%c0_9, %c0_10] : memref<16x32xf32, #tpu.memory_space<vmem>>, vector<16x32xf32>
    tpu.vector_store %arg4[%c0_9, %c0_10], %23 {strides = array<i32>} : memref<16x32xf32, #tpu.memory_space<vmem>>, vector<16x32xf32>,
    return
  }
  func.func @transform_0(%arg0: i32) -> (i32, i32) {
    %c0_i32 = arith.constant 0 : i32
    %c0_i32_0 = arith.constant 0 : i32
    %c0_i32_1 = arith.constant 0 : i32
    return %c0_i32, %c0_i32_0 : i32, i32
  }
  func.func @transform_1(%arg0: i32) -> (i32, i32) {
    %c0_i32 = arith.constant 0 : i32
    %c0_i32_0 = arith.constant 0 : i32
    %c0_i32_1 = arith.constant 0 : i32
    return %c0_i32, %c0_i32_0 : i32, i32
  }
  func.func @transform_2(%arg0: i32) -> (i32, i32) {
    %c0_i32 = arith.constant 0 : i32
    %c0_i32_0 = arith.constant 0 : i32
    return %arg0, %c0_i32 : i32, i32
  }
  func.func @transform_3(%arg0: i32) -> (i32, i32) {
    %c0_i32 = arith.constant 0 : i32
    %c0_i32_0 = arith.constant 0 : i32
    return %arg0, %c0_i32 : i32, i32
  }
}

</mosaic_0001>

<llo_original>
// kernel: decoder_forward.17
$region0: #{decoder_forward.17}
  #allocation0 [shape = 'u32[]', space=smem, size = 0x4, offset = 0x4, fixed_abs, tag = 'smem constant byte address 0x4 - core index']
  #allocation1 [shape = 'u32[144,128]{1,0:T(1,128)}', space=vmem, size = 0x12000, scoped, tag = 'internal scratch']
  #allocation2 [shape = 'bf16[16,32]{1,0:T(16,128)(2,1)}', space=vmem, size = 0x1000, scoped, tag = 'scratch operand']
  #allocation3 [shape = 'f32[1,1]{1,0:T(1,128)S(6)}', space=smem, size = 0x200, scoped, tag = 'scoped memory for decoder_forward.17']
  #allocation4 [shape = 'f32[1,1]{1,0:T(1,128)S(6)}', space=smem, size = 0x200, scoped, tag = 'scoped memory for decoder_forward.17']
  %s0 = inlined_call_operand.<no memory space> [shape: f32[1,1], index: 0, kind: input, shape index: {}]
  %s1 = inlined_call_operand.<no memory space> [shape: f32[1,1], index: 1, kind: input, shape index: {}]
  %s2 = inlined_call_operand.vmem [shape: f32[16,32], index: 2, kind: input, shape index: {}]
  %s3 = inlined_call_operand.vmem [shape: bf16[32,96], index: 3, kind: input, shape index: {}]
  %s4 = inlined_call_operand.vmem [shape: f32[1,96], index: 4, kind: input, shape index: {}]
  %s5 = inlined_call_operand.vmem [shape: f32[16,96], index: 5, kind: output, shape index: {}]
  %s6 = sld [smem:[#allocation0]]
  $region34: #{decoder_forward.17} parent=0
    _
  %s8 = ssub.s32 1, %s6
  %s9 = scalar_select 0, %s8, %s6
  %10 = sst [smem:[#allocation3]] %s0
  %11 = sst [smem:[#allocation4]] %s1
  // Predicated region
  $region2: #{decoder_forward.17} parent=0 // pred_check
    _
  $region3: #{decoder_forward.17} parent=0 // pred_check_branch
    %13 = sbr.rel (0) target = $region5
  $region4: #{decoder_forward.17} parent=0 // pred_region
    _
  $region5: #{decoder_forward.17} parent=0 // pred_fallthru
    _
  // Predicated region
  $region6: #{decoder_forward.17} parent=0 // pred_check
    _
  $region7: #{decoder_forward.17} parent=0 // pred_check_branch
    %15 = sbr.rel (0) target = $region9
  $region8: #{decoder_forward.17} parent=0 // pred_region
    _
  $region9: #{decoder_forward.17} parent=0 // pred_fallthru
    _
  // Predicated region
  $region10: #{decoder_forward.17} parent=0 // pred_check
    _
  $region11: #{decoder_forward.17} parent=0 // pred_check_branch
    %17 = sbr.rel (0) target = $region13
  $region12: #{decoder_forward.17} parent=0 // pred_region
    _
  $region13: #{decoder_forward.17} parent=0 // pred_fallthru
    _
  // Predicated region
  $region14: #{decoder_forward.17} parent=0 // pred_check
    _
  $region15: #{decoder_forward.17} parent=0 // pred_check_branch
    %19 = sbr.rel (0) target = $region17
  $region16: #{decoder_forward.17} parent=0 // pred_region
    _
  $region17: #{decoder_forward.17} parent=0 // pred_fallthru
    _
  // Predicated region
  $region18: #{decoder_forward.17} parent=0 // pred_check
    _
  $region19: #{decoder_forward.17} parent=0 // pred_check_branch
    %21 = sbr.rel (0) target = $region21
  $region20: #{decoder_forward.17} parent=0 // pred_region
    _
  $region21: #{decoder_forward.17} parent=0 // pred_fallthru
    _
  %p23 = scmp.eq.s32.totalorder 0, 0
  // Predicated region
  $region22: #{decoder_forward.17} parent=0 // pred_check
    %p24 = pneg %p23
  $region23: #{decoder_forward.17} parent=0 // pred_check_branch
    %26 = sbr.rel (%p24) target = $region25
  $region24: #{decoder_forward.17} parent=0 // pred_region
    %v27 = vld [vmem:[%s2] sm:$0xff]
    %v28 = vld [vmem:[%s2 + $0x8] sm:$0xff]
    %vm29 = vcmask 261120
    %v30 = vsel %vm29, %v27, 0.0
    %31 = vadd.xlane.f32.xlu0 %v30
    %v32 = vpop.xlane.xlu0 %31
    %v33 = vsel %vm29, %v28, 0.0
    %34 = vadd.xlane.f32.xlu0 %v33
    %v35 = vpop.xlane.xlu0 %34
    %v36 = vrcp.pop 32.0
    %v37 = vmul.f32 %v32, %v36
    %v38 = vmul.f32 %v35, %v36
    %v39 = vsub.f32 %v27, %v37
    %v40 = vsub.f32 %v28, %v38
    %v41 = vmul.f32 %v39, %v39
    %v42 = vmul.f32 %v40, %v40
    %v43 = vsel %vm29, %v41, 0.0
    %44 = vadd.xlane.f32.xlu0 %v43
    %v45 = vpop.xlane.xlu0 %44
    %v46 = vsel %vm29, %v42, 0.0
    %47 = vadd.xlane.f32.xlu0 %v46
    %v48 = vpop.xlane.xlu0 %47
    %v49 = vrcp.pop 31.0
    %v50 = vmul.f32 %v45, %v49
    %v51 = vmul.f32 %v48, %v49
    %v52 = vrsqrt.pop %v50
    %v53 = vmul.f32 %v50, %v52
    %vm54 = vcmp.eq.f32.partialorder %v50, inf
    %v55 = vsel %vm54, %v50, %v53
    %vm56 = vcmp.eq.f32.partialorder %v50, 0.0
    %v57 = vand.u32 %v50, 2147483648
    %v58 = vsel %vm56, %v57, %v55
    %v59 = vrsqrt.pop %v51
    %v60 = vmul.f32 %v51, %v59
    %vm61 = vcmp.eq.f32.partialorder %v51, inf
    %v62 = vsel %vm61, %v51, %v60
    %vm63 = vcmp.eq.f32.partialorder %v51, 0.0
    %v64 = vand.u32 %v51, 2147483648
    %v65 = vsel %vm63, %v64, %v62
    %v66 = vadd.f32 %v58, 1e-06
    %v67 = vadd.f32 %v65, 1e-06
    %v68 = vrcp.pop %v66
    %v69 = vrcp.pop %v67
    %s70 = sld [smem:[#allocation3]]
    %v71 = vstv %s70
    %v72 = vmul.f32 %v71, %v39
    %v73 = vmul.f32 %v71, %v40
    %v74 = vmul.f32 %v72, %v68
    %v75 = vmul.f32 %v73, %v69
    %s76 = sld [smem:[#allocation4]]
    %v77 = vstv %s76
    %v78 = vadd.f32 %v74, %v77
    %v79 = vadd.f32 %v75, %v77
    %v80 = vpack.c.bf16 %v79, %v78
    %81 = vst.msk [vmem:[#allocation2] sm:$0xff] %vm29, %v80
  $region25: #{decoder_forward.17} parent=0 // pred_fallthru
    _
  %v82 = vld [vmem:[#allocation2] sm:$0xff]
  %v83 = vld [vmem:[%s3] sm:$0xf]
  %v84 = vld [vmem:[%s3 + $0x4] sm:$0xf]
  %v85 = vld [vmem:[%s3 + $0x8] sm:$0xf]
  %v86 = vld [vmem:[%s3 + $0xc] sm:$0xf]
  %v87 = vld [vmem:[%s4] sm:$0x1]
  %v89 = vlaneseq
  %v90 = vshrl.u32 %v89, 7
  %v91 = vsub.s32 0, %v90
  %v92 = vrot.slane %v87, %v91
  %v98 = vunpack.c.l.b16 %v83
  %v99 = vunpack.c.l.b16 %v84
  %v100 = vunpack.c.l.b16 %v85
  %v101 = vunpack.c.l.b16 %v86
  %v102 = vpack.c.b16 %v99, %v98
  %v103 = vpack.c.b16 %v101, %v100
  %vm106 = vcmask 261120
  %v108 = vsel %vm106, %v82, 0
  %110 = vmatprep.subr.bf16.mxu0 0
  %111 = vmatpush1.bf16.msra.mxu0 %v102
  %112 = vmatprep.subr.bf16.mxu0 0
  %113 = vmatpush1.bf16.msra.mxu0 %v103
  %114 = vmatprep.subr.bf16.mxu0 0
  %115 = vmatpush1.bf16.msra.mxu0 0
  %116 = vmatprep.subr.bf16.mxu0 0
  %117 = vmatpush1.bf16.msra.mxu0 0
  %118 = vmatprep.subr.bf16.mxu0 0
  %119 = vmatpush1.bf16.msra.mxu0 0
  %120 = vmatprep.subr.bf16.mxu0 0
  %121 = vmatpush1.bf16.msra.mxu0 0
  %122 = vmatprep.subr.bf16.mxu0 0
  %123 = vmatpush1.bf16.msra.mxu0 0
  %124 = vmatprep.subr.bf16.mxu0 0
  %125 = vmatpush1.bf16.msra.mxu0 0
  %126 = vmatprep.subr.bf16.mxu0 0
  %127 = vmatpush1.bf16.msra.mxu0 0
  %128 = vmatprep.subr.bf16.mxu0 0
  %129 = vmatpush1.bf16.msra.mxu0 0
  %130 = vmatprep.subr.bf16.mxu0 0
  %131 = vmatpush1.bf16.msra.mxu0 0
  %132 = vmatprep.subr.bf16.mxu0 0
  %133 = vmatpush1.bf16.msra.mxu0 0
  %134 = vmatprep.subr.bf16.mxu0 0
  %135 = vmatpush1.bf16.msra.mxu0 0
  %136 = vmatprep.subr.bf16.mxu0 0
  %137 = vmatpush1.bf16.msra.mxu0 0
  %138 = vmatprep.subr.bf16.mxu0 0
  %139 = vmatpush1.bf16.msra.mxu0 0
  %140 = vmatprep.subr.bf16.mxu0 0
  %141 = vmatpush1.bf16.msra.mxu0 0
  %142 = vmatprep.mubr.bf16.mxu0 0
  %143 = vmatmul.mubr.bf16.gmra.mrb[0].mxu0 %v108
  %v144 = vpop.f32.mrb[0].mxu0
  %v145 = vadd.f32 %v92, %v144
  %v146 = vpop.f32.mrb[0].mxu0
  %v147 = vpop.f32.mrb[0].mxu0
  %v148 = vadd.f32 %v92, %v147
  %v149 = vpop.f32.mrb[0].mxu0
  %150 = vdwg.mxu0
  %vm151 = vcmask 785408
  %152 = vst.msk [vmem:[%s5] sm:$0xff] %vm151, %v145
  %153 = vst.msk [vmem:[%s5 + $0x8] sm:$0xff] %vm151, %v148
  // Predicated region
  $region26: #{decoder_forward.17} parent=0 // pred_check
    _
  $region27: #{decoder_forward.17} parent=0 // pred_check_branch
    %155 = sbr.rel (0) target = $region29
  $region28: #{decoder_forward.17} parent=0 // pred_region
    _
  $region29: #{decoder_forward.17} parent=0 // pred_fallthru
    _
  // Predicated region
  $region30: #{decoder_forward.17} parent=0 // pred_check
    _
  $region31: #{decoder_forward.17} parent=0 // pred_check_branch
    %157 = sbr.rel (0) target = $region33
  $region32: #{decoder_forward.17} parent=0 // pred_region
    _
  $region33: #{decoder_forward.17} parent=0 // pred_fallthru
    _

// kernel: decoder_forward.18
$region0: #{decoder_forward.18}
  #allocation0 [shape = 'u32[]', space=smem, size = 0x4, offset = 0x4, fixed_abs, tag = 'smem constant byte address 0x4 - core index']
  #allocation1 [shape = 'u32[144,128]{1,0:T(1,128)}', space=vmem, size = 0x12000, scoped, tag = 'internal scratch']
  %s0 = inlined_call_operand.vmem [shape: f32[2,4,8,8], index: 0, kind: input, shape index: {}]
  %s1 = inlined_call_operand.vmem [shape: f32[2,4,8,8], index: 1, kind: input, shape index: {}]
  %s2 = inlined_call_operand.vmem [shape: f32[2,4,8,8], index: 2, kind: input, shape index: {}]
  %s3 = inlined_call_operand.vmem [shape: s8[2,8,8], index: 3, kind: input, shape index: {}]
  %s4 = inlined_call_operand.vmem [shape: f32[2,4,8,8], index: 4, kind: output, shape index: {}]
  %s5 = sld [smem:[#allocation0]]
  $region49: #{decoder_forward.18} parent=0
    _
  %s7 = ssub.s32 1, %s5
  %s8 = scalar_select 0, %s7, %s5
  loop: start=0, step=1, limit=10
  $region2: #{decoder_forward.18} parent=0 // loop_pre_header
    _
  $region3: #{decoder_forward.18} parent=0 // loop_header
    %s10 = sphi 0, %s14
    %p11 = scmp.ge.s32.totalorder %s10, 10
    %s17 = sphi 0, %s29
    %s18 = sphi 0, %s25
    %s19 = sphi 0, %s17
    %s20 = sphi 0, %s18
    %s21 = sphi 0, %s19
    %s22 = sphi 0, %s20
    %s34 = sphi 0, %s36
    %s37 = sphi 0, %s34
    %s38 = sphi 0, %s37
    %s54 = sphi 0, %s38
    %s62 = sphi 0, %s64
    %s65 = sphi 0, %s62
    %s66 = sphi 0, %s65
    %s82 = sphi 0, %s66
    %s90 = sphi 0, %s92
    %s93 = sphi 0, %s90
    %s94 = sphi 0, %s93
    %s110 = sphi 0, %s94
    %s116 = sphi 0, %s118
    %s119 = sphi 0, %s116
    %s120 = sphi 0, %s119
    %s136 = sphi 0, %s120
    %s144 = sphi 0, %s146
    %s147 = sphi 0, %s144
    %s148 = sphi 0, %s147
    %s164 = sphi 0, %s148
  $region4: #{decoder_forward.18} parent=0 // loop_header_branch
    %13 = sbr.rel (%p11) target = $region8
  $region5: #{decoder_forward.18} parent=0 // loop_body
    %s15 = ssub.s32 %s10, 1
    %s16 = ssub.s32 %s10, 2
    %s23 = sadd.s32 1, %s18
    %p24 = scmp.ge.s32.totalorder %s23, 4
    %s25 = scalar_select %p24, 0, %s23
    %s26 = sadd.s32 1, %s17
    %s27 = scalar_select %p24, %s26, %s17
    %p28 = scmp.ge.s32.totalorder %s27, 2
    %s29 = scalar_select %p28, 0, %s27
    %s30 = ssub.s32 %s17, %s29
    %s31 = ssub.s32 %s18, %s25
    %s32 = sor.u32 %s30, %s31
    %p33 = scmp.eq.s32.totalorder %s32, 0
    %s35 = sadd.s32 %s34, 1
    %s36 = scalar_select %p33, %s34, %s35
    %p39 = pneg %p33
    %p40 = scmp.eq.s32.totalorder %s10, 7
    %p41 = por %p39, %p40
    %p42 = scmp.ne.s32.totalorder %s34, %s37
    %p43 = scmp.eq.s32.totalorder %s10, 0
    %p44 = por %p42, %p43
    %p45 = scmp.ne.s32.totalorder %s34, %s37
    %p46 = scmp.eq.s32.totalorder %s15, 7
    %p47 = por %p45, %p46
    %p48 = scmp.ne.s32.totalorder %s37, %s38
    %p49 = scmp.eq.s32.totalorder %s15, 0
    %p50 = por %p48, %p49
    %p51 = scmp.ne.s32.totalorder %s37, %s38
    %p52 = scmp.eq.s32.totalorder %s16, 7
    %p53 = por %p51, %p52
    %p55 = scmp.ne.s32.totalorder %s38, %s54
    %p56 = scmp.eq.s32.totalorder %s16, 0
    %p57 = por %p55, %p56
    %s58 = ssub.s32 %s17, %s29
    %s59 = ssub.s32 %s18, %s25
    %s60 = sor.u32 %s58, %s59
    %p61 = scmp.eq.s32.totalorder %s60, 0
    %s63 = sadd.s32 %s62, 1
    %s64 = scalar_select %p61, %s62, %s63
    %p67 = pneg %p61
    %p68 = scmp.eq.s32.totalorder %s10, 7
    %p69 = por %p67, %p68
    %p70 = scmp.ne.s32.totalorder %s62, %s65
    %p71 = scmp.eq.s32.totalorder %s10, 0
    %p72 = por %p70, %p71
    %p73 = scmp.ne.s32.totalorder %s62, %s65
    %p74 = scmp.eq.s32.totalorder %s15, 7
    %p75 = por %p73, %p74
    %p76 = scmp.ne.s32.totalorder %s65, %s66
    %p77 = scmp.eq.s32.totalorder %s15, 0
    %p78 = por %p76, %p77
    %p79 = scmp.ne.s32.totalorder %s65, %s66
    %p80 = scmp.eq.s32.totalorder %s16, 7
    %p81 = por %p79, %p80
    %p83 = scmp.ne.s32.totalorder %s66, %s82
    %p84 = scmp.eq.s32.totalorder %s16, 0
    %p85 = por %p83, %p84
    %s86 = ssub.s32 %s17, %s29
    %s87 = ssub.s32 %s18, %s25
    %s88 = sor.u32 %s86, %s87
    %p89 = scmp.eq.s32.totalorder %s88, 0
    %s91 = sadd.s32 %s90, 1
    %s92 = scalar_select %p89, %s90, %s91
    %p95 = pneg %p89
    %p96 = scmp.eq.s32.totalorder %s10, 7
    %p97 = por %p95, %p96
    %p98 = scmp.ne.s32.totalorder %s90, %s93
    %p99 = scmp.eq.s32.totalorder %s10, 0
    %p100 = por %p98, %p99
    %p101 = scmp.ne.s32.totalorder %s90, %s93
    %p102 = scmp.eq.s32.totalorder %s15, 7
    %p103 = por %p101, %p102
    %p104 = scmp.ne.s32.totalorder %s93, %s94
    %p105 = scmp.eq.s32.totalorder %s15, 0
    %p106 = por %p104, %p105
    %p107 = scmp.ne.s32.totalorder %s93, %s94
    %p108 = scmp.eq.s32.totalorder %s16, 7
    %p109 = por %p107, %p108
    %p111 = scmp.ne.s32.totalorder %s94, %s110
    %p112 = scmp.eq.s32.totalorder %s16, 0
    %p113 = por %p111, %p112
    %s114 = ssub.s32 %s17, %s29
    %p115 = scmp.eq.s32.totalorder %s114, 0
    %s117 = sadd.s32 %s116, 1
    %s118 = scalar_select %p115, %s116, %s117
    %p121 = pneg %p115
    %p122 = scmp.eq.s32.totalorder %s10, 7
    %p123 = por %p121, %p122
    %p124 = scmp.ne.s32.totalorder %s116, %s119
    %p125 = scmp.eq.s32.totalorder %s10, 0
    %p126 = por %p124, %p125
    %p127 = scmp.ne.s32.totalorder %s116, %s119
    %p128 = scmp.eq.s32.totalorder %s15, 7
    %p129 = por %p127, %p128
    %p130 = scmp.ne.s32.totalorder %s119, %s120
    %p131 = scmp.eq.s32.totalorder %s15, 0
    %p132 = por %p130, %p131
    %p133 = scmp.ne.s32.totalorder %s119, %s120
    %p134 = scmp.eq.s32.totalorder %s16, 7
    %p135 = por %p133, %p134
    %p137 = scmp.ne.s32.totalorder %s120, %s136
    %p138 = scmp.eq.s32.totalorder %s16, 0
    %p139 = por %p137, %p138
    %s140 = ssub.s32 %s17, %s29
    %s141 = ssub.s32 %s18, %s25
    %s142 = sor.u32 %s140, %s141
    %p143 = scmp.eq.s32.totalorder %s142, 0
    %s145 = sadd.s32 %s144, 1
    %s146 = scalar_select %p143, %s144, %s145
    %p149 = pneg %p143
    %p150 = scmp.eq.s32.totalorder %s10, 7
    %p151 = por %p149, %p150
    %p152 = scmp.ne.s32.totalorder %s144, %s147
    %p153 = scmp.eq.s32.totalorder %s10, 0
    %p154 = por %p152, %p153
    %p155 = scmp.ne.s32.totalorder %s144, %s147
    %p156 = scmp.eq.s32.totalorder %s15, 7
    %p157 = por %p155, %p156
    %p158 = scmp.ne.s32.totalorder %s147, %s148
    %p159 = scmp.eq.s32.totalorder %s15, 0
    %p160 = por %p158, %p159
    %p161 = scmp.ne.s32.totalorder %s147, %s148
    %p162 = scmp.eq.s32.totalorder %s16, 7
    %p163 = por %p161, %p162
    %p165 = scmp.ne.s32.totalorder %s148, %s164
    %p166 = scmp.eq.s32.totalorder %s16, 0
    %p167 = por %p165, %p166
    %p168 = scmp.le.s32.totalorder 1, %s10
    %p169 = scmp.lt.s32.totalorder %s10, 9
    %p170 = pnand %p168, %p169
    %p171 = pneg %p170
    // Predicated region
    $region9: #{decoder_forward.18} parent=5 // pred_check
      _
    $region10: #{decoder_forward.18} parent=5 // pred_check_branch
      %173 = sbr.rel (%p170) target = $region12
    $region11: #{decoder_forward.18} parent=5 // pred_region
      %s174 = ssub.s32 %s10, 1
    $region12: #{decoder_forward.18} parent=5 // pred_fallthru
      _
    %p175 = scmp.lt.s32.totalorder %s10, 8
    // Predicated region
    $region13: #{decoder_forward.18} parent=5 // pred_check
      %p176 = pneg %p175
    $region14: #{decoder_forward.18} parent=5 // pred_check_branch
      %178 = sbr.rel (%p176) target = $region16
    $region15: #{decoder_forward.18} parent=5 // pred_region
      // Predicated region
      $region17: #{decoder_forward.18} parent=15 // pred_check
        %p179 = pneg %p44
      $region18: #{decoder_forward.18} parent=15 // pred_check_branch
        %181 = sbr.rel (%p179) target = $region20
      $region19: #{decoder_forward.18} parent=15 // pred_region
        %p182 = scmp.lt.s32.totalorder %s17, 1
        %s183 = scalar_select %p182, %s17, 1
        %p184 = scmp.lt.s32.totalorder %s18, 3
        %s185 = scalar_select %p184, %s18, 3
        %s186 = smul.addr %s183, 4
        %s187 = sadd.s32 %s185, %s186
        %s188 = smul.addr %s187, 8
        %s189 = scalar_lea.vmem %s0, %s188
      $region20: #{decoder_forward.18} parent=15 // pred_fallthru
        _
      // Predicated region
      $region21: #{decoder_forward.18} parent=15 // pred_check
        %p190 = pneg %p72
      $region22: #{decoder_forward.18} parent=15 // pred_check_branch
        %192 = sbr.rel (%p190) target = $region24
      $region23: #{decoder_forward.18} parent=15 // pred_region
        %p193 = scmp.lt.s32.totalorder %s17, 1
        %s194 = scalar_select %p193, %s17, 1
        %p195 = scmp.lt.s32.totalorder %s18, 3
        %s196 = scalar_select %p195, %s18, 3
        %s197 = smul.addr %s194, 4
        %s198 = sadd.s32 %s196, %s197
        %s199 = smul.addr %s198, 8
        %s200 = scalar_lea.vmem %s1, %s199
      $region24: #{decoder_forward.18} parent=15 // pred_fallthru
        _
      // Predicated region
      $region25: #{decoder_forward.18} parent=15 // pred_check
        %p201 = pneg %p100
      $region26: #{decoder_forward.18} parent=15 // pred_check_branch
        %203 = sbr.rel (%p201) target = $region28
      $region27: #{decoder_forward.18} parent=15 // pred_region
        %p204 = scmp.lt.s32.totalorder %s17, 1
        %s205 = scalar_select %p204, %s17, 1
        %p206 = scmp.lt.s32.totalorder %s18, 3
        %s207 = scalar_select %p206, %s18, 3
        %s208 = smul.addr %s205, 4
        %s209 = sadd.s32 %s207, %s208
        %s210 = smul.addr %s209, 8
        %s211 = scalar_lea.vmem %s2, %s210
      $region28: #{decoder_forward.18} parent=15 // pred_fallthru
        _
      // Predicated region
      $region29: #{decoder_forward.18} parent=15 // pred_check
        %p212 = pneg %p126
      $region30: #{decoder_forward.18} parent=15 // pred_check_branch
        %214 = sbr.rel (%p212) target = $region32
      $region31: #{decoder_forward.18} parent=15 // pred_region
        %p215 = scmp.lt.s32.totalorder %s17, 1
        %s216 = scalar_select %p215, %s17, 1
        %s217 = smul.addr %s216, 2
        %s218 = scalar_lea.vmem %s3, %s217
      $region32: #{decoder_forward.18} parent=15 // pred_fallthru
        _
    $region16: #{decoder_forward.18} parent=5 // pred_fallthru
      _
    %p219 = scmp.le.s32.totalorder 1, %s10
    %p220 = scmp.lt.s32.totalorder %s10, 9
    %p221 = pnand %p219, %p220
    %p222 = pneg %p221
    // Predicated region
    $region33: #{decoder_forward.18} parent=5 // pred_check
      _
    $region34: #{decoder_forward.18} parent=5 // pred_check_branch
      %224 = sbr.rel (%p221) target = $region36
    $region35: #{decoder_forward.18} parent=5 // pred_region
      %s225 = ssub.s32 %s10, 1
      %p226 = scmp.lt.s32.totalorder %s19, 1
      %s227 = scalar_select %p226, %s19, 1
      %p228 = scmp.lt.s32.totalorder %s20, 3
      %s229 = scalar_select %p228, %s20, 3
      %s230 = smul.addr %s227, 4
      %s231 = sadd.s32 %s229, %s230
      %s232 = smul.addr %s231, 8
      %s233 = scalar_lea.vmem %s0, %s232
      %p234 = pneg %p50
      %p235 = pneg %p47
      %p236 = scmp.lt.s32.totalorder %s19, 1
      %s237 = scalar_select %p236, %s19, 1
      %p238 = scmp.lt.s32.totalorder %s20, 3
      %s239 = scalar_select %p238, %s20, 3
      %s240 = smul.addr %s237, 4
      %s241 = sadd.s32 %s239, %s240
      %s242 = smul.addr %s241, 8
      %s243 = scalar_lea.vmem %s1, %s242
      %p244 = pneg %p78
      %p245 = pneg %p75
      %p246 = scmp.lt.s32.totalorder %s19, 1
      %s247 = scalar_select %p246, %s19, 1
      %p248 = scmp.lt.s32.totalorder %s20, 3
      %s249 = scalar_select %p248, %s20, 3
      %s250 = smul.addr %s247, 4
      %s251 = sadd.s32 %s249, %s250
      %s252 = smul.addr %s251, 8
      %s253 = scalar_lea.vmem %s2, %s252
      %p254 = pneg %p106
      %p255 = pneg %p103
      %p256 = scmp.lt.s32.totalorder %s19, 1
      %s257 = scalar_select %p256, %s19, 1
      %s258 = smul.addr %s257, 2
      %s259 = scalar_lea.vmem %s3, %s258
      %p260 = pneg %p132
      %p261 = pneg %p129
      %p262 = pneg %p160
      %p263 = pneg %p157
      %p264 = scmp.lt.s32.totalorder %s19, 1
      %s265 = scalar_select %p264, %s19, 1
      %p266 = scmp.lt.s32.totalorder %s20, 3
      %s267 = scalar_select %p266, %s20, 3
      %s268 = smul.addr %s265, 4
      %s269 = sadd.s32 %s267, %s268
      %s270 = smul.addr %s269, 8
      %s271 = scalar_lea.vmem %s4, %s270
      %p272 = scmp.lt.s32.totalorder %s19, 1
      %s273 = scalar_select %p272, %s19, 1
      %p274 = scmp.lt.s32.totalorder %s20, 3
      %s275 = scalar_select %p274, %s20, 3
      %s276 = smul.addr %s273, 4
      %s277 = sadd.s32 %s275, %s276
      %s278 = smul.addr %s277, 8
      %s279 = scalar_lea.vmem %s0, %s278
      %p280 = scmp.lt.s32.totalorder %s19, 1
      %s281 = scalar_select %p280, %s19, 1
      %p282 = scmp.lt.s32.totalorder %s20, 3
      %s283 = scalar_select %p282, %s20, 3
      %s284 = smul.addr %s281, 4
      %s285 = sadd.s32 %s283, %s284
      %s286 = smul.addr %s285, 8
      %s287 = scalar_lea.vmem %s1, %s286
      %p288 = scmp.lt.s32.totalorder %s19, 1
      %s289 = scalar_select %p288, %s19, 1
      %p290 = scmp.lt.s32.totalorder %s20, 3
      %s291 = scalar_select %p290, %s20, 3
      %s292 = smul.addr %s289, 4
      %s293 = sadd.s32 %s291, %s292
      %s294 = smul.addr %s293, 8
      %s295 = scalar_lea.vmem %s2, %s294
      %p296 = scmp.lt.s32.totalorder %s19, 1
      %s297 = scalar_select %p296, %s19, 1
      %s298 = smul.addr %s297, 2
      %s299 = scalar_lea.vmem %s3, %s298
      %p300 = scmp.lt.s32.totalorder %s19, 1
      %s301 = scalar_select %p300, %s19, 1
      %p302 = scmp.lt.s32.totalorder %s20, 3
      %s303 = scalar_select %p302, %s20, 3
      %s304 = smul.addr %s301, 4
      %s305 = sadd.s32 %s303, %s304
      %s306 = smul.addr %s305, 8
      %s307 = scalar_lea.vmem %s4, %s306
      %v309 = vld [vmem:[%s279] sm:$0xff]
      %v310 = vpack.c.bf16 %v309, %v309
      %v311 = vld [vmem:[%s287] sm:$0xff]
      %v312 = vpack.c.bf16 %v311, %v311
      %v313 = vld [vmem:[%s295] sm:$0xff]
      %v314 = vpack.c.bf16 %v313, %v313
      %v315 = vld [vmem:[%s299] sm:$0x3]
      %v316 = vunpack.c.0.s8 %v315
      %v317 = vcvt.s32.f32 %v316
      %vm318 = vcmp.gt.f32.partialorder %v317, 0.5
      %vm319 = vcmask 64512
      %v321 = vsel %vm319, %v310, 0
      %v324 = vsel %vm319, %v312, 0
      %326 = vmatprep.subr.bf16.mxu0 0
      %327 = vmatpush1.bf16.xpose.msra.mxu0 %v324
      %328 = vmatprep.subr.bf16.mxu0 0
      %329 = vmatpush1.bf16.xpose.msra.mxu0 0
      %330 = vmatprep.subr.bf16.mxu0 0
      %331 = vmatpush1.bf16.xpose.msra.mxu0 0
      %332 = vmatprep.subr.bf16.mxu0 0
      %333 = vmatpush1.bf16.xpose.msra.mxu0 0
      %334 = vmatprep.subr.bf16.mxu0 0
      %335 = vmatpush1.bf16.xpose.msra.mxu0 0
      %336 = vmatprep.subr.bf16.mxu0 0
      %337 = vmatpush1.bf16.xpose.msra.mxu0 0
      %338 = vmatprep.subr.bf16.mxu0 0
      %339 = vmatpush1.bf16.xpose.msra.mxu0 0
      %340 = vmatprep.subr.bf16.mxu0 0
      %341 = vmatpush1.bf16.xpose.msra.mxu0 0
      %342 = vmatprep.subr.bf16.mxu0 0
      %343 = vmatpush1.bf16.xpose.msra.mxu0 0
      %344 = vmatprep.subr.bf16.mxu0 0
      %345 = vmatpush1.bf16.xpose.msra.mxu0 0
      %346 = vmatprep.subr.bf16.mxu0 0
      %347 = vmatpush1.bf16.xpose.msra.mxu0 0
      %348 = vmatprep.subr.bf16.mxu0 0
      %349 = vmatpush1.bf16.xpose.msra.mxu0 0
      %350 = vmatprep.subr.bf16.mxu0 0
      %351 = vmatpush1.bf16.xpose.msra.mxu0 0
      %352 = vmatprep.subr.bf16.mxu0 0
      %353 = vmatpush1.bf16.xpose.msra.mxu0 0
      %354 = vmatprep.subr.bf16.mxu0 0
      %355 = vmatpush1.bf16.xpose.msra.mxu0 0
      %356 = vmatprep.subr.bf16.mxu0 0
      %357 = vmatpush1.bf16.xpose.msra.mxu0 0
      %358 = vmatprep.mubr.bf16.mxu0 0
      %359 = vmatmul.mubr.bf16.gmra.mrb[0].mxu0 %v321
      %v360 = vpop.f32.mrb[0].mxu0
      %v361 = vadd.f32 0.0, %v360
      %v362 = vpop.f32.mrb[0].mxu0
      %v363 = vpop.f32.mrb[0].mxu0
      %v364 = vpop.f32.mrb[0].mxu0
      %365 = vdwg.mxu0
      %v366 = vmul.f32 %v361, 0.35355338
      %v367 = vsel %vm318, %v366, -1e+09
      %v368 = vsel %vm319, %v367, -inf
      %369 = vmax.xlane.f32.xlu0 %v368
      %v370 = vpop.xlane.xlu0 %369
      %v371 = vsub.f32 %v367, %v370
      %v372 = vmul.f32 %v371, 1.442695
      %v373 = vpow.pop %v372
      %v374 = vsel %vm319, %v373, 0.0
      %375 = vadd.xlane.f32.xlu0 %v374
      %v376 = vpop.xlane.xlu0 %375
      %v377 = vrcp.pop %v376
      %v378 = vmul.f32 %v373, %v377
      %v379 = vpack.c.bf16 %v378, %v378
      %v381 = vsel %vm319, %v379, 0
      %vm383 = vcmask 1043456
      %v385 = vsel %vm383, %v314, 0
      %387 = vmatprep.subr.bf16.mxu0 0
      %388 = vmatpush1.bf16.msra.mxu0 %v385
      %389 = vmatprep.subr.bf16.mxu0 0
      %390 = vmatpush1.bf16.msra.mxu0 0
      %391 = vmatprep.subr.bf16.mxu0 0
      %392 = vmatpush1.bf16.msra.mxu0 0
      %393 = vmatprep.subr.bf16.mxu0 0
      %394 = vmatpush1.bf16.msra.mxu0 0
      %395 = vmatprep.subr.bf16.mxu0 0
      %396 = vmatpush1.bf16.msra.mxu0 0
      %397 = vmatprep.subr.bf16.mxu0 0
      %398 = vmatpush1.bf16.msra.mxu0 0
      %399 = vmatprep.subr.bf16.mxu0 0
      %400 = vmatpush1.bf16.msra.mxu0 0
      %401 = vmatprep.subr.bf16.mxu0 0
      %402 = vmatpush1.bf16.msra.mxu0 0
      %403 = vmatprep.subr.bf16.mxu0 0
      %404 = vmatpush1.bf16.msra.mxu0 0
      %405 = vmatprep.subr.bf16.mxu0 0
      %406 = vmatpush1.bf16.msra.mxu0 0
      %407 = vmatprep.subr.bf16.mxu0 0
      %408 = vmatpush1.bf16.msra.mxu0 0
      %409 = vmatprep.subr.bf16.mxu0 0
      %410 = vmatpush1.bf16.msra.mxu0 0
      %411 = vmatprep.subr.bf16.mxu0 0
      %412 = vmatpush1.bf16.msra.mxu0 0
      %413 = vmatprep.subr.bf16.mxu0 0
      %414 = vmatpush1.bf16.msra.mxu0 0
      %415 = vmatprep.subr.bf16.mxu0 0
      %416 = vmatpush1.bf16.msra.mxu0 0
      %417 = vmatprep.subr.bf16.mxu0 0
      %418 = vmatpush1.bf16.msra.mxu0 0
      %419 = vmatprep.mubr.bf16.mxu0 0
      %420 = vmatmul.mubr.bf16.gmra.mrb[0].mxu0 %v381
      %v421 = vpop.f32.mrb[0].mxu0
      %v422 = vadd.f32 0.0, %v421
      %v423 = vpop.f32.mrb[0].mxu0
      %v424 = vpop.f32.mrb[0].mxu0
      %v425 = vpop.f32.mrb[0].mxu0
      %426 = vdwg.mxu0
      %427 = vst.msk [vmem:[%s307] sm:$0xff] %vm319, %v422
      %p428 = scmp.lt.s32.totalorder %s19, 1
      %s429 = scalar_select %p428, %s19, 1
      %p430 = scmp.lt.s32.totalorder %s20, 3
      %s431 = scalar_select %p430, %s20, 3
      %s432 = smul.addr %s429, 4
      %s433 = sadd.s32 %s431, %s432
      %s434 = smul.addr %s433, 8
      %s435 = scalar_lea.vmem %s4, %s434
      // Predicated region
      $region37: #{decoder_forward.18} parent=35 // pred_check
        %p436 = pneg %p157
      $region38: #{decoder_forward.18} parent=35 // pred_check_branch
        %438 = sbr.rel (%p436) target = $region40
      $region39: #{decoder_forward.18} parent=35 // pred_region
        _
      $region40: #{decoder_forward.18} parent=35 // pred_fallthru
        _
    $region36: #{decoder_forward.18} parent=5 // pred_fallthru
      _
    %p439 = scmp.le.s32.totalorder 2, %s10
    // Predicated region
    $region41: #{decoder_forward.18} parent=5 // pred_check
      %p440 = pneg %p439
    $region42: #{decoder_forward.18} parent=5 // pred_check_branch
      %442 = sbr.rel (%p440) target = $region44
    $region43: #{decoder_forward.18} parent=5 // pred_region
      %s443 = ssub.s32 %s10, 2
      // Predicated region
      $region45: #{decoder_forward.18} parent=43 // pred_check
        %p444 = pneg %p163
      $region46: #{decoder_forward.18} parent=43 // pred_check_branch
        %446 = sbr.rel (%p444) target = $region48
      $region47: #{decoder_forward.18} parent=43 // pred_region
        %p447 = scmp.lt.s32.totalorder %s21, 1
        %s448 = scalar_select %p447, %s21, 1
        %p449 = scmp.lt.s32.totalorder %s22, 3
        %s450 = scalar_select %p449, %s22, 3
        %s451 = smul.addr %s448, 4
        %s452 = sadd.s32 %s450, %s451
        %s453 = smul.addr %s452, 8
        %s454 = scalar_lea.vmem %s4, %s453
      $region48: #{decoder_forward.18} parent=43 // pred_fallthru
        _
    $region44: #{decoder_forward.18} parent=5 // pred_fallthru
      _
  $region6: #{decoder_forward.18} parent=0 // loop_footer
    %s14 = sadd.s32 1, %s10
  $region7: #{decoder_forward.18} parent=0 // loop_footer_branch
    %9 = sbr.rel target = $region3
  $region8: #{decoder_forward.18} parent=0 // loop_exit
    _

// kernel: decoder_forward.19
$region0: #{decoder_forward.19}
  #allocation0 [shape = 'u32[]', space=smem, size = 0x4, offset = 0x4, fixed_abs, tag = 'smem constant byte address 0x4 - core index']
  #allocation1 [shape = 'u32[144,128]{1,0:T(1,128)}', space=vmem, size = 0x12000, scoped, tag = 'internal scratch']
  #allocation2 [shape = 'f32[16,32]{1,0:T(8,128)}', space=vmem, size = 0x2000, scoped, tag = 'scratch operand']
  %s0 = inlined_call_operand.vmem [shape: f32[16,32], index: 0, kind: input, shape index: {}]
  %s1 = inlined_call_operand.vmem [shape: bf16[32,32], index: 1, kind: input, shape index: {}]
  %s2 = inlined_call_operand.vmem [shape: f32[1,32], index: 2, kind: input, shape index: {}]
  %s3 = inlined_call_operand.vmem [shape: f32[16,32], index: 3, kind: input, shape index: {}]
  %s4 = inlined_call_operand.vmem [shape: f32[16,32], index: 4, kind: output, shape index: {}]
  %s5 = sld [smem:[#allocation0]]
  $region34: #{decoder_forward.19} parent=0
    _
  %s7 = ssub.s32 1, %s5
  %s8 = scalar_select 0, %s7, %s5
  // Predicated region
  $region2: #{decoder_forward.19} parent=0 // pred_check
    _
  $region3: #{decoder_forward.19} parent=0 // pred_check_branch
    %10 = sbr.rel (0) target = $region5
  $region4: #{decoder_forward.19} parent=0 // pred_region
    _
  $region5: #{decoder_forward.19} parent=0 // pred_fallthru
    _
  // Predicated region
  $region6: #{decoder_forward.19} parent=0 // pred_check
    _
  $region7: #{decoder_forward.19} parent=0 // pred_check_branch
    %12 = sbr.rel (0) target = $region9
  $region8: #{decoder_forward.19} parent=0 // pred_region
    _
  $region9: #{decoder_forward.19} parent=0 // pred_fallthru
    _
  // Predicated region
  $region10: #{decoder_forward.19} parent=0 // pred_check
    _
  $region11: #{decoder_forward.19} parent=0 // pred_check_branch
    %14 = sbr.rel (0) target = $region13
  $region12: #{decoder_forward.19} parent=0 // pred_region
    _
  $region13: #{decoder_forward.19} parent=0 // pred_fallthru
    _
  // Predicated region
  $region14: #{decoder_forward.19} parent=0 // pred_check
    _
  $region15: #{decoder_forward.19} parent=0 // pred_check_branch
    %16 = sbr.rel (0) target = $region17
  $region16: #{decoder_forward.19} parent=0 // pred_region
    _
  $region17: #{decoder_forward.19} parent=0 // pred_fallthru
    _
  %p18 = scmp.eq.s32.totalorder 0, 0
  // Predicated region
  $region18: #{decoder_forward.19} parent=0 // pred_check
    %p19 = pneg %p18
  $region19: #{decoder_forward.19} parent=0 // pred_check_branch
    %21 = sbr.rel (%p19) target = $region21
  $region20: #{decoder_forward.19} parent=0 // pred_region
    %vm22 = vcmask 261120
    %23 = vst.msk [vmem:[#allocation2] sm:$0xff] %vm22, 0.0
    %24 = vst.msk [vmem:[#allocation2 + $0x8] sm:$0xff] %vm22, 0.0
  $region21: #{decoder_forward.19} parent=0 // pred_fallthru
    _
  %v25 = vld [vmem:[#allocation2] sm:$0xff]
  %v26 = vld [vmem:[#allocation2 + $0x8] sm:$0xff]
  %v27 = vld [vmem:[%s0] sm:$0xff]
  %v28 = vld [vmem:[%s0 + $0x8] sm:$0xff]
  %v29 = vpack.c.bf16 %v28, %v27
  %v30 = vld [vmem:[%s1] sm:$0xf]
  %v31 = vld [vmem:[%s1 + $0x4] sm:$0xf]
  %v32 = vld [vmem:[%s1 + $0x8] sm:$0xf]
  %v33 = vld [vmem:[%s1 + $0xc] sm:$0xf]
  %v38 = vunpack.c.l.b16 %v30
  %v39 = vunpack.c.l.b16 %v31
  %v40 = vunpack.c.l.b16 %v32
  %v41 = vunpack.c.l.b16 %v33
  %v42 = vpack.c.b16 %v39, %v38
  %v43 = vpack.c.b16 %v41, %v40
  %vm46 = vcmask 261120
  %v48 = vsel %vm46, %v29, 0
  %50 = vmatprep.subr.bf16.mxu0 0
  %51 = vmatpush1.bf16.msra.mxu0 %v42
  %52 = vmatprep.subr.bf16.mxu0 0
  %53 = vmatpush1.bf16.msra.mxu0 %v43
  %54 = vmatprep.subr.bf16.mxu0 0
  %55 = vmatpush1.bf16.msra.mxu0 0
  %56 = vmatprep.subr.bf16.mxu0 0
  %57 = vmatpush1.bf16.msra.mxu0 0
  %58 = vmatprep.subr.bf16.mxu0 0
  %59 = vmatpush1.bf16.msra.mxu0 0
  %60 = vmatprep.subr.bf16.mxu0 0
  %61 = vmatpush1.bf16.msra.mxu0 0
  %62 = vmatprep.subr.bf16.mxu0 0
  %63 = vmatpush1.bf16.msra.mxu0 0
  %64 = vmatprep.subr.bf16.mxu0 0
  %65 = vmatpush1.bf16.msra.mxu0 0
  %66 = vmatprep.subr.bf16.mxu0 0
  %67 = vmatpush1.bf16.msra.mxu0 0
  %68 = vmatprep.subr.bf16.mxu0 0
  %69 = vmatpush1.bf16.msra.mxu0 0
  %70 = vmatprep.subr.bf16.mxu0 0
  %71 = vmatpush1.bf16.msra.mxu0 0
  %72 = vmatprep.subr.bf16.mxu0 0
  %73 = vmatpush1.bf16.msra.mxu0 0
  %74 = vmatprep.subr.bf16.mxu0 0
  %75 = vmatpush1.bf16.msra.mxu0 0
  %76 = vmatprep.subr.bf16.mxu0 0
  %77 = vmatpush1.bf16.msra.mxu0 0
  %78 = vmatprep.subr.bf16.mxu0 0
  %79 = vmatpush1.bf16.msra.mxu0 0
  %80 = vmatprep.subr.bf16.mxu0 0
  %81 = vmatpush1.bf16.msra.mxu0 0
  %82 = vmatprep.mubr.bf16.mxu0 0
  %83 = vmatmul.mubr.bf16.gmra.mrb[0].mxu0 %v48
  %v84 = vpop.f32.mrb[0].mxu0
  %v85 = vadd.f32 0.0, %v84
  %v86 = vpop.f32.mrb[0].mxu0
  %v87 = vpop.f32.mrb[0].mxu0
  %v88 = vadd.f32 0.0, %v87
  %v89 = vpop.f32.mrb[0].mxu0
  %90 = vdwg.mxu0
  %v91 = vadd.f32 %v25, %v85
  %v92 = vadd.f32 %v26, %v88
  %93 = vst.msk [vmem:[#allocation2] sm:$0xff] %vm46, %v91
  %94 = vst.msk [vmem:[#allocation2 + $0x8] sm:$0xff] %vm46, %v92
  // Predicated region
  $region22: #{decoder_forward.19} parent=0 // pred_check
    %p95 = pneg %p18
  $region23: #{decoder_forward.19} parent=0 // pred_check_branch
    %97 = sbr.rel (%p95) target = $region25
  $region24: #{decoder_forward.19} parent=0 // pred_region
    %v98 = vld [vmem:[#allocation2] sm:$0xff]
    %v99 = vld [vmem:[#allocation2 + $0x8] sm:$0xff]
    %v100 = vld [vmem:[%s2] sm:$0x1]
    %v102 = vlaneseq
    %v103 = vshrl.u32 %v102, 7
    %v104 = vsub.s32 0, %v103
    %v105 = vrot.slane %v100, %v104
    %v107 = vadd.f32 %v98, %v105
    %v108 = vadd.f32 %v99, %v105
    %v109 = vld [vmem:[%s3] sm:$0xff]
    %v110 = vld [vmem:[%s3 + $0x8] sm:$0xff]
    %v111 = vadd.f32 %v107, %v109
    %v112 = vadd.f32 %v108, %v110
    %113 = vst.msk [vmem:[%s4] sm:$0xff] %vm46, %v111
    %114 = vst.msk [vmem:[%s4 + $0x8] sm:$0xff] %vm46, %v112
  $region25: #{decoder_forward.19} parent=0 // pred_fallthru
    _
  // Predicated region
  $region26: #{decoder_forward.19} parent=0 // pred_check
    _
  $region27: #{decoder_forward.19} parent=0 // pred_check_branch
    %116 = sbr.rel (0) target = $region29
  $region28: #{decoder_forward.19} parent=0 // pred_region
    _
  $region29: #{decoder_forward.19} parent=0 // pred_fallthru
    _
  // Predicated region
  $region30: #{decoder_forward.19} parent=0 // pred_check
    _
  $region31: #{decoder_forward.19} parent=0 // pred_check_branch
    %118 = sbr.rel (0) target = $region33
  $region32: #{decoder_forward.19} parent=0 // pred_region
    _
  $region33: #{decoder_forward.19} parent=0 // pred_fallthru
    _

// kernel: decoder_forward.20
$region0: #{decoder_forward.20}
  #allocation0 [shape = 'u32[]', space=smem, size = 0x4, offset = 0x4, fixed_abs, tag = 'smem constant byte address 0x4 - core index']
  #allocation1 [shape = 'u32[144,128]{1,0:T(1,128)}', space=vmem, size = 0x12000, scoped, tag = 'internal scratch']
  #allocation2 [shape = 'bf16[16,32]{1,0:T(16,128)(2,1)}', space=vmem, size = 0x1000, scoped, tag = 'scratch operand']
  #allocation3 [shape = 'f32[1,1]{1,0:T(1,128)S(6)}', space=smem, size = 0x200, scoped, tag = 'scoped memory for decoder_forward.20']
  #allocation4 [shape = 'f32[1,1]{1,0:T(1,128)S(6)}', space=smem, size = 0x200, scoped, tag = 'scoped memory for decoder_forward.20']
  %s0 = inlined_call_operand.<no memory space> [shape: f32[1,1], index: 0, kind: input, shape index: {}]
  %s1 = inlined_call_operand.<no memory space> [shape: f32[1,1], index: 1, kind: input, shape index: {}]
  %s2 = inlined_call_operand.vmem [shape: f32[16,32], index: 2, kind: input, shape index: {}]
  %s3 = inlined_call_operand.vmem [shape: bf16[32,32], index: 3, kind: input, shape index: {}]
  %s4 = inlined_call_operand.vmem [shape: f32[1,32], index: 4, kind: input, shape index: {}]
  %s5 = inlined_call_operand.vmem [shape: f32[16,32], index: 5, kind: output, shape index: {}]
  %s6 = sld [smem:[#allocation0]]
  $region34: #{decoder_forward.20} parent=0
    _
  %s8 = ssub.s32 1, %s6
  %s9 = scalar_select 0, %s8, %s6
  %10 = sst [smem:[#allocation3]] %s0
  %11 = sst [smem:[#allocation4]] %s1
  // Predicated region
  $region2: #{decoder_forward.20} parent=0 // pred_check
    _
  $region3: #{decoder_forward.20} parent=0 // pred_check_branch
    %13 = sbr.rel (0) target = $region5
  $region4: #{decoder_forward.20} parent=0 // pred_region
    _
  $region5: #{decoder_forward.20} parent=0 // pred_fallthru
    _
  // Predicated region
  $region6: #{decoder_forward.20} parent=0 // pred_check
    _
  $region7: #{decoder_forward.20} parent=0 // pred_check_branch
    %15 = sbr.rel (0) target = $region9
  $region8: #{decoder_forward.20} parent=0 // pred_region
    _
  $region9: #{decoder_forward.20} parent=0 // pred_fallthru
    _
  // Predicated region
  $region10: #{decoder_forward.20} parent=0 // pred_check
    _
  $region11: #{decoder_forward.20} parent=0 // pred_check_branch
    %17 = sbr.rel (0) target = $region13
  $region12: #{decoder_forward.20} parent=0 // pred_region
    _
  $region13: #{decoder_forward.20} parent=0 // pred_fallthru
    _
  // Predicated region
  $region14: #{decoder_forward.20} parent=0 // pred_check
    _
  $region15: #{decoder_forward.20} parent=0 // pred_check_branch
    %19 = sbr.rel (0) target = $region17
  $region16: #{decoder_forward.20} parent=0 // pred_region
    _
  $region17: #{decoder_forward.20} parent=0 // pred_fallthru
    _
  // Predicated region
  $region18: #{decoder_forward.20} parent=0 // pred_check
    _
  $region19: #{decoder_forward.20} parent=0 // pred_check_branch
    %21 = sbr.rel (0) target = $region21
  $region20: #{decoder_forward.20} parent=0 // pred_region
    _
  $region21: #{decoder_forward.20} parent=0 // pred_fallthru
    _
  %p23 = scmp.eq.s32.totalorder 0, 0
  // Predicated region
  $region22: #{decoder_forward.20} parent=0 // pred_check
    %p24 = pneg %p23
  $region23: #{decoder_forward.20} parent=0 // pred_check_branch
    %26 = sbr.rel (%p24) target = $region25
  $region24: #{decoder_forward.20} parent=0 // pred_region
    %v27 = vld [vmem:[%s2] sm:$0xff]
    %v28 = vld [vmem:[%s2 + $0x8] sm:$0xff]
    %vm29 = vcmask 261120
    %v30 = vsel %vm29, %v27, 0.0
    %31 = vadd.xlane.f32.xlu0 %v30
    %v32 = vpop.xlane.xlu0 %31
    %v33 = vsel %vm29, %v28, 0.0
    %34 = vadd.xlane.f32.xlu0 %v33
    %v35 = vpop.xlane.xlu0 %34
    %v36 = vrcp.pop 32.0
    %v37 = vmul.f32 %v32, %v36
    %v38 = vmul.f32 %v35, %v36
    %v39 = vsub.f32 %v27, %v37
    %v40 = vsub.f32 %v28, %v38
    %v41 = vmul.f32 %v39, %v39
    %v42 = vmul.f32 %v40, %v40
    %v43 = vsel %vm29, %v41, 0.0
    %44 = vadd.xlane.f32.xlu0 %v43
    %v45 = vpop.xlane.xlu0 %44
    %v46 = vsel %vm29, %v42, 0.0
    %47 = vadd.xlane.f32.xlu0 %v46
    %v48 = vpop.xlane.xlu0 %47
    %v49 = vrcp.pop 31.0
    %v50 = vmul.f32 %v45, %v49
    %v51 = vmul.f32 %v48, %v49
    %v52 = vrsqrt.pop %v50
    %v53 = vmul.f32 %v50, %v52
    %vm54 = vcmp.eq.f32.partialorder %v50, inf
    %v55 = vsel %vm54, %v50, %v53
    %vm56 = vcmp.eq.f32.partialorder %v50, 0.0
    %v57 = vand.u32 %v50, 2147483648
    %v58 = vsel %vm56, %v57, %v55
    %v59 = vrsqrt.pop %v51
    %v60 = vmul.f32 %v51, %v59
    %vm61 = vcmp.eq.f32.partialorder %v51, inf
    %v62 = vsel %vm61, %v51, %v60
    %vm63 = vcmp.eq.f32.partialorder %v51, 0.0
    %v64 = vand.u32 %v51, 2147483648
    %v65 = vsel %vm63, %v64, %v62
    %v66 = vadd.f32 %v58, 1e-06
    %v67 = vadd.f32 %v65, 1e-06
    %v68 = vrcp.pop %v66
    %v69 = vrcp.pop %v67
    %s70 = sld [smem:[#allocation3]]
    %v71 = vstv %s70
    %v72 = vmul.f32 %v71, %v39
    %v73 = vmul.f32 %v71, %v40
    %v74 = vmul.f32 %v72, %v68
    %v75 = vmul.f32 %v73, %v69
    %s76 = sld [smem:[#allocation4]]
    %v77 = vstv %s76
    %v78 = vadd.f32 %v74, %v77
    %v79 = vadd.f32 %v75, %v77
    %v80 = vpack.c.bf16 %v79, %v78
    %81 = vst.msk [vmem:[#allocation2] sm:$0xff] %vm29, %v80
  $region25: #{decoder_forward.20} parent=0 // pred_fallthru
    _
  %v82 = vld [vmem:[#allocation2] sm:$0xff]
  %v83 = vld [vmem:[%s3] sm:$0xf]
  %v84 = vld [vmem:[%s3 + $0x4] sm:$0xf]
  %v85 = vld [vmem:[%s3 + $0x8] sm:$0xf]
  %v86 = vld [vmem:[%s3 + $0xc] sm:$0xf]
  %v87 = vld [vmem:[%s4] sm:$0x1]
  %v89 = vlaneseq
  %v90 = vshrl.u32 %v89, 7
  %v91 = vsub.s32 0, %v90
  %v92 = vrot.slane %v87, %v91
  %v98 = vunpack.c.l.b16 %v83
  %v99 = vunpack.c.l.b16 %v84
  %v100 = vunpack.c.l.b16 %v85
  %v101 = vunpack.c.l.b16 %v86
  %v102 = vpack.c.b16 %v99, %v98
  %v103 = vpack.c.b16 %v101, %v100
  %vm106 = vcmask 261120
  %v108 = vsel %vm106, %v82, 0
  %110 = vmatprep.subr.bf16.mxu0 0
  %111 = vmatpush1.bf16.msra.mxu0 %v102
  %112 = vmatprep.subr.bf16.mxu0 0
  %113 = vmatpush1.bf16.msra.mxu0 %v103
  %114 = vmatprep.subr.bf16.mxu0 0
  %115 = vmatpush1.bf16.msra.mxu0 0
  %116 = vmatprep.subr.bf16.mxu0 0
  %117 = vmatpush1.bf16.msra.mxu0 0
  %118 = vmatprep.subr.bf16.mxu0 0
  %119 = vmatpush1.bf16.msra.mxu0 0
  %120 = vmatprep.subr.bf16.mxu0 0
  %121 = vmatpush1.bf16.msra.mxu0 0
  %122 = vmatprep.subr.bf16.mxu0 0
  %123 = vmatpush1.bf16.msra.mxu0 0
  %124 = vmatprep.subr.bf16.mxu0 0
  %125 = vmatpush1.bf16.msra.mxu0 0
  %126 = vmatprep.subr.bf16.mxu0 0
  %127 = vmatpush1.bf16.msra.mxu0 0
  %128 = vmatprep.subr.bf16.mxu0 0
  %129 = vmatpush1.bf16.msra.mxu0 0
  %130 = vmatprep.subr.bf16.mxu0 0
  %131 = vmatpush1.bf16.msra.mxu0 0
  %132 = vmatprep.subr.bf16.mxu0 0
  %133 = vmatpush1.bf16.msra.mxu0 0
  %134 = vmatprep.subr.bf16.mxu0 0
  %135 = vmatpush1.bf16.msra.mxu0 0
  %136 = vmatprep.subr.bf16.mxu0 0
  %137 = vmatpush1.bf16.msra.mxu0 0
  %138 = vmatprep.subr.bf16.mxu0 0
  %139 = vmatpush1.bf16.msra.mxu0 0
  %140 = vmatprep.subr.bf16.mxu0 0
  %141 = vmatpush1.bf16.msra.mxu0 0
  %142 = vmatprep.mubr.bf16.mxu0 0
  %143 = vmatmul.mubr.bf16.gmra.mrb[0].mxu0 %v108
  %v144 = vpop.f32.mrb[0].mxu0
  %v145 = vadd.f32 %v92, %v144
  %v146 = vpop.f32.mrb[0].mxu0
  %v147 = vpop.f32.mrb[0].mxu0
  %v148 = vadd.f32 %v92, %v147
  %v149 = vpop.f32.mrb[0].mxu0
  %150 = vdwg.mxu0
  %151 = vst.msk [vmem:[%s5] sm:$0xff] %vm106, %v145
  %152 = vst.msk [vmem:[%s5 + $0x8] sm:$0xff] %vm106, %v148
  // Predicated region
  $region26: #{decoder_forward.20} parent=0 // pred_check
    _
  $region27: #{decoder_forward.20} parent=0 // pred_check_branch
    %154 = sbr.rel (0) target = $region29
  $region28: #{decoder_forward.20} parent=0 // pred_region
    _
  $region29: #{decoder_forward.20} parent=0 // pred_fallthru
    _
  // Predicated region
  $region30: #{decoder_forward.20} parent=0 // pred_check
    _
  $region31: #{decoder_forward.20} parent=0 // pred_check_branch
    %156 = sbr.rel (0) target = $region33
  $region32: #{decoder_forward.20} parent=0 // pred_region
    _
  $region33: #{decoder_forward.20} parent=0 // pred_fallthru
    _

// kernel: decoder_forward.21
$region0: #{decoder_forward.21}
  #allocation0 [shape = 'u32[]', space=smem, size = 0x4, offset = 0x4, fixed_abs, tag = 'smem constant byte address 0x4 - core index']
  #allocation1 [shape = 'u32[144,128]{1,0:T(1,128)}', space=vmem, size = 0x12000, scoped, tag = 'internal scratch']
  #allocation2 [shape = 'f32[16,64]{1,0:T(8,128)}', space=vmem, size = 0x2000, scoped, tag = 'scratch operand']
  %s0 = inlined_call_operand.vmem [shape: f32[16,32], index: 0, kind: input, shape index: {}]
  %s1 = inlined_call_operand.vmem [shape: bf16[32,64], index: 1, kind: input, shape index: {}]
  %s2 = inlined_call_operand.vmem [shape: f32[1,64], index: 2, kind: input, shape index: {}]
  %s3 = inlined_call_operand.vmem [shape: f32[16,64], index: 3, kind: output, shape index: {}]
  %s4 = sld [smem:[#allocation0]]
  $region30: #{decoder_forward.21} parent=0
    _
  %s6 = ssub.s32 1, %s4
  %s7 = scalar_select 0, %s6, %s4
  // Predicated region
  $region2: #{decoder_forward.21} parent=0 // pred_check
    _
  $region3: #{decoder_forward.21} parent=0 // pred_check_branch
    %9 = sbr.rel (0) target = $region5
  $region4: #{decoder_forward.21} parent=0 // pred_region
    _
  $region5: #{decoder_forward.21} parent=0 // pred_fallthru
    _
  // Predicated region
  $region6: #{decoder_forward.21} parent=0 // pred_check
    _
  $region7: #{decoder_forward.21} parent=0 // pred_check_branch
    %11 = sbr.rel (0) target = $region9
  $region8: #{decoder_forward.21} parent=0 // pred_region
    _
  $region9: #{decoder_forward.21} parent=0 // pred_fallthru
    _
  // Predicated region
  $region10: #{decoder_forward.21} parent=0 // pred_check
    _
  $region11: #{decoder_forward.21} parent=0 // pred_check_branch
    %13 = sbr.rel (0) target = $region13
  $region12: #{decoder_forward.21} parent=0 // pred_region
    _
  $region13: #{decoder_forward.21} parent=0 // pred_fallthru
    _
  %p15 = scmp.eq.s32.totalorder 0, 0
  // Predicated region
  $region14: #{decoder_forward.21} parent=0 // pred_check
    %p16 = pneg %p15
  $region15: #{decoder_forward.21} parent=0 // pred_check_branch
    %18 = sbr.rel (%p16) target = $region17
  $region16: #{decoder_forward.21} parent=0 // pred_region
    %vm19 = vcmask 523264
    %20 = vst.msk [vmem:[#allocation2] sm:$0xff] %vm19, 0.0
    %21 = vst.msk [vmem:[#allocation2 + $0x8] sm:$0xff] %vm19, 0.0
  $region17: #{decoder_forward.21} parent=0 // pred_fallthru
    _
  %v22 = vld [vmem:[#allocation2] sm:$0xff]
  %v23 = vld [vmem:[#allocation2 + $0x8] sm:$0xff]
  %v24 = vld [vmem:[%s0] sm:$0xff]
  %v25 = vld [vmem:[%s0 + $0x8] sm:$0xff]
  %v26 = vpack.c.bf16 %v25, %v24
  %v27 = vld [vmem:[%s1] sm:$0xf]
  %v28 = vld [vmem:[%s1 + $0x4] sm:$0xf]
  %v29 = vld [vmem:[%s1 + $0x8] sm:$0xf]
  %v30 = vld [vmem:[%s1 + $0xc] sm:$0xf]
  %v35 = vunpack.c.l.b16 %v27
  %v36 = vunpack.c.l.b16 %v28
  %v37 = vunpack.c.l.b16 %v29
  %v38 = vunpack.c.l.b16 %v30
  %v39 = vpack.c.b16 %v36, %v35
  %v40 = vpack.c.b16 %v38, %v37
  %vm43 = vcmask 261120
  %v45 = vsel %vm43, %v26, 0
  %47 = vmatprep.subr.bf16.mxu0 0
  %48 = vmatpush1.bf16.msra.mxu0 %v39
  %49 = vmatprep.subr.bf16.mxu0 0
  %50 = vmatpush1.bf16.msra.mxu0 %v40
  %51 = vmatprep.subr.bf16.mxu0 0
  %52 = vmatpush1.bf16.msra.mxu0 0
  %53 = vmatprep.subr.bf16.mxu0 0
  %54 = vmatpush1.bf16.msra.mxu0 0
  %55 = vmatprep.subr.bf16.mxu0 0
  %56 = vmatpush1.bf16.msra.mxu0 0
  %57 = vmatprep.subr.bf16.mxu0 0
  %58 = vmatpush1.bf16.msra.mxu0 0
  %59 = vmatprep.subr.bf16.mxu0 0
  %60 = vmatpush1.bf16.msra.mxu0 0
  %61 = vmatprep.subr.bf16.mxu0 0
  %62 = vmatpush1.bf16.msra.mxu0 0
  %63 = vmatprep.subr.bf16.mxu0 0
  %64 = vmatpush1.bf16.msra.mxu0 0
  %65 = vmatprep.subr.bf16.mxu0 0
  %66 = vmatpush1.bf16.msra.mxu0 0
  %67 = vmatprep.subr.bf16.mxu0 0
  %68 = vmatpush1.bf16.msra.mxu0 0
  %69 = vmatprep.subr.bf16.mxu0 0
  %70 = vmatpush1.bf16.msra.mxu0 0
  %71 = vmatprep.subr.bf16.mxu0 0
  %72 = vmatpush1.bf16.msra.mxu0 0
  %73 = vmatprep.subr.bf16.mxu0 0
  %74 = vmatpush1.bf16.msra.mxu0 0
  %75 = vmatprep.subr.bf16.mxu0 0
  %76 = vmatpush1.bf16.msra.mxu0 0
  %77 = vmatprep.subr.bf16.mxu0 0
  %78 = vmatpush1.bf16.msra.mxu0 0
  %79 = vmatprep.mubr.bf16.mxu0 0
  %80 = vmatmul.mubr.bf16.gmra.mrb[0].mxu0 %v45
  %v81 = vpop.f32.mrb[0].mxu0
  %v82 = vadd.f32 0.0, %v81
  %v83 = vpop.f32.mrb[0].mxu0
  %v84 = vpop.f32.mrb[0].mxu0
  %v85 = vadd.f32 0.0, %v84
  %v86 = vpop.f32.mrb[0].mxu0
  %87 = vdwg.mxu0
  %v88 = vadd.f32 %v22, %v82
  %v89 = vadd.f32 %v23, %v85
  %vm90 = vcmask 523264
  %91 = vst.msk [vmem:[#allocation2] sm:$0xff] %vm90, %v88
  %92 = vst.msk [vmem:[#allocation2 + $0x8] sm:$0xff] %vm90, %v89
  // Predicated region
  $region18: #{decoder_forward.21} parent=0 // pred_check
    %p93 = pneg %p15
  $region19: #{decoder_forward.21} parent=0 // pred_check_branch
    %95 = sbr.rel (%p93) target = $region21
  $region20: #{decoder_forward.21} parent=0 // pred_region
    %v96 = vld [vmem:[#allocation2] sm:$0xff]
    %v97 = vld [vmem:[#allocation2 + $0x8] sm:$0xff]
    %v98 = vld [vmem:[%s2] sm:$0x1]
    %v100 = vlaneseq
    %v101 = vshrl.u32 %v100, 7
    %v102 = vsub.s32 0, %v101
    %v103 = vrot.slane %v98, %v102
    %v105 = vadd.f32 %v96, %v103
    %v106 = vadd.f32 %v97, %v103
    %107 = vst.msk [vmem:[%s3] sm:$0xff] %vm90, %v105
    %108 = vst.msk [vmem:[%s3 + $0x8] sm:$0xff] %vm90, %v106
  $region21: #{decoder_forward.21} parent=0 // pred_fallthru
    _
  // Predicated region
  $region22: #{decoder_forward.21} parent=0 // pred_check
    _
  $region23: #{decoder_forward.21} parent=0 // pred_check_branch
    %110 = sbr.rel (0) target = $region25
  $region24: #{decoder_forward.21} parent=0 // pred_region
    _
  $region25: #{decoder_forward.21} parent=0 // pred_fallthru
    _
  // Predicated region
  $region26: #{decoder_forward.21} parent=0 // pred_check
    _
  $region27: #{decoder_forward.21} parent=0 // pred_check_branch
    %112 = sbr.rel (0) target = $region29
  $region28: #{decoder_forward.21} parent=0 // pred_region
    _
  $region29: #{decoder_forward.21} parent=0 // pred_fallthru
    _

// kernel: decoder_forward.22
$region0: #{decoder_forward.22}
  #allocation0 [shape = 'u32[]', space=smem, size = 0x4, offset = 0x4, fixed_abs, tag = 'smem constant byte address 0x4 - core index']
  #allocation1 [shape = 'u32[144,128]{1,0:T(1,128)}', space=vmem, size = 0x12000, scoped, tag = 'internal scratch']
  %s0 = inlined_call_operand.vmem [shape: f32[2,4,8,8], index: 0, kind: input, shape index: {}]
  %s1 = inlined_call_operand.vmem [shape: f32[2,4,8,8], index: 1, kind: input, shape index: {}]
  %s2 = inlined_call_operand.vmem [shape: f32[2,4,8,8], index: 2, kind: input, shape index: {}]
  %s3 = inlined_call_operand.vmem [shape: s8[2,1,8], index: 3, kind: input, shape index: {}]
  %s4 = inlined_call_operand.vmem [shape: f32[2,4,8,8], index: 4, kind: output, shape index: {}]
  %s5 = sld [smem:[#allocation0]]
  $region49: #{decoder_forward.22} parent=0
    _
  %s7 = ssub.s32 1, %s5
  %s8 = scalar_select 0, %s7, %s5
  loop: start=0, step=1, limit=10
  $region2: #{decoder_forward.22} parent=0 // loop_pre_header
    _
  $region3: #{decoder_forward.22} parent=0 // loop_header
    %s10 = sphi 0, %s14
    %p11 = scmp.ge.s32.totalorder %s10, 10
    %s17 = sphi 0, %s29
    %s18 = sphi 0, %s25
    %s19 = sphi 0, %s17
    %s20 = sphi 0, %s18
    %s21 = sphi 0, %s19
    %s22 = sphi 0, %s20
    %s34 = sphi 0, %s36
    %s37 = sphi 0, %s34
    %s38 = sphi 0, %s37
    %s54 = sphi 0, %s38
    %s62 = sphi 0, %s64
    %s65 = sphi 0, %s62
    %s66 = sphi 0, %s65
    %s82 = sphi 0, %s66
    %s90 = sphi 0, %s92
    %s93 = sphi 0, %s90
    %s94 = sphi 0, %s93
    %s110 = sphi 0, %s94
    %s116 = sphi 0, %s118
    %s119 = sphi 0, %s116
    %s120 = sphi 0, %s119
    %s136 = sphi 0, %s120
    %s144 = sphi 0, %s146
    %s147 = sphi 0, %s144
    %s148 = sphi 0, %s147
    %s164 = sphi 0, %s148
  $region4: #{decoder_forward.22} parent=0 // loop_header_branch
    %13 = sbr.rel (%p11) target = $region8
  $region5: #{decoder_forward.22} parent=0 // loop_body
    %s15 = ssub.s32 %s10, 1
    %s16 = ssub.s32 %s10, 2
    %s23 = sadd.s32 1, %s18
    %p24 = scmp.ge.s32.totalorder %s23, 4
    %s25 = scalar_select %p24, 0, %s23
    %s26 = sadd.s32 1, %s17
    %s27 = scalar_select %p24, %s26, %s17
    %p28 = scmp.ge.s32.totalorder %s27, 2
    %s29 = scalar_select %p28, 0, %s27
    %s30 = ssub.s32 %s17, %s29
    %s31 = ssub.s32 %s18, %s25
    %s32 = sor.u32 %s30, %s31
    %p33 = scmp.eq.s32.totalorder %s32, 0
    %s35 = sadd.s32 %s34, 1
    %s36 = scalar_select %p33, %s34, %s35
    %p39 = pneg %p33
    %p40 = scmp.eq.s32.totalorder %s10, 7
    %p41 = por %p39, %p40
    %p42 = scmp.ne.s32.totalorder %s34, %s37
    %p43 = scmp.eq.s32.totalorder %s10, 0
    %p44 = por %p42, %p43
    %p45 = scmp.ne.s32.totalorder %s34, %s37
    %p46 = scmp.eq.s32.totalorder %s15, 7
    %p47 = por %p45, %p46
    %p48 = scmp.ne.s32.totalorder %s37, %s38
    %p49 = scmp.eq.s32.totalorder %s15, 0
    %p50 = por %p48, %p49
    %p51 = scmp.ne.s32.totalorder %s37, %s38
    %p52 = scmp.eq.s32.totalorder %s16, 7
    %p53 = por %p51, %p52
    %p55 = scmp.ne.s32.totalorder %s38, %s54
    %p56 = scmp.eq.s32.totalorder %s16, 0
    %p57 = por %p55, %p56
    %s58 = ssub.s32 %s17, %s29
    %s59 = ssub.s32 %s18, %s25
    %s60 = sor.u32 %s58, %s59
    %p61 = scmp.eq.s32.totalorder %s60, 0
    %s63 = sadd.s32 %s62, 1
    %s64 = scalar_select %p61, %s62, %s63
    %p67 = pneg %p61
    %p68 = scmp.eq.s32.totalorder %s10, 7
    %p69 = por %p67, %p68
    %p70 = scmp.ne.s32.totalorder %s62, %s65
    %p71 = scmp.eq.s32.totalorder %s10, 0
    %p72 = por %p70, %p71
    %p73 = scmp.ne.s32.totalorder %s62, %s65
    %p74 = scmp.eq.s32.totalorder %s15, 7
    %p75 = por %p73, %p74
    %p76 = scmp.ne.s32.totalorder %s65, %s66
    %p77 = scmp.eq.s32.totalorder %s15, 0
    %p78 = por %p76, %p77
    %p79 = scmp.ne.s32.totalorder %s65, %s66
    %p80 = scmp.eq.s32.totalorder %s16, 7
    %p81 = por %p79, %p80
    %p83 = scmp.ne.s32.totalorder %s66, %s82
    %p84 = scmp.eq.s32.totalorder %s16, 0
    %p85 = por %p83, %p84
    %s86 = ssub.s32 %s17, %s29
    %s87 = ssub.s32 %s18, %s25
    %s88 = sor.u32 %s86, %s87
    %p89 = scmp.eq.s32.totalorder %s88, 0
    %s91 = sadd.s32 %s90, 1
    %s92 = scalar_select %p89, %s90, %s91
    %p95 = pneg %p89
    %p96 = scmp.eq.s32.totalorder %s10, 7
    %p97 = por %p95, %p96
    %p98 = scmp.ne.s32.totalorder %s90, %s93
    %p99 = scmp.eq.s32.totalorder %s10, 0
    %p100 = por %p98, %p99
    %p101 = scmp.ne.s32.totalorder %s90, %s93
    %p102 = scmp.eq.s32.totalorder %s15, 7
    %p103 = por %p101, %p102
    %p104 = scmp.ne.s32.totalorder %s93, %s94
    %p105 = scmp.eq.s32.totalorder %s15, 0
    %p106 = por %p104, %p105
    %p107 = scmp.ne.s32.totalorder %s93, %s94
    %p108 = scmp.eq.s32.totalorder %s16, 7
    %p109 = por %p107, %p108
    %p111 = scmp.ne.s32.totalorder %s94, %s110
    %p112 = scmp.eq.s32.totalorder %s16, 0
    %p113 = por %p111, %p112
    %s114 = ssub.s32 %s17, %s29
    %p115 = scmp.eq.s32.totalorder %s114, 0
    %s117 = sadd.s32 %s116, 1
    %s118 = scalar_select %p115, %s116, %s117
    %p121 = pneg %p115
    %p122 = scmp.eq.s32.totalorder %s10, 7
    %p123 = por %p121, %p122
    %p124 = scmp.ne.s32.totalorder %s116, %s119
    %p125 = scmp.eq.s32.totalorder %s10, 0
    %p126 = por %p124, %p125
    %p127 = scmp.ne.s32.totalorder %s116, %s119
    %p128 = scmp.eq.s32.totalorder %s15, 7
    %p129 = por %p127, %p128
    %p130 = scmp.ne.s32.totalorder %s119, %s120
    %p131 = scmp.eq.s32.totalorder %s15, 0
    %p132 = por %p130, %p131
    %p133 = scmp.ne.s32.totalorder %s119, %s120
    %p134 = scmp.eq.s32.totalorder %s16, 7
    %p135 = por %p133, %p134
    %p137 = scmp.ne.s32.totalorder %s120, %s136
    %p138 = scmp.eq.s32.totalorder %s16, 0
    %p139 = por %p137, %p138
    %s140 = ssub.s32 %s17, %s29
    %s141 = ssub.s32 %s18, %s25
    %s142 = sor.u32 %s140, %s141
    %p143 = scmp.eq.s32.totalorder %s142, 0
    %s145 = sadd.s32 %s144, 1
    %s146 = scalar_select %p143, %s144, %s145
    %p149 = pneg %p143
    %p150 = scmp.eq.s32.totalorder %s10, 7
    %p151 = por %p149, %p150
    %p152 = scmp.ne.s32.totalorder %s144, %s147
    %p153 = scmp.eq.s32.totalorder %s10, 0
    %p154 = por %p152, %p153
    %p155 = scmp.ne.s32.totalorder %s144, %s147
    %p156 = scmp.eq.s32.totalorder %s15, 7
    %p157 = por %p155, %p156
    %p158 = scmp.ne.s32.totalorder %s147, %s148
    %p159 = scmp.eq.s32.totalorder %s15, 0
    %p160 = por %p158, %p159
    %p161 = scmp.ne.s32.totalorder %s147, %s148
    %p162 = scmp.eq.s32.totalorder %s16, 7
    %p163 = por %p161, %p162
    %p165 = scmp.ne.s32.totalorder %s148, %s164
    %p166 = scmp.eq.s32.totalorder %s16, 0
    %p167 = por %p165, %p166
    %p168 = scmp.le.s32.totalorder 1, %s10
    %p169 = scmp.lt.s32.totalorder %s10, 9
    %p170 = pnand %p168, %p169
    %p171 = pneg %p170
    // Predicated region
    $region9: #{decoder_forward.22} parent=5 // pred_check
      _
    $region10: #{decoder_forward.22} parent=5 // pred_check_branch
      %173 = sbr.rel (%p170) target = $region12
    $region11: #{decoder_forward.22} parent=5 // pred_region
      %s174 = ssub.s32 %s10, 1
    $region12: #{decoder_forward.22} parent=5 // pred_fallthru
      _
    %p175 = scmp.lt.s32.totalorder %s10, 8
    // Predicated region
    $region13: #{decoder_forward.22} parent=5 // pred_check
      %p176 = pneg %p175
    $region14: #{decoder_forward.22} parent=5 // pred_check_branch
      %178 = sbr.rel (%p176) target = $region16
    $region15: #{decoder_forward.22} parent=5 // pred_region
      // Predicated region
      $region17: #{decoder_forward.22} parent=15 // pred_check
        %p179 = pneg %p44
      $region18: #{decoder_forward.22} parent=15 // pred_check_branch
        %181 = sbr.rel (%p179) target = $region20
      $region19: #{decoder_forward.22} parent=15 // pred_region
        %p182 = scmp.lt.s32.totalorder %s17, 1
        %s183 = scalar_select %p182, %s17, 1
        %p184 = scmp.lt.s32.totalorder %s18, 3
        %s185 = scalar_select %p184, %s18, 3
        %s186 = smul.addr %s183, 4
        %s187 = sadd.s32 %s185, %s186
        %s188 = smul.addr %s187, 8
        %s189 = scalar_lea.vmem %s0, %s188
      $region20: #{decoder_forward.22} parent=15 // pred_fallthru
        _
      // Predicated region
      $region21: #{decoder_forward.22} parent=15 // pred_check
        %p190 = pneg %p72
      $region22: #{decoder_forward.22} parent=15 // pred_check_branch
        %192 = sbr.rel (%p190) target = $region24
      $region23: #{decoder_forward.22} parent=15 // pred_region
        %p193 = scmp.lt.s32.totalorder %s17, 1
        %s194 = scalar_select %p193, %s17, 1
        %p195 = scmp.lt.s32.totalorder %s18, 3
        %s196 = scalar_select %p195, %s18, 3
        %s197 = smul.addr %s194, 4
        %s198 = sadd.s32 %s196, %s197
        %s199 = smul.addr %s198, 8
        %s200 = scalar_lea.vmem %s1, %s199
      $region24: #{decoder_forward.22} parent=15 // pred_fallthru
        _
      // Predicated region
      $region25: #{decoder_forward.22} parent=15 // pred_check
        %p201 = pneg %p100
      $region26: #{decoder_forward.22} parent=15 // pred_check_branch
        %203 = sbr.rel (%p201) target = $region28
      $region27: #{decoder_forward.22} parent=15 // pred_region
        %p204 = scmp.lt.s32.totalorder %s17, 1
        %s205 = scalar_select %p204, %s17, 1
        %p206 = scmp.lt.s32.totalorder %s18, 3
        %s207 = scalar_select %p206, %s18, 3
        %s208 = smul.addr %s205, 4
        %s209 = sadd.s32 %s207, %s208
        %s210 = smul.addr %s209, 8
        %s211 = scalar_lea.vmem %s2, %s210
      $region28: #{decoder_forward.22} parent=15 // pred_fallthru
        _
      // Predicated region
      $region29: #{decoder_forward.22} parent=15 // pred_check
        %p212 = pneg %p126
      $region30: #{decoder_forward.22} parent=15 // pred_check_branch
        %214 = sbr.rel (%p212) target = $region32
      $region31: #{decoder_forward.22} parent=15 // pred_region
        %p215 = scmp.lt.s32.totalorder %s17, 1
        %s216 = scalar_select %p215, %s17, 1
        %s217 = scalar_lea.vmem %s3, %s216
      $region32: #{decoder_forward.22} parent=15 // pred_fallthru
        _
    $region16: #{decoder_forward.22} parent=5 // pred_fallthru
      _
    %p218 = scmp.le.s32.totalorder 1, %s10
    %p219 = scmp.lt.s32.totalorder %s10, 9
    %p220 = pnand %p218, %p219
    %p221 = pneg %p220
    // Predicated region
    $region33: #{decoder_forward.22} parent=5 // pred_check
      _
    $region34: #{decoder_forward.22} parent=5 // pred_check_branch
      %223 = sbr.rel (%p220) target = $region36
    $region35: #{decoder_forward.22} parent=5 // pred_region
      %s224 = ssub.s32 %s10, 1
      %p225 = scmp.lt.s32.totalorder %s19, 1
      %s226 = scalar_select %p225, %s19, 1
      %p227 = scmp.lt.s32.totalorder %s20, 3
      %s228 = scalar_select %p227, %s20, 3
      %s229 = smul.addr %s226, 4
      %s230 = sadd.s32 %s228, %s229
      %s231 = smul.addr %s230, 8
      %s232 = scalar_lea.vmem %s0, %s231
      %p233 = pneg %p50
      %p234 = pneg %p47
      %p235 = scmp.lt.s32.totalorder %s19, 1
      %s236 = scalar_select %p235, %s19, 1
      %p237 = scmp.lt.s32.totalorder %s20, 3
      %s238 = scalar_select %p237, %s20, 3
      %s239 = smul.addr %s236, 4
      %s240 = sadd.s32 %s238, %s239
      %s241 = smul.addr %s240, 8
      %s242 = scalar_lea.vmem %s1, %s241
      %p243 = pneg %p78
      %p244 = pneg %p75
      %p245 = scmp.lt.s32.totalorder %s19, 1
      %s246 = scalar_select %p245, %s19, 1
      %p247 = scmp.lt.s32.totalorder %s20, 3
      %s248 = scalar_select %p247, %s20, 3
      %s249 = smul.addr %s246, 4
      %s250 = sadd.s32 %s248, %s249
      %s251 = smul.addr %s250, 8
      %s252 = scalar_lea.vmem %s2, %s251
      %p253 = pneg %p106
      %p254 = pneg %p103
      %p255 = scmp.lt.s32.totalorder %s19, 1
      %s256 = scalar_select %p255, %s19, 1
      %s257 = scalar_lea.vmem %s3, %s256
      %p258 = pneg %p132
      %p259 = pneg %p129
      %p260 = pneg %p160
      %p261 = pneg %p157
      %p262 = scmp.lt.s32.totalorder %s19, 1
      %s263 = scalar_select %p262, %s19, 1
      %p264 = scmp.lt.s32.totalorder %s20, 3
      %s265 = scalar_select %p264, %s20, 3
      %s266 = smul.addr %s263, 4
      %s267 = sadd.s32 %s265, %s266
      %s268 = smul.addr %s267, 8
      %s269 = scalar_lea.vmem %s4, %s268
      %p270 = scmp.lt.s32.totalorder %s19, 1
      %s271 = scalar_select %p270, %s19, 1
      %p272 = scmp.lt.s32.totalorder %s20, 3
      %s273 = scalar_select %p272, %s20, 3
      %s274 = smul.addr %s271, 4
      %s275 = sadd.s32 %s273, %s274
      %s276 = smul.addr %s275, 8
      %s277 = scalar_lea.vmem %s0, %s276
      %p278 = scmp.lt.s32.totalorder %s19, 1
      %s279 = scalar_select %p278, %s19, 1
      %p280 = scmp.lt.s32.totalorder %s20, 3
      %s281 = scalar_select %p280, %s20, 3
      %s282 = smul.addr %s279, 4
      %s283 = sadd.s32 %s281, %s282
      %s284 = smul.addr %s283, 8
      %s285 = scalar_lea.vmem %s1, %s284
      %p286 = scmp.lt.s32.totalorder %s19, 1
      %s287 = scalar_select %p286, %s19, 1
      %p288 = scmp.lt.s32.totalorder %s20, 3
      %s289 = scalar_select %p288, %s20, 3
      %s290 = smul.addr %s287, 4
      %s291 = sadd.s32 %s289, %s290
      %s292 = smul.addr %s291, 8
      %s293 = scalar_lea.vmem %s2, %s292
      %p294 = scmp.lt.s32.totalorder %s19, 1
      %s295 = scalar_select %p294, %s19, 1
      %s296 = scalar_lea.vmem %s3, %s295
      %p297 = scmp.lt.s32.totalorder %s19, 1
      %s298 = scalar_select %p297, %s19, 1
      %p299 = scmp.lt.s32.totalorder %s20, 3
      %s300 = scalar_select %p299, %s20, 3
      %s301 = smul.addr %s298, 4
      %s302 = sadd.s32 %s300, %s301
      %s303 = smul.addr %s302, 8
      %s304 = scalar_lea.vmem %s4, %s303
      %v306 = vld [vmem:[%s277] sm:$0xff]
      %v307 = vpack.c.bf16 %v306, %v306
      %v308 = vld [vmem:[%s285] sm:$0xff]
      %v309 = vpack.c.bf16 %v308, %v308
      %v310 = vld [vmem:[%s293] sm:$0xff]
      %v311 = vpack.c.bf16 %v310, %v310
      %v312 = vld [vmem:[%s296] sm:$0x1]
      %v313 = vunpack.c.0.s8 %v312
      %v314 = vcvt.s32.f32 %v313
      %v315 = vlaneseq
      %v316 = vshrl.u32 %v315, 7
      %v317 = vsub.s32 0, %v316
      %v318 = vrot.slane %v314, %v317
      %vm319 = vcmp.gt.f32.partialorder %v318, 0.5
      %vm320 = vcmask 64512
      %v322 = vsel %vm320, %v307, 0
      %v325 = vsel %vm320, %v309, 0
      %327 = vmatprep.subr.bf16.mxu0 0
      %328 = vmatpush1.bf16.xpose.msra.mxu0 %v325
      %329 = vmatprep.subr.bf16.mxu0 0
      %330 = vmatpush1.bf16.xpose.msra.mxu0 0
      %331 = vmatprep.subr.bf16.mxu0 0
      %332 = vmatpush1.bf16.xpose.msra.mxu0 0
      %333 = vmatprep.subr.bf16.mxu0 0
      %334 = vmatpush1.bf16.xpose.msra.mxu0 0
      %335 = vmatprep.subr.bf16.mxu0 0
      %336 = vmatpush1.bf16.xpose.msra.mxu0 0
      %337 = vmatprep.subr.bf16.mxu0 0
      %338 = vmatpush1.bf16.xpose.msra.mxu0 0
      %339 = vmatprep.subr.bf16.mxu0 0
      %340 = vmatpush1.bf16.xpose.msra.mxu0 0
      %341 = vmatprep.subr.bf16.mxu0 0
      %342 = vmatpush1.bf16.xpose.msra.mxu0 0
      %343 = vmatprep.subr.bf16.mxu0 0
      %344 = vmatpush1.bf16.xpose.msra.mxu0 0
      %345 = vmatprep.subr.bf16.mxu0 0
      %346 = vmatpush1.bf16.xpose.msra.mxu0 0
      %347 = vmatprep.subr.bf16.mxu0 0
      %348 = vmatpush1.bf16.xpose.msra.mxu0 0
      %349 = vmatprep.subr.bf16.mxu0 0
      %350 = vmatpush1.bf16.xpose.msra.mxu0 0
      %351 = vmatprep.subr.bf16.mxu0 0
      %352 = vmatpush1.bf16.xpose.msra.mxu0 0
      %353 = vmatprep.subr.bf16.mxu0 0
      %354 = vmatpush1.bf16.xpose.msra.mxu0 0
      %355 = vmatprep.subr.bf16.mxu0 0
      %356 = vmatpush1.bf16.xpose.msra.mxu0 0
      %357 = vmatprep.subr.bf16.mxu0 0
      %358 = vmatpush1.bf16.xpose.msra.mxu0 0
      %359 = vmatprep.mubr.bf16.mxu0 0
      %360 = vmatmul.mubr.bf16.gmra.mrb[0].mxu0 %v322
      %v361 = vpop.f32.mrb[0].mxu0
      %v362 = vadd.f32 0.0, %v361
      %v363 = vpop.f32.mrb[0].mxu0
      %v364 = vpop.f32.mrb[0].mxu0
      %v365 = vpop.f32.mrb[0].mxu0
      %366 = vdwg.mxu0
      %v367 = vmul.f32 %v362, 0.35355338
      %v368 = vsel %vm319, %v367, -1e+09
      %v369 = vsel %vm320, %v368, -inf
      %370 = vmax.xlane.f32.xlu0 %v369
      %v371 = vpop.xlane.xlu0 %370
      %v372 = vsub.f32 %v368, %v371
      %v373 = vmul.f32 %v372, 1.442695
      %v374 = vpow.pop %v373
      %v375 = vsel %vm320, %v374, 0.0
      %376 = vadd.xlane.f32.xlu0 %v375
      %v377 = vpop.xlane.xlu0 %376
      %v378 = vrcp.pop %v377
      %v379 = vmul.f32 %v374, %v378
      %v380 = vpack.c.bf16 %v379, %v379
      %v382 = vsel %vm320, %v380, 0
      %vm384 = vcmask 1043456
      %v386 = vsel %vm384, %v311, 0
      %388 = vmatprep.subr.bf16.mxu0 0
      %389 = vmatpush1.bf16.msra.mxu0 %v386
      %390 = vmatprep.subr.bf16.mxu0 0
      %391 = vmatpush1.bf16.msra.mxu0 0
      %392 = vmatprep.subr.bf16.mxu0 0
      %393 = vmatpush1.bf16.msra.mxu0 0
      %394 = vmatprep.subr.bf16.mxu0 0
      %395 = vmatpush1.bf16.msra.mxu0 0
      %396 = vmatprep.subr.bf16.mxu0 0
      %397 = vmatpush1.bf16.msra.mxu0 0
      %398 = vmatprep.subr.bf16.mxu0 0
      %399 = vmatpush1.bf16.msra.mxu0 0
      %400 = vmatprep.subr.bf16.mxu0 0
      %401 = vmatpush1.bf16.msra.mxu0 0
      %402 = vmatprep.subr.bf16.mxu0 0
      %403 = vmatpush1.bf16.msra.mxu0 0
      %404 = vmatprep.subr.bf16.mxu0 0
      %405 = vmatpush1.bf16.msra.mxu0 0
      %406 = vmatprep.subr.bf16.mxu0 0
      %407 = vmatpush1.bf16.msra.mxu0 0
      %408 = vmatprep.subr.bf16.mxu0 0
      %409 = vmatpush1.bf16.msra.mxu0 0
      %410 = vmatprep.subr.bf16.mxu0 0
      %411 = vmatpush1.bf16.msra.mxu0 0
      %412 = vmatprep.subr.bf16.mxu0 0
      %413 = vmatpush1.bf16.msra.mxu0 0
      %414 = vmatprep.subr.bf16.mxu0 0
      %415 = vmatpush1.bf16.msra.mxu0 0
      %416 = vmatprep.subr.bf16.mxu0 0
      %417 = vmatpush1.bf16.msra.mxu0 0
      %418 = vmatprep.subr.bf16.mxu0 0
      %419 = vmatpush1.bf16.msra.mxu0 0
      %420 = vmatprep.mubr.bf16.mxu0 0
      %421 = vmatmul.mubr.bf16.gmra.mrb[0].mxu0 %v382
      %v422 = vpop.f32.mrb[0].mxu0
      %v423 = vadd.f32 0.0, %v422
      %v424 = vpop.f32.mrb[0].mxu0
      %v425 = vpop.f32.mrb[0].mxu0
      %v426 = vpop.f32.mrb[0].mxu0
      %427 = vdwg.mxu0
      %428 = vst.msk [vmem:[%s304] sm:$0xff] %vm320, %v423
      %p429 = scmp.lt.s32.totalorder %s19, 1
      %s430 = scalar_select %p429, %s19, 1
      %p431 = scmp.lt.s32.totalorder %s20, 3
      %s432 = scalar_select %p431, %s20, 3
      %s433 = smul.addr %s430, 4
      %s434 = sadd.s32 %s432, %s433
      %s435 = smul.addr %s434, 8
      %s436 = scalar_lea.vmem %s4, %s435
      // Predicated region
      $region37: #{decoder_forward.22} parent=35 // pred_check
        %p437 = pneg %p157
      $region38: #{decoder_forward.22} parent=35 // pred_check_branch
        %439 = sbr.rel (%p437) target = $region40
      $region39: #{decoder_forward.22} parent=35 // pred_region
        _
      $region40: #{decoder_forward.22} parent=35 // pred_fallthru
        _
    $region36: #{decoder_forward.22} parent=5 // pred_fallthru
      _
    %p440 = scmp.le.s32.totalorder 2, %s10
    // Predicated region
    $region41: #{decoder_forward.22} parent=5 // pred_check
      %p441 = pneg %p440
    $region42: #{decoder_forward.22} parent=5 // pred_check_branch
      %443 = sbr.rel (%p441) target = $region44
    $region43: #{decoder_forward.22} parent=5 // pred_region
      %s444 = ssub.s32 %s10, 2
      // Predicated region
      $region45: #{decoder_forward.22} parent=43 // pred_check
        %p445 = pneg %p163
      $region46: #{decoder_forward.22} parent=43 // pred_check_branch
        %447 = sbr.rel (%p445) target = $region48
      $region47: #{decoder_forward.22} parent=43 // pred_region
        %p448 = scmp.lt.s32.totalorder %s21, 1
        %s449 = scalar_select %p448, %s21, 1
        %p450 = scmp.lt.s32.totalorder %s22, 3
        %s451 = scalar_select %p450, %s22, 3
        %s452 = smul.addr %s449, 4
        %s453 = sadd.s32 %s451, %s452
        %s454 = smul.addr %s453, 8
        %s455 = scalar_lea.vmem %s4, %s454
      $region48: #{decoder_forward.22} parent=43 // pred_fallthru
        _
    $region44: #{decoder_forward.22} parent=5 // pred_fallthru
      _
  $region6: #{decoder_forward.22} parent=0 // loop_footer
    %s14 = sadd.s32 1, %s10
  $region7: #{decoder_forward.22} parent=0 // loop_footer_branch
    %9 = sbr.rel target = $region3
  $region8: #{decoder_forward.22} parent=0 // loop_exit
    _

// kernel: decoder_forward.33
$region0: #{decoder_forward.33}
  #allocation0 [shape = 'u32[]', space=smem, size = 0x4, offset = 0x4, fixed_abs, tag = 'smem constant byte address 0x4 - core index']
  #allocation1 [shape = 'u32[144,128]{1,0:T(1,128)}', space=vmem, size = 0x12000, scoped, tag = 'internal scratch']
  #allocation2 [shape = 'f32[1,1]{1,0:T(1,128)S(6)}', space=smem, size = 0x200, scoped, tag = 'scoped memory for decoder_forward.33']
  #allocation3 [shape = 'f32[1,1]{1,0:T(1,128)S(6)}', space=smem, size = 0x200, scoped, tag = 'scoped memory for decoder_forward.33']
  %s0 = inlined_call_operand.<no memory space> [shape: f32[1,1], index: 0, kind: input, shape index: {}]
  %s1 = inlined_call_operand.<no memory space> [shape: f32[1,1], index: 1, kind: input, shape index: {}]
  %s2 = inlined_call_operand.vmem [shape: f32[16,32], index: 2, kind: input, shape index: {}]
  %s3 = inlined_call_operand.hbm [shape: f32[16,32], index: 3, kind: output, shape index: {}]
  %s4 = sld [smem:[#allocation0]]
  $region22: #{decoder_forward.33} parent=0
    _
  %s6 = ssub.s32 1, %s4
  %s7 = scalar_select 0, %s6, %s4
  %8 = sst [smem:[#allocation2]] %s0
  %9 = sst [smem:[#allocation3]] %s1
  $region1: #{decoder_forward.33} parent=0
    #allocation4 [shape = 'u8[8192]{0}', space=vmem, size = 0x2000, scoped, tag = 'output window, operand 0, single buffered']
    #allocation5 [shape = 's32[1]{0}', space=sflag, size = 0x4, scoped, tag = 'scoped memory for decoder_forward.33']
    %10 = vsyncpa [#allocation5], 0
    // Predicated region
    $region2: #{decoder_forward.33} parent=1 // pred_check
      _
    $region3: #{decoder_forward.33} parent=1 // pred_check_branch
      %12 = sbr.rel (0) target = $region5
    $region4: #{decoder_forward.33} parent=1 // pred_region
      _
    $region5: #{decoder_forward.33} parent=1 // pred_fallthru
      _
    // Predicated region
    $region6: #{decoder_forward.33} parent=1 // pred_check
      _
    $region7: #{decoder_forward.33} parent=1 // pred_check_branch
      %14 = sbr.rel (0) target = $region9
    $region8: #{decoder_forward.33} parent=1 // pred_region
      _
    $region9: #{decoder_forward.33} parent=1 // pred_fallthru
      _
    // Predicated region
    $region10: #{decoder_forward.33} parent=1 // pred_check
      _
    $region11: #{decoder_forward.33} parent=1 // pred_check_branch
      %16 = sbr.rel (0) target = $region13
    $region12: #{decoder_forward.33} parent=1 // pred_region
      _
    $region13: #{decoder_forward.33} parent=1 // pred_fallthru
      _
    %v17 = vld [vmem:[%s2] sm:$0xff]
    %v18 = vld [vmem:[%s2 + $0x8] sm:$0xff]
    %vm19 = vcmask 261120
    %v20 = vsel %vm19, %v17, 0.0
    %21 = vadd.xlane.f32.xlu0 %v20
    %v22 = vpop.xlane.xlu0 %21
    %v23 = vsel %vm19, %v18, 0.0
    %24 = vadd.xlane.f32.xlu0 %v23
    %v25 = vpop.xlane.xlu0 %24
    %v26 = vrcp.pop 32.0
    %v27 = vmul.f32 %v22, %v26
    %v28 = vmul.f32 %v25, %v26
    %v29 = vsub.f32 %v17, %v27
    %v30 = vsub.f32 %v18, %v28
    %v31 = vmul.f32 %v29, %v29
    %v32 = vmul.f32 %v30, %v30
    %v33 = vsel %vm19, %v31, 0.0
    %34 = vadd.xlane.f32.xlu0 %v33
    %v35 = vpop.xlane.xlu0 %34
    %v36 = vsel %vm19, %v32, 0.0
    %37 = vadd.xlane.f32.xlu0 %v36
    %v38 = vpop.xlane.xlu0 %37
    %v39 = vrcp.pop 31.0
    %v40 = vmul.f32 %v35, %v39
    %v41 = vmul.f32 %v38, %v39
    %v42 = vrsqrt.pop %v40
    %v43 = vmul.f32 %v40, %v42
    %vm44 = vcmp.eq.f32.partialorder %v40, inf
    %v45 = vsel %vm44, %v40, %v43
    %vm46 = vcmp.eq.f32.partialorder %v40, 0.0
    %v47 = vand.u32 %v40, 2147483648
    %v48 = vsel %vm46, %v47, %v45
    %v49 = vrsqrt.pop %v41
    %v50 = vmul.f32 %v41, %v49
    %vm51 = vcmp.eq.f32.partialorder %v41, inf
    %v52 = vsel %vm51, %v41, %v50
    %vm53 = vcmp.eq.f32.partialorder %v41, 0.0
    %v54 = vand.u32 %v41, 2147483648
    %v55 = vsel %vm53, %v54, %v52
    %v56 = vadd.f32 %v48, 1e-06
    %v57 = vadd.f32 %v55, 1e-06
    %v58 = vrcp.pop %v56
    %v59 = vrcp.pop %v57
    %s60 = sld [smem:[#allocation2]]
    %v61 = vstv %s60
    %v62 = vmul.f32 %v61, %v29
    %v63 = vmul.f32 %v61, %v30
    %v64 = vmul.f32 %v62, %v58
    %v65 = vmul.f32 %v63, %v59
    %s66 = sld [smem:[#allocation3]]
    %v67 = vstv %s66
    %v68 = vadd.f32 %v64, %v67
    %v69 = vadd.f32 %v65, %v67
    %70 = vst.msk [vmem:[#allocation4] sm:$0xff] %vm19, %v68
    %71 = vst.msk [vmem:[#allocation4 + $0x8] sm:$0xff] %vm19, %v69
    // Predicated region
    $region14: #{decoder_forward.33} parent=1 // pred_check
      _
    $region15: #{decoder_forward.33} parent=1 // pred_check_branch
      %73 = sbr.rel (0) target = $region17
    $region16: #{decoder_forward.33} parent=1 // pred_region
      %s75 = ssub.s32 256, 256
      %76 = vsyncadd [#allocation5], %s75
      %s77 = sshll.u32 [#allocation4], 4
      %s78 = int_to_ptr.vmem [resolvable:$true] %s77
      %83 = dma.vmem_to_hbm [thread:$0]  %s78, 256, %s3, [#allocation5], 128, 128, 8
    $region17: #{decoder_forward.33} parent=1 // pred_fallthru
      _
    // Predicated region
    $region18: #{decoder_forward.33} parent=1 // pred_check
      _
    $region19: #{decoder_forward.33} parent=1 // pred_check_branch
      %85 = sbr.rel (0) target = $region21
    $region20: #{decoder_forward.33} parent=1 // pred_region
      %86 = dma.done [#allocation5], 256
    $region21: #{decoder_forward.33} parent=1 // pred_fallthru
      _
    %87 = vsyncpa [#allocation5], 1

// kernel: decoder_forward.24
$region0: #{decoder_forward.24}
  #allocation0 [shape = 'u32[]', space=smem, size = 0x4, offset = 0x4, fixed_abs, tag = 'smem constant byte address 0x4 - core index']
  #allocation1 [shape = 'u32[144,128]{1,0:T(1,128)}', space=vmem, size = 0x12000, scoped, tag = 'internal scratch']
  #allocation2 [shape = 'bf16[16,32]{1,0:T(16,128)(2,1)}', space=vmem, size = 0x1000, scoped, tag = 'scratch operand']
  #allocation3 [shape = 'f32[16,32]{1,0:T(8,128)}', space=vmem, size = 0x2000, scoped, tag = 'scratch operand']
  #allocation4 [shape = 'f32[1,1]{1,0:T(1,128)S(6)}', space=smem, size = 0x200, scoped, tag = 'scoped memory for decoder_forward.24']
  #allocation5 [shape = 'f32[1,1]{1,0:T(1,128)S(6)}', space=smem, size = 0x200, scoped, tag = 'scoped memory for decoder_forward.24']
  %s0 = inlined_call_operand.<no memory space> [shape: f32[1,1], index: 0, kind: input, shape index: {}]
  %s1 = inlined_call_operand.<no memory space> [shape: f32[1,1], index: 1, kind: input, shape index: {}]
  %s2 = inlined_call_operand.vmem [shape: f32[16,32], index: 2, kind: input, shape index: {}]
  %s3 = inlined_call_operand.vmem [shape: bf16[32,64], index: 3, kind: input, shape index: {}]
  %s4 = inlined_call_operand.vmem [shape: f32[1,64], index: 4, kind: input, shape index: {}]
  %s5 = inlined_call_operand.vmem [shape: bf16[64,32], index: 5, kind: input, shape index: {}]
  %s6 = inlined_call_operand.vmem [shape: f32[1,32], index: 6, kind: input, shape index: {}]
  %s7 = inlined_call_operand.vmem [shape: f32[16,32], index: 7, kind: output, shape index: {}]
  %s8 = sld [smem:[#allocation0]]
  $region46: #{decoder_forward.24} parent=0
    _
  %s10 = ssub.s32 1, %s8
  %s11 = scalar_select 0, %s10, %s8
  %12 = sst [smem:[#allocation4]] %s0
  %13 = sst [smem:[#allocation5]] %s1
  // Predicated region
  $region2: #{decoder_forward.24} parent=0 // pred_check
    _
  $region3: #{decoder_forward.24} parent=0 // pred_check_branch
    %15 = sbr.rel (0) target = $region5
  $region4: #{decoder_forward.24} parent=0 // pred_region
    _
  $region5: #{decoder_forward.24} parent=0 // pred_fallthru
    _
  // Predicated region
  $region6: #{decoder_forward.24} parent=0 // pred_check
    _
  $region7: #{decoder_forward.24} parent=0 // pred_check_branch
    %17 = sbr.rel (0) target = $region9
  $region8: #{decoder_forward.24} parent=0 // pred_region
    _
  $region9: #{decoder_forward.24} parent=0 // pred_fallthru
    _
  // Predicated region
  $region10: #{decoder_forward.24} parent=0 // pred_check
    _
  $region11: #{decoder_forward.24} parent=0 // pred_check_branch
    %19 = sbr.rel (0) target = $region13
  $region12: #{decoder_forward.24} parent=0 // pred_region
    _
  $region13: #{decoder_forward.24} parent=0 // pred_fallthru
    _
  // Predicated region
  $region14: #{decoder_forward.24} parent=0 // pred_check
    _
  $region15: #{decoder_forward.24} parent=0 // pred_check_branch
    %21 = sbr.rel (0) target = $region17
  $region16: #{decoder_forward.24} parent=0 // pred_region
    _
  $region17: #{decoder_forward.24} parent=0 // pred_fallthru
    _
  // Predicated region
  $region18: #{decoder_forward.24} parent=0 // pred_check
    _
  $region19: #{decoder_forward.24} parent=0 // pred_check_branch
    %23 = sbr.rel (0) target = $region21
  $region20: #{decoder_forward.24} parent=0 // pred_region
    _
  $region21: #{decoder_forward.24} parent=0 // pred_fallthru
    _
  // Predicated region
  $region22: #{decoder_forward.24} parent=0 // pred_check
    _
  $region23: #{decoder_forward.24} parent=0 // pred_check_branch
    %25 = sbr.rel (0) target = $region25
  $region24: #{decoder_forward.24} parent=0 // pred_region
    _
  $region25: #{decoder_forward.24} parent=0 // pred_fallthru
    _
  // Predicated region
  $region26: #{decoder_forward.24} parent=0 // pred_check
    _
  $region27: #{decoder_forward.24} parent=0 // pred_check_branch
    %27 = sbr.rel (0) target = $region29
  $region28: #{decoder_forward.24} parent=0 // pred_region
    _
  $region29: #{decoder_forward.24} parent=0 // pred_fallthru
    _
  %p29 = scmp.eq.s32.totalorder 0, 0
  // Predicated region
  $region30: #{decoder_forward.24} parent=0 // pred_check
    %p30 = pneg %p29
  $region31: #{decoder_forward.24} parent=0 // pred_check_branch
    %32 = sbr.rel (%p30) target = $region33
  $region32: #{decoder_forward.24} parent=0 // pred_region
    %v33 = vld [vmem:[%s2] sm:$0xff]
    %v34 = vld [vmem:[%s2 + $0x8] sm:$0xff]
    %vm35 = vcmask 261120
    %v36 = vsel %vm35, %v33, 0.0
    %37 = vadd.xlane.f32.xlu0 %v36
    %v38 = vpop.xlane.xlu0 %37
    %v39 = vsel %vm35, %v34, 0.0
    %40 = vadd.xlane.f32.xlu0 %v39
    %v41 = vpop.xlane.xlu0 %40
    %v42 = vrcp.pop 32.0
    %v43 = vmul.f32 %v38, %v42
    %v44 = vmul.f32 %v41, %v42
    %v45 = vsub.f32 %v33, %v43
    %v46 = vsub.f32 %v34, %v44
    %v47 = vmul.f32 %v45, %v45
    %v48 = vmul.f32 %v46, %v46
    %v49 = vsel %vm35, %v47, 0.0
    %50 = vadd.xlane.f32.xlu0 %v49
    %v51 = vpop.xlane.xlu0 %50
    %v52 = vsel %vm35, %v48, 0.0
    %53 = vadd.xlane.f32.xlu0 %v52
    %v54 = vpop.xlane.xlu0 %53
    %v55 = vrcp.pop 31.0
    %v56 = vmul.f32 %v51, %v55
    %v57 = vmul.f32 %v54, %v55
    %v58 = vrsqrt.pop %v56
    %v59 = vmul.f32 %v56, %v58
    %vm60 = vcmp.eq.f32.partialorder %v56, inf
    %v61 = vsel %vm60, %v56, %v59
    %vm62 = vcmp.eq.f32.partialorder %v56, 0.0
    %v63 = vand.u32 %v56, 2147483648
    %v64 = vsel %vm62, %v63, %v61
    %v65 = vrsqrt.pop %v57
    %v66 = vmul.f32 %v57, %v65
    %vm67 = vcmp.eq.f32.partialorder %v57, inf
    %v68 = vsel %vm67, %v57, %v66
    %vm69 = vcmp.eq.f32.partialorder %v57, 0.0
    %v70 = vand.u32 %v57, 2147483648
    %v71 = vsel %vm69, %v70, %v68
    %v72 = vadd.f32 %v64, 1e-06
    %v73 = vadd.f32 %v71, 1e-06
    %v74 = vrcp.pop %v72
    %v75 = vrcp.pop %v73
    %s76 = sld [smem:[#allocation4]]
    %v77 = vstv %s76
    %v78 = vmul.f32 %v77, %v45
    %v79 = vmul.f32 %v77, %v46
    %v80 = vmul.f32 %v78, %v74
    %v81 = vmul.f32 %v79, %v75
    %s82 = sld [smem:[#allocation5]]
    %v83 = vstv %s82
    %v84 = vadd.f32 %v80, %v83
    %v85 = vadd.f32 %v81, %v83
    %v86 = vpack.c.bf16 %v85, %v84
    %87 = vst.msk [vmem:[#allocation2] sm:$0xff] %vm35, %v86
    %88 = vst.msk [vmem:[#allocation3] sm:$0xff] %vm35, 0.0
    %89 = vst.msk [vmem:[#allocation3 + $0x8] sm:$0xff] %vm35, 0.0
  $region33: #{decoder_forward.24} parent=0 // pred_fallthru
    _
  %v90 = vld [vmem:[#allocation2] sm:$0xff]
  %v91 = vld [vmem:[%s3] sm:$0xf]
  %v92 = vld [vmem:[%s3 + $0x4] sm:$0xf]
  %v93 = vld [vmem:[%s3 + $0x8] sm:$0xf]
  %v94 = vld [vmem:[%s3 + $0xc] sm:$0xf]
  %v95 = vld [vmem:[%s4] sm:$0x1]
  %v97 = vlaneseq
  %v98 = vshrl.u32 %v97, 7
  %v99 = vsub.s32 0, %v98
  %v100 = vrot.slane %v95, %v99
  %v106 = vunpack.c.l.b16 %v91
  %v107 = vunpack.c.l.b16 %v92
  %v108 = vunpack.c.l.b16 %v93
  %v109 = vunpack.c.l.b16 %v94
  %v110 = vpack.c.b16 %v107, %v106
  %v111 = vpack.c.b16 %v109, %v108
  %vm114 = vcmask 261120
  %v116 = vsel %vm114, %v90, 0
  %118 = vmatprep.subr.bf16.mxu0 0
  %119 = vmatpush1.bf16.msra.mxu0 %v110
  %120 = vmatprep.subr.bf16.mxu0 0
  %121 = vmatpush1.bf16.msra.mxu0 %v111
  %122 = vmatprep.subr.bf16.mxu0 0
  %123 = vmatpush1.bf16.msra.mxu0 0
  %124 = vmatprep.subr.bf16.mxu0 0
  %125 = vmatpush1.bf16.msra.mxu0 0
  %126 = vmatprep.subr.bf16.mxu0 0
  %127 = vmatpush1.bf16.msra.mxu0 0
  %128 = vmatprep.subr.bf16.mxu0 0
  %129 = vmatpush1.bf16.msra.mxu0 0
  %130 = vmatprep.subr.bf16.mxu0 0
  %131 = vmatpush1.bf16.msra.mxu0 0
  %132 = vmatprep.subr.bf16.mxu0 0
  %133 = vmatpush1.bf16.msra.mxu0 0
  %134 = vmatprep.subr.bf16.mxu0 0
  %135 = vmatpush1.bf16.msra.mxu0 0
  %136 = vmatprep.subr.bf16.mxu0 0
  %137 = vmatpush1.bf16.msra.mxu0 0
  %138 = vmatprep.subr.bf16.mxu0 0
  %139 = vmatpush1.bf16.msra.mxu0 0
  %140 = vmatprep.subr.bf16.mxu0 0
  %141 = vmatpush1.bf16.msra.mxu0 0
  %142 = vmatprep.subr.bf16.mxu0 0
  %143 = vmatpush1.bf16.msra.mxu0 0
  %144 = vmatprep.subr.bf16.mxu0 0
  %145 = vmatpush1.bf16.msra.mxu0 0
  %146 = vmatprep.subr.bf16.mxu0 0
  %147 = vmatpush1.bf16.msra.mxu0 0
  %148 = vmatprep.subr.bf16.mxu0 0
  %149 = vmatpush1.bf16.msra.mxu0 0
  %150 = vmatprep.mubr.bf16.mxu0 0
  %151 = vmatmul.mubr.bf16.gmra.mrb[0].mxu0 %v116
  %v152 = vpop.f32.mrb[0].mxu0
  %v153 = vadd.f32 %v100, %v152
  %v154 = vpop.f32.mrb[0].mxu0
  %v155 = vpop.f32.mrb[0].mxu0
  %v156 = vadd.f32 %v100, %v155
  %v157 = vpop.f32.mrb[0].mxu0
  %158 = vdwg.mxu0
  %v159 = vmax.f32 %v153, 0.0
  %v160 = vmax.f32 %v156, 0.0
  %v161 = vld [vmem:[#allocation3] sm:$0xff]
  %v162 = vld [vmem:[#allocation3 + $0x8] sm:$0xff]
  %v163 = vpack.c.bf16 %v160, %v159
  %v164 = vld [vmem:[%s5] sm:$0xf]
  %v165 = vld [vmem:[%s5 + $0x4] sm:$0xf]
  %v166 = vld [vmem:[%s5 + $0x8] sm:$0xf]
  %v167 = vld [vmem:[%s5 + $0xc] sm:$0xf]
  %v168 = vld [vmem:[%s5 + $0x10] sm:$0xf]
  %v169 = vld [vmem:[%s5 + $0x14] sm:$0xf]
  %v170 = vld [vmem:[%s5 + $0x18] sm:$0xf]
  %v171 = vld [vmem:[%s5 + $0x1c] sm:$0xf]
  %v180 = vunpack.c.l.b16 %v164
  %v181 = vunpack.c.l.b16 %v165
  %v182 = vunpack.c.l.b16 %v166
  %v183 = vunpack.c.l.b16 %v167
  %v184 = vunpack.c.l.b16 %v168
  %v185 = vunpack.c.l.b16 %v169
  %v186 = vunpack.c.l.b16 %v170
  %v187 = vunpack.c.l.b16 %v171
  %v188 = vpack.c.b16 %v181, %v180
  %v189 = vpack.c.b16 %v183, %v182
  %v190 = vpack.c.b16 %v185, %v184
  %v191 = vpack.c.b16 %v187, %v186
  %vm196 = vcmask 523264
  %v198 = vsel %vm196, %v163, 0
  %200 = vmatprep.subr.bf16.mxu0 0
  %201 = vmatpush1.bf16.msra.mxu0 %v188
  %202 = vmatprep.subr.bf16.mxu0 0
  %203 = vmatpush1.bf16.msra.mxu0 %v189
  %204 = vmatprep.subr.bf16.mxu0 0
  %205 = vmatpush1.bf16.msra.mxu0 %v190
  %206 = vmatprep.subr.bf16.mxu0 0
  %207 = vmatpush1.bf16.msra.mxu0 %v191
  %208 = vmatprep.subr.bf16.mxu0 0
  %209 = vmatpush1.bf16.msra.mxu0 0
  %210 = vmatprep.subr.bf16.mxu0 0
  %211 = vmatpush1.bf16.msra.mxu0 0
  %212 = vmatprep.subr.bf16.mxu0 0
  %213 = vmatpush1.bf16.msra.mxu0 0
  %214 = vmatprep.subr.bf16.mxu0 0
  %215 = vmatpush1.bf16.msra.mxu0 0
  %216 = vmatprep.subr.bf16.mxu0 0
  %217 = vmatpush1.bf16.msra.mxu0 0
  %218 = vmatprep.subr.bf16.mxu0 0
  %219 = vmatpush1.bf16.msra.mxu0 0
  %220 = vmatprep.subr.bf16.mxu0 0
  %221 = vmatpush1.bf16.msra.mxu0 0
  %222 = vmatprep.subr.bf16.mxu0 0
  %223 = vmatpush1.bf16.msra.mxu0 0
  %224 = vmatprep.subr.bf16.mxu0 0
  %225 = vmatpush1.bf16.msra.mxu0 0
  %226 = vmatprep.subr.bf16.mxu0 0
  %227 = vmatpush1.bf16.msra.mxu0 0
  %228 = vmatprep.subr.bf16.mxu0 0
  %229 = vmatpush1.bf16.msra.mxu0 0
  %230 = vmatprep.subr.bf16.mxu0 0
  %231 = vmatpush1.bf16.msra.mxu0 0
  %232 = vmatprep.mubr.bf16.mxu0 0
  %233 = vmatmul.mubr.bf16.gmra.mrb[0].mxu0 %v198
  %v234 = vpop.f32.mrb[0].mxu0
  %v235 = vadd.f32 0.0, %v234
  %v236 = vpop.f32.mrb[0].mxu0
  %v237 = vpop.f32.mrb[0].mxu0
  %v238 = vadd.f32 0.0, %v237
  %v239 = vpop.f32.mrb[0].mxu0
  %240 = vdwg.mxu0
  %v241 = vadd.f32 %v161, %v235
  %v242 = vadd.f32 %v162, %v238
  %243 = vst.msk [vmem:[#allocation3] sm:$0xff] %vm114, %v241
  %244 = vst.msk [vmem:[#allocation3 + $0x8] sm:$0xff] %vm114, %v242
  // Predicated region
  $region34: #{decoder_forward.24} parent=0 // pred_check
    %p245 = pneg %p29
  $region35: #{decoder_forward.24} parent=0 // pred_check_branch
    %247 = sbr.rel (%p245) target = $region37
  $region36: #{decoder_forward.24} parent=0 // pred_region
    %v248 = vld [vmem:[#allocation3] sm:$0xff]
    %v249 = vld [vmem:[#allocation3 + $0x8] sm:$0xff]
    %v250 = vld [vmem:[%s6] sm:$0x1]
    %v252 = vlaneseq
    %v253 = vshrl.u32 %v252, 7
    %v254 = vsub.s32 0, %v253
    %v255 = vrot.slane %v250, %v254
    %v257 = vadd.f32 %v248, %v255
    %v258 = vadd.f32 %v249, %v255
    %v259 = vld [vmem:[%s2] sm:$0xff]
    %v260 = vld [vmem:[%s2 + $0x8] sm:$0xff]
    %v261 = vadd.f32 %v257, %v259
    %v262 = vadd.f32 %v258, %v260
    %263 = vst.msk [vmem:[%s7] sm:$0xff] %vm114, %v261
    %264 = vst.msk [vmem:[%s7 + $0x8] sm:$0xff] %vm114, %v262
  $region37: #{decoder_forward.24} parent=0 // pred_fallthru
    _
  // Predicated region
  $region38: #{decoder_forward.24} parent=0 // pred_check
    _
  $region39: #{decoder_forward.24} parent=0 // pred_check_branch
    %266 = sbr.rel (0) target = $region41
  $region40: #{decoder_forward.24} parent=0 // pred_region
    _
  $region41: #{decoder_forward.24} parent=0 // pred_fallthru
    _
  // Predicated region
  $region42: #{decoder_forward.24} parent=0 // pred_check
    _
  $region43: #{decoder_forward.24} parent=0 // pred_check_branch
    %268 = sbr.rel (0) target = $region45
  $region44: #{decoder_forward.24} parent=0 // pred_region
    _
  $region45: #{decoder_forward.24} parent=0 // pred_fallthru
    _

</llo_original>
